<compile_context>
chip_gen: v7x
topology: tpu7x:2x2x1
jax: 0.10.0
libtpu: 0.0.40
codegen_flags: <defaults>
</compile_context>

<pallas_src>
import functools
from typing import NamedTuple, Optional

import jax
import jax.numpy as jnp
from jax.experimental import pallas as pl
from jax.experimental.pallas import tpu as pltpu


class DiscriminatorOutput(NamedTuple):
    output: jax.Array
    cond_logits: Optional[jax.Array] = None


def _round_up(x: int, m: int) -> int:
    return ((x + m - 1) // m) * m


# ----------------------------------------------------------------------------
# Fused kernel: one batch element per grid step.
#   p1_ref   : (1, H1, W1c, K1)      stride-2 im2col patches of the input
#   w1_ref   : (K1, C1)              flattened net weights (K1 = KH*KW*C_in)
#   b1_ref   : (1, C1)
#   w2_ref   : (KH, KW, C1, C_headp) fused clf+cond weights, channel-padded
#   b2_ref   : (1, C_headp)
#   head_ref : (1, H2, W2c, C_headp) fused head map (lane-dense last dim)
#   cmean_ref: (1, 1, C_headp)       spatial mean of the head over valid pixels
#   f_ref    : VMEM scratch (Hf, Wf, C1) — zero-padded feature map
# ----------------------------------------------------------------------------
def _disc_fused_kernel(p1_ref, w1_ref, b1_ref, w2_ref, b2_ref,
                       head_ref, cmean_ref, f_ref, *,
                       KH, KW, H1, W1, W1c, H2, W2, W2c, C1, C_headp,
                       leaky_slope, compute_dtype):
    # ---- conv1 (net): one im2col matmul, K = KH*KW*C_in -----------------
    K1 = w1_ref.shape[0]
    p2 = p1_ref[0].reshape(H1 * W1c, K1)                       # free reshape (W1c % 8 == 0)
    feat = jnp.dot(p2.astype(compute_dtype),
                   w1_ref[...].astype(compute_dtype),
                   preferred_element_type=jnp.float32)         # (H1*W1c, C1)
    feat = feat + b1_ref[...]
    feat = jnp.where(feat >= 0.0, feat, leaky_slope * feat)    # LeakyReLU(0.2), f32
    feat = feat.reshape(H1, W1c, C1)

    # Feature map stays in VMEM (never written to HBM). Zero scratch provides
    # the pad-1 ring (and right-side slack) for the second conv.
    f_ref[...] = jnp.zeros_like(f_ref)
    f_ref[pl.ds(1, H1), pl.ds(1, W1), :] = feat[:, :W1, :]

    # ---- conv2 (clf + cond fused head): per-tap 2-D matmuls -------------
    # TODO(synk): for large feature maps, build a full (M, KH*KW*C1) im2col
    # scratch (K=512) and tile rows over a reduction grid axis with a VMEM
    # accumulator; at these sizes 16 accumulating matmuls are fine.
    acc = jnp.zeros((H2 * W2c, C_headp), jnp.float32)
    for kh in range(KH):
        for kw in range(KW):
            patch = f_ref[pl.ds(kh, H2), pl.ds(kw, W2c), :]    # (H2, W2c, C1)
            patch2 = patch.reshape(H2 * W2c, C1)               # free reshape (W2c % 8 == 0)
            acc = acc + jnp.dot(patch2.astype(compute_dtype),
                                w2_ref[kh, kw].astype(compute_dtype),
                                preferred_element_type=jnp.float32)
    acc = acc + b2_ref[...]
    head = acc.reshape(H2, W2c, C_headp)
    head_ref[0] = head                                         # lane-dense store (128 ch)

    # ---- cond logits: spatial mean over the VALID region, in-kernel -----
    valid = head[:, :W2, :]
    cmean_ref[...] = jnp.sum(valid, axis=(0, 1), keepdims=True) * (1.0 / float(H2 * W2))


# ----------------------------------------------------------------------------
# Glue: stride-2 im2col patch extraction (pure indexing, zero-pad included).
# ----------------------------------------------------------------------------
def _extract_conv1_patches(x_nhwc, KH, KW, stride, padding, H1, W1c):
    n, h, w, c = x_nhwc.shape
    hp_needed = stride * (H1 - 1) + KH
    wp_needed = stride * (W1c - 1) + KW
    pad_h = max(hp_needed - (h + 2 * padding), 0)
    pad_w = max(wp_needed - (w + 2 * padding), 0)
    x_pad = jnp.pad(x_nhwc, ((0, 0),
                             (padding, padding + pad_h),
                             (padding, padding + pad_w),
                             (0, 0)))
    cols = []
    for kh in range(KH):
        for kw in range(KW):
            sl = x_pad[:, kh::stride, kw::stride, :]
            cols.append(sl[:, :H1, :W1c, :])
    # Ordering (kh, kw, c) matches w.reshape(KH*KW*C_in, C_out).
    return jnp.concatenate(cols, axis=-1)                      # (N, H1, W1c, KH*KW*C)


# ----------------------------------------------------------------------------
# Parameter init (deterministic, PyTorch Conv2d default-style uniform bounds).
# ----------------------------------------------------------------------------
def _init_conv(key, kh, kw, c_in, c_out):
    wk, bk = jax.random.split(key)
    fan_in = kh * kw * c_in
    bound = 1.0 / float(fan_in) ** 0.5
    w = jax.random.uniform(wk, (kh, kw, c_in, c_out), jnp.float32, -bound, bound)
    b = jax.random.uniform(bk, (c_out,), jnp.float32, -bound, bound)
    return w, b


class DiscriminatorPallas:
    # TODO(synk): `self.net` / `self.clf` are abstract in DiscriminatorBase; the
    # PatchGAN stand-ins below fix a concrete, deterministic instantiation.
    def __init__(self, in_channels, base_channels=32, num_classes=None, seed=0,
                 compute_dtype=jnp.float32):
        # compute_dtype=jnp.bfloat16 enables the 2x MXU path on v6e/v7x
        # (f32 accumulation preserved); default f32 matches the reference tightly.
        self.in_channels = in_channels
        self.base_channels = base_channels
        self.num_classes = num_classes
        self.compute_dtype = compute_dtype
        self.KH = self.KW = 4

        k = jax.random.PRNGKey(seed)
        k_net, k_clf, k_cond = jax.random.split(k, 3)
        self.net_w, self.net_b = _init_conv(k_net, 4, 4, in_channels, base_channels)
        self.clf_w, self.clf_b = _init_conv(k_clf, 4, 4, base_channels, 1)
        heads_w, heads_b = [self.clf_w], [self.clf_b]
        if num_classes is not None:
            # generate_cond: Conv2d(out_channels, num_classes, k=4, p=1, s=1)
            self.cond_w, self.cond_b = _init_conv(k_cond, 4, 4, base_channels, num_classes)
            heads_w.append(self.cond_w)
            heads_b.append(self.cond_b)

        # Fused clf+cond head, zero-padded to a lane-dense channel count.
        w_head = jnp.concatenate(heads_w, axis=-1)
        b_head = jnp.concatenate(heads_b, axis=-1)
        self.c_head = w_head.shape[-1]
        self.c_headp = _round_up(self.c_head, 128)
        pad_c = self.c_headp - self.c_head
        self.head_w = jnp.pad(w_head, ((0, 0), (0, 0), (0, 0), (0, pad_c)))
        self.head_b = jnp.pad(b_head, ((0, pad_c),)).reshape(1, -1)

        # Pre-flattened (im2col) net weights.
        self.net_w_flat = self.net_w.reshape(self.KH * self.KW * in_channels, base_channels)
        self.net_b2 = self.net_b.reshape(1, -1)

    def __call__(self, x_nchw):
        x = jnp.transpose(x_nchw, (0, 2, 3, 1))                # NCHW -> NHWC
        n, h, w, c = x.shape
        KH, KW, stride, pad = self.KH, self.KW, 2, 1
        C1, C_headp = self.base_channels, self.c_headp

        H1 = (h + 2 * pad - KH) // stride + 1
        W1 = (w + 2 * pad - KW) // stride + 1
        W1c = _round_up(W1, 8)                                  # compute-width padding
        H2 = H1 + 2 - KH + 1                                    # clf/cond: k4, p1, s1
        W2 = W1 + 2 - KW + 1
        W2c = _round_up(W2, 8)
        Hf = H1 + 2
        Wf = _round_up(max(W1 + 2, W2c + KW - 1), 8)

        patches = _extract_conv1_patches(x, KH, KW, stride, pad, H1, W1c)
        K1 = KH * KW * c

        kernel = functools.partial(
            _disc_fused_kernel, KH=KH, KW=KW, H1=H1, W1=W1, W1c=W1c,
            H2=H2, W2=W2, W2c=W2c, C1=C1, C_headp=C_headp,
            leaky_slope=0.2, compute_dtype=self.compute_dtype)

        # TODO(synk): for realistic (large) spatial inputs, add a spatial
        # row-tile grid axis (parallel) so work shards across v7x's 2 TCs and
        # per-step VMEM stays bounded; whole-image blocks are fine here.
        head, cmean = pl.pallas_call(
            kernel,
            grid=(n,),
            in_specs=[
                pl.BlockSpec((1, H1, W1c, K1), lambda i: (i, 0, 0, 0)),
                pl.BlockSpec((K1, C1), lambda i: (0, 0)),
                pl.BlockSpec((1, C1), lambda i: (0, 0)),
                pl.BlockSpec((KH, KW, C1, C_headp), lambda i: (0, 0, 0, 0)),
                pl.BlockSpec((1, C_headp), lambda i: (0, 0)),
            ],
            out_specs=(
                pl.BlockSpec((1, H2, W2c, C_headp), lambda i: (i, 0, 0, 0)),
                pl.BlockSpec((1, 1, C_headp), lambda i: (i, 0, 0)),
            ),
            out_shape=(
                jax.ShapeDtypeStruct((n, H2, W2c, C_headp), jnp.float32),
                jax.ShapeDtypeStruct((n, 1, C_headp), jnp.float32),
            ),
            scratch_shapes=[pltpu.VMEM((Hf, Wf, C1), jnp.float32)],
            compiler_params=pltpu.CompilerParams(
                dimension_semantics=("parallel",),
                vmem_limit_bytes=32 * 1024 * 1024),
        )(patches, self.net_w_flat, self.net_b2, self.head_w, self.head_b)

        # Glue: slice the real channels / valid columns back out.
        logits = head[:, :, :W2, 0:1]                           # clf channel
        logits = jnp.transpose(logits, (0, 3, 1, 2))            # back to NCHW
        cond_logits = None
        if self.num_classes is not None:
            cond_logits = cmean[:, 0, 1:1 + self.num_classes]   # (N, num_classes)
        return DiscriminatorOutput(logits, cond_logits)


# ----------------------------------------------------------------------------
# Pure-JAX reference (for correctness check only).
# ----------------------------------------------------------------------------
def _conv_ref(x_nhwc, w, b, stride, padding, leaky_slope=None):
    y = jax.lax.conv_general_dilated(
        x_nhwc, w, window_strides=(stride, stride),
        padding=((padding, padding), (padding, padding)),
        dimension_numbers=("NHWC", "HWIO", "NHWC"))
    y = y + b
    if leaky_slope is not None:
        y = jnp.where(y >= 0, y, leaky_slope * y)
    return y


def _reference_forward(x_nchw, disc):
    x = jnp.transpose(x_nchw, (0, 2, 3, 1))
    feat = _conv_ref(x, disc.net_w, disc.net_b, 2, 1, leaky_slope=0.2)
    logits = _conv_ref(feat, disc.clf_w, disc.clf_b, 1, 1)
    logits = jnp.transpose(logits, (0, 3, 1, 2))
    cond = None
    if disc.num_classes is not None:
        cond_map = _conv_ref(feat, disc.cond_w, disc.cond_b, 1, 1)
        cond = jnp.mean(cond_map, axis=(1, 2))
    return DiscriminatorOutput(logits, cond)


if __name__ == "__main__":
    key = jax.random.PRNGKey(0)
    batch, in_channels, spatial = 2, 4, 16
    num_classes = 10
    x = jax.random.normal(key, (batch, in_channels, spatial, spatial), jnp.float32)

    disc = DiscriminatorPallas(in_channels, base_channels=32,
                               num_classes=num_classes, seed=0)

    out = disc(x)
    jax.block_until_ready(out.output)
    jax.block_until_ready(out.cond_logits)

    ref = _reference_forward(x, disc)
    assert out.output.shape == (batch, 1, 7, 7), out.output.shape
    assert out.cond_logits.shape == (batch, num_classes), out.cond_logits.shape
    assert jnp.allclose(out.output, ref.output, atol=2e-4, rtol=2e-4)
    assert jnp.allclose(out.cond_logits, ref.cond_logits, atol=2e-4, rtol=2e-4)

    print("KERNEL_OK")
</pallas_src>

<mosaic_0001>
module attributes {stable_mosaic.version = 11 : i64} {
  func.func @_disc_fused_kernel(%arg0: i32, %arg1: memref<1x8x8x64xf32, #tpu.memory_space<vmem>>, %arg2: memref<64x32xf32, #tpu.memory_space<vmem>>, %arg3: memref<1x32xf32, #tpu.memory_space<vmem>>, %arg4: memref<4x4x32x128xf32, #tpu.memory_space<vmem>>, %arg5: memref<1x128xf32, #tpu.memory_space<vmem>>, %arg6: memref<1x7x8x128xf32, #tpu.memory_space<vmem>>, %arg7: memref<1x1x128xf32, #tpu.memory_space<vmem>>, %arg8: memref<10x16x32xf32, #tpu.memory_space<vmem>>) attributes {dimension_semantics = [#tpu.dimension_semantics<parallel>], iteration_bounds = array<i64: 2>, scalar_prefetch = 0 : i64, scratch_operands = 1 : i64, tpu.core_type = #tpu.core_type<tc>, window_params = [{transform_indices = @transform_0, window_bounds = array<i64: 1, 8, 8, 64>}, {pipeline_mode = #tpu.pipeline_mode<synchronous>, transform_indices = @transform_1, window_bounds = array<i64: 64, 32>}, {pipeline_mode = #tpu.pipeline_mode<synchronous>, transform_indices = @transform_2, window_bounds = array<i64: 1, 32>}, {pipeline_mode = #tpu.pipeline_mode<synchronous>, transform_indices = @transform_3, window_bounds = array<i64: 4, 4, 32, 128>}, {pipeline_mode = #tpu.pipeline_mode<synchronous>, transform_indices = @transform_4, window_bounds = array<i64: 1, 128>}, {transform_indices = @transform_5, window_bounds = array<i64: 1, 7, 8, 128>}, {transform_indices = @transform_6, window_bounds = array<i64: 1, 1, 128>}]} {
    %c0 = arith.constant 0 : index
    %c0_0 = arith.constant 0 : index
    %c0_1 = arith.constant 0 : index
    %c0_2 = arith.constant 0 : index
    %0 = vector.load %arg1[%c0, %c0_0, %c0_1, %c0_2] : memref<1x8x8x64xf32, #tpu.memory_space<vmem>>, vector<1x8x8x64xf32>
    %1 = vector.shape_cast %0 : vector<1x8x8x64xf32> to vector<8x8x64xf32>
    %2 = vector.shape_cast %1 : vector<8x8x64xf32> to vector<64x64xf32>
    %c0_3 = arith.constant 0 : index
    %c0_4 = arith.constant 0 : index
    %3 = vector.load %arg2[%c0_3, %c0_4] : memref<64x32xf32, #tpu.memory_space<vmem>>, vector<64x32xf32>
    %cst = arith.constant dense<0.000000e+00> : vector<64x32xf32>
    %4 = tpu.matmul %2, %3, %cst {dimension_numbers = #tpu.dot_dimension_numbers<[1], [0], [0], [1], [0, 0, 1, 1], [], []>} : vector<64x64xf32>, vector<64x32xf32>, vector<64x32xf32> -> vector<64x32xf32>
    %c0_5 = arith.constant 0 : index
    %c0_6 = arith.constant 0 : index
    %5 = vector.load %arg3[%c0_5, %c0_6] : memref<1x32xf32, #tpu.memory_space<vmem>>, vector<1x32xf32>
    %6 = vector.broadcast %5 : vector<1x32xf32> to vector<64x32xf32>
    %7 = arith.addf %4, %6 : vector<64x32xf32>
    %cst_7 = arith.constant 0.000000e+00 : f32
    %8 = vector.broadcast %cst_7 : f32 to vector<64x32xf32>
    %9 = arith.cmpf oge, %7, %8 : vector<64x32xf32>
    %cst_8 = arith.constant 2.000000e-01 : f32
    %10 = vector.broadcast %cst_8 : f32 to vector<64x32xf32>
    %11 = arith.mulf %10, %7 : vector<64x32xf32>
    %12 = arith.select %9, %7, %11 : vector<64x32xi1>, vector<64x32xf32>
    %13 = vector.shape_cast %12 : vector<64x32xf32> to vector<8x8x32xf32>
    %cst_9 = arith.constant 0.000000e+00 : f32
    %14 = vector.broadcast %cst_9 : f32 to vector<10x16x32xf32>
    %c0_10 = arith.constant 0 : index
    %c0_11 = arith.constant 0 : index
    %c0_12 = arith.constant 0 : index
    %15 = vector.load %arg8[%c0_10, %c0_11, %c0_12] : memref<10x16x32xf32, #tpu.memory_space<vmem>>, vector<10x16x32xf32>
    tpu.vector_store %arg8[%c0_10, %c0_11, %c0_12], %14 {strides = array<i32>} : memref<10x16x32xf32, #tpu.memory_space<vmem>>, vector<10x16x32xf32>,
    %c1 = arith.constant 1 : index
    %c1_13 = arith.constant 1 : index
    %c0_14 = arith.constant 0 : index
    %16 = vector.load %arg8[%c1, %c1_13, %c0_14] : memref<10x16x32xf32, #tpu.memory_space<vmem>>, vector<8x8x32xf32>
    tpu.vector_store %arg8[%c1, %c1_13, %c0_14], %13 {strides = array<i32>} : memref<10x16x32xf32, #tpu.memory_space<vmem>>, vector<8x8x32xf32>,
    %cst_15 = arith.constant 0.000000e+00 : f32
    %17 = vector.broadcast %cst_15 : f32 to vector<56x128xf32>
    %c0_16 = arith.constant 0 : index
    %c0_17 = arith.constant 0 : index
    %c0_18 = arith.constant 0 : index
    %18 = vector.load %arg8[%c0_16, %c0_17, %c0_18] : memref<10x16x32xf32, #tpu.memory_space<vmem>>, vector<7x8x32xf32>
    %19 = vector.shape_cast %18 : vector<7x8x32xf32> to vector<56x32xf32>
    %c0_19 = arith.constant 0 : index
    %c0_20 = arith.constant 0 : index
    %c0_21 = arith.constant 0 : index
    %c0_22 = arith.constant 0 : index
    %20 = vector.load %arg4[%c0_19, %c0_20, %c0_21, %c0_22] : memref<4x4x32x128xf32, #tpu.memory_space<vmem>>, vector<1x1x32x128xf32>
    %21 = vector.shape_cast %20 : vector<1x1x32x128xf32> to vector<32x128xf32>
    %cst_23 = arith.constant dense<0.000000e+00> : vector<56x128xf32>
    %22 = tpu.matmul %19, %21, %cst_23 {dimension_numbers = #tpu.dot_dimension_numbers<[1], [0], [0], [1], [0, 0, 1, 1], [], []>} : vector<56x32xf32>, vector<32x128xf32>, vector<56x128xf32> -> vector<56x128xf32>
    %23 = arith.addf %17, %22 : vector<56x128xf32>
    %c0_24 = arith.constant 0 : index
    %c1_25 = arith.constant 1 : index
    %c0_26 = arith.constant 0 : index
    %24 = vector.load %arg8[%c0_24, %c1_25, %c0_26] : memref<10x16x32xf32, #tpu.memory_space<vmem>>, vector<7x8x32xf32>
    %25 = vector.shape_cast %24 : vector<7x8x32xf32> to vector<56x32xf32>
    %c0_27 = arith.constant 0 : index
    %c1_28 = arith.constant 1 : index
    %c0_29 = arith.constant 0 : index
    %c0_30 = arith.constant 0 : index
    %26 = vector.load %arg4[%c0_27, %c1_28, %c0_29, %c0_30] : memref<4x4x32x128xf32, #tpu.memory_space<vmem>>, vector<1x1x32x128xf32>
    %27 = vector.shape_cast %26 : vector<1x1x32x128xf32> to vector<32x128xf32>
    %cst_31 = arith.constant dense<0.000000e+00> : vector<56x128xf32>
    %28 = tpu.matmul %25, %27, %cst_31 {dimension_numbers = #tpu.dot_dimension_numbers<[1], [0], [0], [1], [0, 0, 1, 1], [], []>} : vector<56x32xf32>, vector<32x128xf32>, vector<56x128xf32> -> vector<56x128xf32>
    %29 = arith.addf %23, %28 : vector<56x128xf32>
    %c0_32 = arith.constant 0 : index
    %c2 = arith.constant 2 : index
    %c0_33 = arith.constant 0 : index
    %30 = vector.load %arg8[%c0_32, %c2, %c0_33] : memref<10x16x32xf32, #tpu.memory_space<vmem>>, vector<7x8x32xf32>
    %31 = vector.shape_cast %30 : vector<7x8x32xf32> to vector<56x32xf32>
    %c0_34 = arith.constant 0 : index
    %c2_35 = arith.constant 2 : index
    %c0_36 = arith.constant 0 : index
    %c0_37 = arith.constant 0 : index
    %32 = vector.load %arg4[%c0_34, %c2_35, %c0_36, %c0_37] : memref<4x4x32x128xf32, #tpu.memory_space<vmem>>, vector<1x1x32x128xf32>
    %33 = vector.shape_cast %32 : vector<1x1x32x128xf32> to vector<32x128xf32>
    %cst_38 = arith.constant dense<0.000000e+00> : vector<56x128xf32>
    %34 = tpu.matmul %31, %33, %cst_38 {dimension_numbers = #tpu.dot_dimension_numbers<[1], [0], [0], [1], [0, 0, 1, 1], [], []>} : vector<56x32xf32>, vector<32x128xf32>, vector<56x128xf32> -> vector<56x128xf32>
    %35 = arith.addf %29, %34 : vector<56x128xf32>
    %c0_39 = arith.constant 0 : index
    %c3 = arith.constant 3 : index
    %c0_40 = arith.constant 0 : index
    %36 = vector.load %arg8[%c0_39, %c3, %c0_40] : memref<10x16x32xf32, #tpu.memory_space<vmem>>, vector<7x8x32xf32>
    %37 = vector.shape_cast %36 : vector<7x8x32xf32> to vector<56x32xf32>
    %c0_41 = arith.constant 0 : index
    %c3_42 = arith.constant 3 : index
    %c0_43 = arith.constant 0 : index
    %c0_44 = arith.constant 0 : index
    %38 = vector.load %arg4[%c0_41, %c3_42, %c0_43, %c0_44] : memref<4x4x32x128xf32, #tpu.memory_space<vmem>>, vector<1x1x32x128xf32>
    %39 = vector.shape_cast %38 : vector<1x1x32x128xf32> to vector<32x128xf32>
    %cst_45 = arith.constant dense<0.000000e+00> : vector<56x128xf32>
    %40 = tpu.matmul %37, %39, %cst_45 {dimension_numbers = #tpu.dot_dimension_numbers<[1], [0], [0], [1], [0, 0, 1, 1], [], []>} : vector<56x32xf32>, vector<32x128xf32>, vector<56x128xf32> -> vector<56x128xf32>
    %41 = arith.addf %35, %40 : vector<56x128xf32>
    %c1_46 = arith.constant 1 : index
    %c0_47 = arith.constant 0 : index
    %c0_48 = arith.constant 0 : index
    %42 = vector.load %arg8[%c1_46, %c0_47, %c0_48] : memref<10x16x32xf32, #tpu.memory_space<vmem>>, vector<7x8x32xf32>
    %43 = vector.shape_cast %42 : vector<7x8x32xf32> to vector<56x32xf32>
    %c1_49 = arith.constant 1 : index
    %c0_50 = arith.constant 0 : index
    %c0_51 = arith.constant 0 : index
    %c0_52 = arith.constant 0 : index
    %44 = vector.load %arg4[%c1_49, %c0_50, %c0_51, %c0_52] : memref<4x4x32x128xf32, #tpu.memory_space<vmem>>, vector<1x1x32x128xf32>
    %45 = vector.shape_cast %44 : vector<1x1x32x128xf32> to vector<32x128xf32>
    %cst_53 = arith.constant dense<0.000000e+00> : vector<56x128xf32>
    %46 = tpu.matmul %43, %45, %cst_53 {dimension_numbers = #tpu.dot_dimension_numbers<[1], [0], [0], [1], [0, 0, 1, 1], [], []>} : vector<56x32xf32>, vector<32x128xf32>, vector<56x128xf32> -> vector<56x128xf32>
    %47 = arith.addf %41, %46 : vector<56x128xf32>
    %c1_54 = arith.constant 1 : index
    %c1_55 = arith.constant 1 : index
    %c0_56 = arith.constant 0 : index
    %48 = vector.load %arg8[%c1_54, %c1_55, %c0_56] : memref<10x16x32xf32, #tpu.memory_space<vmem>>, vector<7x8x32xf32>
    %49 = vector.shape_cast %48 : vector<7x8x32xf32> to vector<56x32xf32>
    %c1_57 = arith.constant 1 : index
    %c1_58 = arith.constant 1 : index
    %c0_59 = arith.constant 0 : index
    %c0_60 = arith.constant 0 : index
    %50 = vector.load %arg4[%c1_57, %c1_58, %c0_59, %c0_60] : memref<4x4x32x128xf32, #tpu.memory_space<vmem>>, vector<1x1x32x128xf32>
    %51 = vector.shape_cast %50 : vector<1x1x32x128xf32> to vector<32x128xf32>
    %cst_61 = arith.constant dense<0.000000e+00> : vector<56x128xf32>
    %52 = tpu.matmul %49, %51, %cst_61 {dimension_numbers = #tpu.dot_dimension_numbers<[1], [0], [0], [1], [0, 0, 1, 1], [], []>} : vector<56x32xf32>, vector<32x128xf32>, vector<56x128xf32> -> vector<56x128xf32>
    %53 = arith.addf %47, %52 : vector<56x128xf32>
    %c1_62 = arith.constant 1 : index
    %c2_63 = arith.constant 2 : index
    %c0_64 = arith.constant 0 : index
    %54 = vector.load %arg8[%c1_62, %c2_63, %c0_64] : memref<10x16x32xf32, #tpu.memory_space<vmem>>, vector<7x8x32xf32>
    %55 = vector.shape_cast %54 : vector<7x8x32xf32> to vector<56x32xf32>
    %c1_65 = arith.constant 1 : index
    %c2_66 = arith.constant 2 : index
    %c0_67 = arith.constant 0 : index
    %c0_68 = arith.constant 0 : index
    %56 = vector.load %arg4[%c1_65, %c2_66, %c0_67, %c0_68] : memref<4x4x32x128xf32, #tpu.memory_space<vmem>>, vector<1x1x32x128xf32>
    %57 = vector.shape_cast %56 : vector<1x1x32x128xf32> to vector<32x128xf32>
    %cst_69 = arith.constant dense<0.000000e+00> : vector<56x128xf32>
    %58 = tpu.matmul %55, %57, %cst_69 {dimension_numbers = #tpu.dot_dimension_numbers<[1], [0], [0], [1], [0, 0, 1, 1], [], []>} : vector<56x32xf32>, vector<32x128xf32>, vector<56x128xf32> -> vector<56x128xf32>
    %59 = arith.addf %53, %58 : vector<56x128xf32>
    %c1_70 = arith.constant 1 : index
    %c3_71 = arith.constant 3 : index
    %c0_72 = arith.constant 0 : index
    %60 = vector.load %arg8[%c1_70, %c3_71, %c0_72] : memref<10x16x32xf32, #tpu.memory_space<vmem>>, vector<7x8x32xf32>
    %61 = vector.shape_cast %60 : vector<7x8x32xf32> to vector<56x32xf32>
    %c1_73 = arith.constant 1 : index
    %c3_74 = arith.constant 3 : index
    %c0_75 = arith.constant 0 : index
    %c0_76 = arith.constant 0 : index
    %62 = vector.load %arg4[%c1_73, %c3_74, %c0_75, %c0_76] : memref<4x4x32x128xf32, #tpu.memory_space<vmem>>, vector<1x1x32x128xf32>
    %63 = vector.shape_cast %62 : vector<1x1x32x128xf32> to vector<32x128xf32>
    %cst_77 = arith.constant dense<0.000000e+00> : vector<56x128xf32>
    %64 = tpu.matmul %61, %63, %cst_77 {dimension_numbers = #tpu.dot_dimension_numbers<[1], [0], [0], [1], [0, 0, 1, 1], [], []>} : vector<56x32xf32>, vector<32x128xf32>, vector<56x128xf32> -> vector<56x128xf32>
    %65 = arith.addf %59, %64 : vector<56x128xf32>
    %c2_78 = arith.constant 2 : index
    %c0_79 = arith.constant 0 : index
    %c0_80 = arith.constant 0 : index
    %66 = vector.load %arg8[%c2_78, %c0_79, %c0_80] : memref<10x16x32xf32, #tpu.memory_space<vmem>>, vector<7x8x32xf32>
    %67 = vector.shape_cast %66 : vector<7x8x32xf32> to vector<56x32xf32>
    %c2_81 = arith.constant 2 : index
    %c0_82 = arith.constant 0 : index
    %c0_83 = arith.constant 0 : index
    %c0_84 = arith.constant 0 : index
    %68 = vector.load %arg4[%c2_81, %c0_82, %c0_83, %c0_84] : memref<4x4x32x128xf32, #tpu.memory_space<vmem>>, vector<1x1x32x128xf32>
    %69 = vector.shape_cast %68 : vector<1x1x32x128xf32> to vector<32x128xf32>
    %cst_85 = arith.constant dense<0.000000e+00> : vector<56x128xf32>
    %70 = tpu.matmul %67, %69, %cst_85 {dimension_numbers = #tpu.dot_dimension_numbers<[1], [0], [0], [1], [0, 0, 1, 1], [], []>} : vector<56x32xf32>, vector<32x128xf32>, vector<56x128xf32> -> vector<56x128xf32>
    %71 = arith.addf %65, %70 : vector<56x128xf32>
    %c2_86 = arith.constant 2 : index
    %c1_87 = arith.constant 1 : index
    %c0_88 = arith.constant 0 : index
    %72 = vector.load %arg8[%c2_86, %c1_87, %c0_88] : memref<10x16x32xf32, #tpu.memory_space<vmem>>, vector<7x8x32xf32>
    %73 = vector.shape_cast %72 : vector<7x8x32xf32> to vector<56x32xf32>
    %c2_89 = arith.constant 2 : index
    %c1_90 = arith.constant 1 : index
    %c0_91 = arith.constant 0 : index
    %c0_92 = arith.constant 0 : index
    %74 = vector.load %arg4[%c2_89, %c1_90, %c0_91, %c0_92] : memref<4x4x32x128xf32, #tpu.memory_space<vmem>>, vector<1x1x32x128xf32>
    %75 = vector.shape_cast %74 : vector<1x1x32x128xf32> to vector<32x128xf32>
    %cst_93 = arith.constant dense<0.000000e+00> : vector<56x128xf32>
    %76 = tpu.matmul %73, %75, %cst_93 {dimension_numbers = #tpu.dot_dimension_numbers<[1], [0], [0], [1], [0, 0, 1, 1], [], []>} : vector<56x32xf32>, vector<32x128xf32>, vector<56x128xf32> -> vector<56x128xf32>
    %77 = arith.addf %71, %76 : vector<56x128xf32>
    %c2_94 = arith.constant 2 : index
    %c2_95 = arith.constant 2 : index
    %c0_96 = arith.constant 0 : index
    %78 = vector.load %arg8[%c2_94, %c2_95, %c0_96] : memref<10x16x32xf32, #tpu.memory_space<vmem>>, vector<7x8x32xf32>
    %79 = vector.shape_cast %78 : vector<7x8x32xf32> to vector<56x32xf32>
    %c2_97 = arith.constant 2 : index
    %c2_98 = arith.constant 2 : index
    %c0_99 = arith.constant 0 : index
    %c0_100 = arith.constant 0 : index
    %80 = vector.load %arg4[%c2_97, %c2_98, %c0_99, %c0_100] : memref<4x4x32x128xf32, #tpu.memory_space<vmem>>, vector<1x1x32x128xf32>
    %81 = vector.shape_cast %80 : vector<1x1x32x128xf32> to vector<32x128xf32>
    %cst_101 = arith.constant dense<0.000000e+00> : vector<56x128xf32>
    %82 = tpu.matmul %79, %81, %cst_101 {dimension_numbers = #tpu.dot_dimension_numbers<[1], [0], [0], [1], [0, 0, 1, 1], [], []>} : vector<56x32xf32>, vector<32x128xf32>, vector<56x128xf32> -> vector<56x128xf32>
    %83 = arith.addf %77, %82 : vector<56x128xf32>
    %c2_102 = arith.constant 2 : index
    %c3_103 = arith.constant 3 : index
    %c0_104 = arith.constant 0 : index
    %84 = vector.load %arg8[%c2_102, %c3_103, %c0_104] : memref<10x16x32xf32, #tpu.memory_space<vmem>>, vector<7x8x32xf32>
    %85 = vector.shape_cast %84 : vector<7x8x32xf32> to vector<56x32xf32>
    %c2_105 = arith.constant 2 : index
    %c3_106 = arith.constant 3 : index
    %c0_107 = arith.constant 0 : index
    %c0_108 = arith.constant 0 : index
    %86 = vector.load %arg4[%c2_105, %c3_106, %c0_107, %c0_108] : memref<4x4x32x128xf32, #tpu.memory_space<vmem>>, vector<1x1x32x128xf32>
    %87 = vector.shape_cast %86 : vector<1x1x32x128xf32> to vector<32x128xf32>
    %cst_109 = arith.constant dense<0.000000e+00> : vector<56x128xf32>
    %88 = tpu.matmul %85, %87, %cst_109 {dimension_numbers = #tpu.dot_dimension_numbers<[1], [0], [0], [1], [0, 0, 1, 1], [], []>} : vector<56x32xf32>, vector<32x128xf32>, vector<56x128xf32> -> vector<56x128xf32>
    %89 = arith.addf %83, %88 : vector<56x128xf32>
    %c3_110 = arith.constant 3 : index
    %c0_111 = arith.constant 0 : index
    %c0_112 = arith.constant 0 : index
    %90 = vector.load %arg8[%c3_110, %c0_111, %c0_112] : memref<10x16x32xf32, #tpu.memory_space<vmem>>, vector<7x8x32xf32>
    %91 = vector.shape_cast %90 : vector<7x8x32xf32> to vector<56x32xf32>
    %c3_113 = arith.constant 3 : index
    %c0_114 = arith.constant 0 : index
    %c0_115 = arith.constant 0 : index
    %c0_116 = arith.constant 0 : index
    %92 = vector.load %arg4[%c3_113, %c0_114, %c0_115, %c0_116] : memref<4x4x32x128xf32, #tpu.memory_space<vmem>>, vector<1x1x32x128xf32>
    %93 = vector.shape_cast %92 : vector<1x1x32x128xf32> to vector<32x128xf32>
    %cst_117 = arith.constant dense<0.000000e+00> : vector<56x128xf32>
    %94 = tpu.matmul %91, %93, %cst_117 {dimension_numbers = #tpu.dot_dimension_numbers<[1], [0], [0], [1], [0, 0, 1, 1], [], []>} : vector<56x32xf32>, vector<32x128xf32>, vector<56x128xf32> -> vector<56x128xf32>
    %95 = arith.addf %89, %94 : vector<56x128xf32>
    %c3_118 = arith.constant 3 : index
    %c1_119 = arith.constant 1 : index
    %c0_120 = arith.constant 0 : index
    %96 = vector.load %arg8[%c3_118, %c1_119, %c0_120] : memref<10x16x32xf32, #tpu.memory_space<vmem>>, vector<7x8x32xf32>
    %97 = vector.shape_cast %96 : vector<7x8x32xf32> to vector<56x32xf32>
    %c3_121 = arith.constant 3 : index
    %c1_122 = arith.constant 1 : index
    %c0_123 = arith.constant 0 : index
    %c0_124 = arith.constant 0 : index
    %98 = vector.load %arg4[%c3_121, %c1_122, %c0_123, %c0_124] : memref<4x4x32x128xf32, #tpu.memory_space<vmem>>, vector<1x1x32x128xf32>
    %99 = vector.shape_cast %98 : vector<1x1x32x128xf32> to vector<32x128xf32>
    %cst_125 = arith.constant dense<0.000000e+00> : vector<56x128xf32>
    %100 = tpu.matmul %97, %99, %cst_125 {dimension_numbers = #tpu.dot_dimension_numbers<[1], [0], [0], [1], [0, 0, 1, 1], [], []>} : vector<56x32xf32>, vector<32x128xf32>, vector<56x128xf32> -> vector<56x128xf32>
    %101 = arith.addf %95, %100 : vector<56x128xf32>
    %c3_126 = arith.constant 3 : index
    %c2_127 = arith.constant 2 : index
    %c0_128 = arith.constant 0 : index
    %102 = vector.load %arg8[%c3_126, %c2_127, %c0_128] : memref<10x16x32xf32, #tpu.memory_space<vmem>>, vector<7x8x32xf32>
    %103 = vector.shape_cast %102 : vector<7x8x32xf32> to vector<56x32xf32>
    %c3_129 = arith.constant 3 : index
    %c2_130 = arith.constant 2 : index
    %c0_131 = arith.constant 0 : index
    %c0_132 = arith.constant 0 : index
    %104 = vector.load %arg4[%c3_129, %c2_130, %c0_131, %c0_132] : memref<4x4x32x128xf32, #tpu.memory_space<vmem>>, vector<1x1x32x128xf32>
    %105 = vector.shape_cast %104 : vector<1x1x32x128xf32> to vector<32x128xf32>
    %cst_133 = arith.constant dense<0.000000e+00> : vector<56x128xf32>
    %106 = tpu.matmul %103, %105, %cst_133 {dimension_numbers = #tpu.dot_dimension_numbers<[1], [0], [0], [1], [0, 0, 1, 1], [], []>} : vector<56x32xf32>, vector<32x128xf32>, vector<56x128xf32> -> vector<56x128xf32>
    %107 = arith.addf %101, %106 : vector<56x128xf32>
    %c3_134 = arith.constant 3 : index
    %c3_135 = arith.constant 3 : index
    %c0_136 = arith.constant 0 : index
    %108 = vector.load %arg8[%c3_134, %c3_135, %c0_136] : memref<10x16x32xf32, #tpu.memory_space<vmem>>, vector<7x8x32xf32>
    %109 = vector.shape_cast %108 : vector<7x8x32xf32> to vector<56x32xf32>
    %c3_137 = arith.constant 3 : index
    %c3_138 = arith.constant 3 : index
    %c0_139 = arith.constant 0 : index
    %c0_140 = arith.constant 0 : index
    %110 = vector.load %arg4[%c3_137, %c3_138, %c0_139, %c0_140] : memref<4x4x32x128xf32, #tpu.memory_space<vmem>>, vector<1x1x32x128xf32>
    %111 = vector.shape_cast %110 : vector<1x1x32x128xf32> to vector<32x128xf32>
    %cst_141 = arith.constant dense<0.000000e+00> : vector<56x128xf32>
    %112 = tpu.matmul %109, %111, %cst_141 {dimension_numbers = #tpu.dot_dimension_numbers<[1], [0], [0], [1], [0, 0, 1, 1], [], []>} : vector<56x32xf32>, vector<32x128xf32>, vector<56x128xf32> -> vector<56x128xf32>
    %113 = arith.addf %107, %112 : vector<56x128xf32>
    %c0_142 = arith.constant 0 : index
    %c0_143 = arith.constant 0 : index
    %114 = vector.load %arg5[%c0_142, %c0_143] : memref<1x128xf32, #tpu.memory_space<vmem>>, vector<1x128xf32>
    %115 = vector.broadcast %114 : vector<1x128xf32> to vector<56x128xf32>
    %116 = arith.addf %113, %115 : vector<56x128xf32>
    %117 = vector.shape_cast %116 : vector<56x128xf32> to vector<7x8x128xf32>
    %c0_144 = arith.constant 0 : index
    %c0_145 = arith.constant 0 : index
    %c0_146 = arith.constant 0 : index
    %c0_147 = arith.constant 0 : index
    %118 = vector.load %arg6[%c0_144, %c0_145, %c0_146, %c0_147] : memref<1x7x8x128xf32, #tpu.memory_space<vmem>>, vector<1x7x8x128xf32>
    %119 = vector.shape_cast %118 : vector<1x7x8x128xf32> to vector<7x8x128xf32>
    %120 = vector.shape_cast %117 : vector<7x8x128xf32> to vector<1x7x8x128xf32>
    tpu.vector_store %arg6[%c0_144, %c0_145, %c0_146, %c0_147], %120 {strides = array<i32>} : memref<1x7x8x128xf32, #tpu.memory_space<vmem>>, vector<1x7x8x128xf32>,
    %121 = vector.extract_strided_slice %117 {offsets = [0, 0, 0], sizes = [7, 7, 128], strides = [1, 1, 1]} : vector<7x8x128xf32> to vector<7x7x128xf32>
    %cst_148 = arith.constant dense<0.000000e+00> : vector<128xf32>
    %122 = vector.multi_reduction <add>, %121, %cst_148 [0, 1] : vector<7x7x128xf32> to vector<128xf32>
    %123 = vector.shape_cast %122 : vector<128xf32> to vector<1x1x128xf32>
    %cst_149 = arith.constant 0.0204081628 : f32
    %124 = vector.broadcast %cst_149 : f32 to vector<1x1x128xf32>
    %125 = arith.mulf %123, %124 : vector<1x1x128xf32>
    %c0_150 = arith.constant 0 : index
    %c0_151 = arith.constant 0 : index
    %c0_152 = arith.constant 0 : index
    %126 = vector.load %arg7[%c0_150, %c0_151, %c0_152] : memref<1x1x128xf32, #tpu.memory_space<vmem>>, vector<1x1x128xf32>
    tpu.vector_store %arg7[%c0_150, %c0_151, %c0_152], %125 {strides = array<i32>} : memref<1x1x128xf32, #tpu.memory_space<vmem>>, vector<1x1x128xf32>,
    return
  }
  func.func @transform_0(%arg0: i32) -> (i32, i32, i32, i32) {
    %c0_i32 = arith.constant 0 : i32
    %c0_i32_0 = arith.constant 0 : i32
    %c0_i32_1 = arith.constant 0 : i32
    %c0_i32_2 = arith.constant 0 : i32
    return %arg0, %c0_i32, %c0_i32_0, %c0_i32_1 : i32, i32, i32, i32
  }
  func.func @transform_1(%arg0: i32) -> (i32, i32) {
    %c0_i32 = arith.constant 0 : i32
    %c0_i32_0 = arith.constant 0 : i32
    %c0_i32_1 = arith.constant 0 : i32
    return %c0_i32, %c0_i32_0 : i32, i32
  }
  func.func @transform_2(%arg0: i32) -> (i32, i32) {
    %c0_i32 = arith.constant 0 : i32
    %c0_i32_0 = arith.constant 0 : i32
    %c0_i32_1 = arith.constant 0 : i32
    return %c0_i32, %c0_i32_0 : i32, i32
  }
  func.func @transform_3(%arg0: i32) -> (i32, i32, i32, i32) {
    %c0_i32 = arith.constant 0 : i32
    %c0_i32_0 = arith.constant 0 : i32
    %c0_i32_1 = arith.constant 0 : i32
    %c0_i32_2 = arith.constant 0 : i32
    %c0_i32_3 = arith.constant 0 : i32
    return %c0_i32, %c0_i32_0, %c0_i32_1, %c0_i32_2 : i32, i32, i32, i32
  }
  func.func @transform_4(%arg0: i32) -> (i32, i32) {
    %c0_i32 = arith.constant 0 : i32
    %c0_i32_0 = arith.constant 0 : i32
    %c0_i32_1 = arith.constant 0 : i32
    return %c0_i32, %c0_i32_0 : i32, i32
  }
  func.func @transform_5(%arg0: i32) -> (i32, i32, i32, i32) {
    %c0_i32 = arith.constant 0 : i32
    %c0_i32_0 = arith.constant 0 : i32
    %c0_i32_1 = arith.constant 0 : i32
    %c0_i32_2 = arith.constant 0 : i32
    return %arg0, %c0_i32, %c0_i32_0, %c0_i32_1 : i32, i32, i32, i32
  }
  func.func @transform_6(%arg0: i32) -> (i32, i32, i32) {
    %c0_i32 = arith.constant 0 : i32
    %c0_i32_0 = arith.constant 0 : i32
    %c0_i32_1 = arith.constant 0 : i32
    return %arg0, %c0_i32, %c0_i32_0 : i32, i32, i32
  }
}

</mosaic_0001>

<llo_original>
// kernel: tpu_custom_call.1
$region0: #{tpu_custom_call.1}
  #allocation0 [shape = 'u32[]', space=smem, size = 0x4, offset = 0x4, fixed_abs, tag = 'smem constant byte address 0x4 - core index']
  #allocation1 [shape = 'u32[144,128]{1,0:T(1,128)}', space=vmem, size = 0x12000, scoped, tag = 'internal scratch']
  #allocation2 [shape = 'f32[10,16,32]{2,1,0:T(8,128)}', space=vmem, size = 0x14000, scoped, tag = 'scratch operand']
  %s0 = inlined_call_operand.hbm [shape: f32[2,8,8,64], index: 0, kind: input, shape index: {}]
  %s1 = inlined_call_operand.vmem [shape: f32[64,32], index: 1, kind: input, shape index: {}]
  %s2 = inlined_call_operand.vmem [shape: f32[1,32], index: 2, kind: input, shape index: {}]
  %s3 = inlined_call_operand.hbm [shape: f32[4,4,32,128], index: 3, kind: input, shape index: {}]
  %s4 = inlined_call_operand.vmem [shape: f32[1,128], index: 4, kind: input, shape index: {}]
  %s5 = inlined_call_operand.hbm [shape: f32[2,7,8,128], index: 5, kind: output, shape index: {0}]
  %s6 = inlined_call_operand.hbm [shape: f32[2,1,128], index: 6, kind: output, shape index: {1}]
  %7 = xla_tuple %s5, %s6
  %s8 = sld [smem:[#allocation0]]
  $region69: #{tpu_custom_call.1} parent=0
    _
  %s10 = ssub.s32 1, %s8
  %s11 = scalar_select 0, %s10, %s8
  $region1: #{tpu_custom_call.1} parent=0
    #allocation3 [shape = 'u8[65536]{0}', space=vmem, size = 0x10000, scoped, tag = 'input window, operand 0']
    #allocation4 [shape = 's32[2]{0}', space=sflag, size = 0x8, scoped, tag = 'scoped memory for tpu_custom_call.1']
    #allocation5 [shape = 's32[2]{0}', space=sflag, size = 0x8, scoped, tag = 'scoped memory for tpu_custom_call.1']
    #allocation6 [shape = 'u8[262144]{0}', space=vmem, size = 0x40000, scoped, tag = 'input window, operand 3, single buffered']
    #allocation7 [shape = 's32[1]{0}', space=sflag, size = 0x4, scoped, tag = 'scoped memory for tpu_custom_call.1']
    #allocation8 [shape = 'u8[57344]{0}', space=vmem, size = 0xe000, scoped, tag = 'output window, operand 0']
    #allocation9 [shape = 'u8[1024]{0}', space=vmem, size = 0x400, scoped, tag = 'output window, operand 1']
    #allocation10 [shape = 's32[2]{0}', space=sflag, size = 0x8, scoped, tag = 'scoped memory for tpu_custom_call.1']
    %12 = vsyncpa [#allocation4], 0
    %s13 = scalar_lea.sflag [#allocation4], 1
    %14 = vsyncpa %s13, 0
    %15 = vsyncpa [#allocation7], 0
    %16 = vsyncpa [#allocation5], 0
    %s17 = scalar_lea.sflag [#allocation5], 1
    %18 = vsyncpa %s17, 0
    %19 = vsyncpa [#allocation10], 0
    %s20 = scalar_lea.sflag [#allocation10], 1
    %21 = vsyncpa %s20, 0
    loop: start=0, step=1, limit=4
    $region2: #{tpu_custom_call.1} parent=1 // loop_pre_header
      _
    $region3: #{tpu_custom_call.1} parent=1 // loop_header
      %s23 = sphi 0, %s27
      %p24 = scmp.ge.s32.totalorder %s23, 4
      %s33 = sphi 0, %s35
      %s36 = sphi 0, %s33
      %s37 = sphi 0, %s36
      %s53 = sphi 0, %s37
      %s57 = sphi 0, %s57
      %s59 = sphi 0, %s57
      %s60 = sphi 0, %s59
      %s74 = sphi 0, %s60
      %s78 = sphi 0, %s78
      %s80 = sphi 0, %s78
      %s81 = sphi 0, %s80
      %s95 = sphi 0, %s81
      %s99 = sphi 0, %s99
      %s101 = sphi 0, %s99
      %s102 = sphi 0, %s101
      %s116 = sphi 0, %s102
      %s120 = sphi 0, %s120
      %s122 = sphi 0, %s120
      %s123 = sphi 0, %s122
      %s137 = sphi 0, %s123
      %s143 = sphi 0, %s145
      %s146 = sphi 0, %s143
      %s147 = sphi 0, %s146
      %s163 = sphi 0, %s147
      %s169 = sphi 0, %s171
      %s172 = sphi 0, %s169
      %s173 = sphi 0, %s172
      %s189 = sphi 0, %s173
    $region4: #{tpu_custom_call.1} parent=1 // loop_header_branch
      %26 = sbr.rel (%p24) target = $region8
    $region5: #{tpu_custom_call.1} parent=1 // loop_body
      %s28 = ssub.s32 %s23, 1
      %s29 = ssub.s32 %s23, 2
      %s30 = sadd.s32 %s23, 1
      %s31 = ssub.s32 %s23, %s30
      %p32 = scmp.eq.s32.totalorder %s31, 0
      %s34 = sadd.s32 %s33, 1
      %s35 = scalar_select %p32, %s33, %s34
      %p38 = pneg %p32
      %p39 = scmp.eq.s32.totalorder %s23, 1
      %p40 = por %p38, %p39
      %p41 = scmp.ne.s32.totalorder %s33, %s36
      %p42 = scmp.eq.s32.totalorder %s23, 0
      %p43 = por %p41, %p42
      %p44 = scmp.ne.s32.totalorder %s33, %s36
      %p45 = scmp.eq.s32.totalorder %s28, 1
      %p46 = por %p44, %p45
      %p47 = scmp.ne.s32.totalorder %s36, %s37
      %p48 = scmp.eq.s32.totalorder %s28, 0
      %p49 = por %p47, %p48
      %p50 = scmp.ne.s32.totalorder %s36, %s37
      %p51 = scmp.eq.s32.totalorder %s29, 1
      %p52 = por %p50, %p51
      %p54 = scmp.ne.s32.totalorder %s37, %s53
      %p55 = scmp.eq.s32.totalorder %s29, 0
      %p56 = por %p54, %p55
      %s58 = sadd.s32 %s57, 1
      %p61 = scmp.eq.s32.totalorder %s23, 1
      %p62 = scmp.ne.s32.totalorder %s57, %s59
      %p63 = scmp.eq.s32.totalorder %s23, 0
      %p64 = por %p62, %p63
      %p65 = scmp.ne.s32.totalorder %s57, %s59
      %p66 = scmp.eq.s32.totalorder %s28, 1
      %p67 = por %p65, %p66
      %p68 = scmp.ne.s32.totalorder %s59, %s60
      %p69 = scmp.eq.s32.totalorder %s28, 0
      %p70 = por %p68, %p69
      %p71 = scmp.ne.s32.totalorder %s59, %s60
      %p72 = scmp.eq.s32.totalorder %s29, 1
      %p73 = por %p71, %p72
      %p75 = scmp.ne.s32.totalorder %s60, %s74
      %p76 = scmp.eq.s32.totalorder %s29, 0
      %p77 = por %p75, %p76
      %s79 = sadd.s32 %s78, 1
      %p82 = scmp.eq.s32.totalorder %s23, 1
      %p83 = scmp.ne.s32.totalorder %s78, %s80
      %p84 = scmp.eq.s32.totalorder %s23, 0
      %p85 = por %p83, %p84
      %p86 = scmp.ne.s32.totalorder %s78, %s80
      %p87 = scmp.eq.s32.totalorder %s28, 1
      %p88 = por %p86, %p87
      %p89 = scmp.ne.s32.totalorder %s80, %s81
      %p90 = scmp.eq.s32.totalorder %s28, 0
      %p91 = por %p89, %p90
      %p92 = scmp.ne.s32.totalorder %s80, %s81
      %p93 = scmp.eq.s32.totalorder %s29, 1
      %p94 = por %p92, %p93
      %p96 = scmp.ne.s32.totalorder %s81, %s95
      %p97 = scmp.eq.s32.totalorder %s29, 0
      %p98 = por %p96, %p97
      %s100 = sadd.s32 %s99, 1
      %p103 = scmp.eq.s32.totalorder %s23, 1
      %p104 = scmp.ne.s32.totalorder %s99, %s101
      %p105 = scmp.eq.s32.totalorder %s23, 0
      %p106 = por %p104, %p105
      %p107 = scmp.ne.s32.totalorder %s99, %s101
      %p108 = scmp.eq.s32.totalorder %s28, 1
      %p109 = por %p107, %p108
      %p110 = scmp.ne.s32.totalorder %s101, %s102
      %p111 = scmp.eq.s32.totalorder %s28, 0
      %p112 = por %p110, %p111
      %p113 = scmp.ne.s32.totalorder %s101, %s102
      %p114 = scmp.eq.s32.totalorder %s29, 1
      %p115 = por %p113, %p114
      %p117 = scmp.ne.s32.totalorder %s102, %s116
      %p118 = scmp.eq.s32.totalorder %s29, 0
      %p119 = por %p117, %p118
      %s121 = sadd.s32 %s120, 1
      %p124 = scmp.eq.s32.totalorder %s23, 1
      %p125 = scmp.ne.s32.totalorder %s120, %s122
      %p126 = scmp.eq.s32.totalorder %s23, 0
      %p127 = por %p125, %p126
      %p128 = scmp.ne.s32.totalorder %s120, %s122
      %p129 = scmp.eq.s32.totalorder %s28, 1
      %p130 = por %p128, %p129
      %p131 = scmp.ne.s32.totalorder %s122, %s123
      %p132 = scmp.eq.s32.totalorder %s28, 0
      %p133 = por %p131, %p132
      %p134 = scmp.ne.s32.totalorder %s122, %s123
      %p135 = scmp.eq.s32.totalorder %s29, 1
      %p136 = por %p134, %p135
      %p138 = scmp.ne.s32.totalorder %s123, %s137
      %p139 = scmp.eq.s32.totalorder %s29, 0
      %p140 = por %p138, %p139
      %s141 = ssub.s32 %s23, %s30
      %p142 = scmp.eq.s32.totalorder %s141, 0
      %s144 = sadd.s32 %s143, 1
      %s145 = scalar_select %p142, %s143, %s144
      %p148 = pneg %p142
      %p149 = scmp.eq.s32.totalorder %s23, 1
      %p150 = por %p148, %p149
      %p151 = scmp.ne.s32.totalorder %s143, %s146
      %p152 = scmp.eq.s32.totalorder %s23, 0
      %p153 = por %p151, %p152
      %p154 = scmp.ne.s32.totalorder %s143, %s146
      %p155 = scmp.eq.s32.totalorder %s28, 1
      %p156 = por %p154, %p155
      %p157 = scmp.ne.s32.totalorder %s146, %s147
      %p158 = scmp.eq.s32.totalorder %s28, 0
      %p159 = por %p157, %p158
      %p160 = scmp.ne.s32.totalorder %s146, %s147
      %p161 = scmp.eq.s32.totalorder %s29, 1
      %p162 = por %p160, %p161
      %p164 = scmp.ne.s32.totalorder %s147, %s163
      %p165 = scmp.eq.s32.totalorder %s29, 0
      %p166 = por %p164, %p165
      %s167 = ssub.s32 %s23, %s30
      %p168 = scmp.eq.s32.totalorder %s167, 0
      %s170 = sadd.s32 %s169, 1
      %s171 = scalar_select %p168, %s169, %s170
      %p174 = pneg %p168
      %p175 = scmp.eq.s32.totalorder %s23, 1
      %p176 = por %p174, %p175
      %p177 = scmp.ne.s32.totalorder %s169, %s172
      %p178 = scmp.eq.s32.totalorder %s23, 0
      %p179 = por %p177, %p178
      %p180 = scmp.ne.s32.totalorder %s169, %s172
      %p181 = scmp.eq.s32.totalorder %s28, 1
      %p182 = por %p180, %p181
      %p183 = scmp.ne.s32.totalorder %s172, %s173
      %p184 = scmp.eq.s32.totalorder %s28, 0
      %p185 = por %p183, %p184
      %p186 = scmp.ne.s32.totalorder %s172, %s173
      %p187 = scmp.eq.s32.totalorder %s29, 1
      %p188 = por %p186, %p187
      %p190 = scmp.ne.s32.totalorder %s173, %s189
      %p191 = scmp.eq.s32.totalorder %s29, 0
      %p192 = por %p190, %p191
      %p193 = scmp.le.s32.totalorder 1, %s23
      %p194 = scmp.lt.s32.totalorder %s23, 3
      %p195 = pnand %p193, %p194
      %p196 = pneg %p195
      // Predicated region
      $region9: #{tpu_custom_call.1} parent=5 // pred_check
        _
      $region10: #{tpu_custom_call.1} parent=5 // pred_check_branch
        %198 = sbr.rel (%p195) target = $region12
      $region11: #{tpu_custom_call.1} parent=5 // pred_region
        %s199 = ssub.s32 %s23, 1
        // Predicated region
        $region13: #{tpu_custom_call.1} parent=11 // pred_check
          %p200 = pneg %p70
        $region14: #{tpu_custom_call.1} parent=11 // pred_check_branch
          %202 = sbr.rel (%p200) target = $region16
        $region15: #{tpu_custom_call.1} parent=11 // pred_region
          _
        $region16: #{tpu_custom_call.1} parent=11 // pred_fallthru
          _
        // Predicated region
        $region17: #{tpu_custom_call.1} parent=11 // pred_check
          %p203 = pneg %p91
        $region18: #{tpu_custom_call.1} parent=11 // pred_check_branch
          %205 = sbr.rel (%p203) target = $region20
        $region19: #{tpu_custom_call.1} parent=11 // pred_region
          _
        $region20: #{tpu_custom_call.1} parent=11 // pred_fallthru
          _
        // Predicated region
        $region21: #{tpu_custom_call.1} parent=11 // pred_check
          %p206 = pneg %p112
        $region22: #{tpu_custom_call.1} parent=11 // pred_check_branch
          %208 = sbr.rel (%p206) target = $region24
        $region23: #{tpu_custom_call.1} parent=11 // pred_region
          %s210 = ssub.s32 8192, 8192
          %211 = vsyncadd [#allocation7], %s210
          %s212 = sshll.u32 [#allocation6], 4
          %s213 = int_to_ptr.vmem [resolvable:$true] %s212
          %218 = dma.hbm_to_vmem [thread:$0]  %s3, 8192, %s213, [#allocation7], 128, 128, 8
        $region24: #{tpu_custom_call.1} parent=11 // pred_fallthru
          _
        // Predicated region
        $region25: #{tpu_custom_call.1} parent=11 // pred_check
          %p219 = pneg %p133
        $region26: #{tpu_custom_call.1} parent=11 // pred_check_branch
          %221 = sbr.rel (%p219) target = $region28
        $region27: #{tpu_custom_call.1} parent=11 // pred_region
          _
        $region28: #{tpu_custom_call.1} parent=11 // pred_fallthru
          _
      $region12: #{tpu_custom_call.1} parent=5 // pred_fallthru
        _
      %p222 = scmp.lt.s32.totalorder %s23, 2
      // Predicated region
      $region29: #{tpu_custom_call.1} parent=5 // pred_check
        %p223 = pneg %p222
      $region30: #{tpu_custom_call.1} parent=5 // pred_check_branch
        %225 = sbr.rel (%p223) target = $region32
      $region31: #{tpu_custom_call.1} parent=5 // pred_region
        // Predicated region
        $region33: #{tpu_custom_call.1} parent=31 // pred_check
          %p226 = pneg %p43
        $region34: #{tpu_custom_call.1} parent=31 // pred_check_branch
          %228 = sbr.rel (%p226) target = $region36
        $region35: #{tpu_custom_call.1} parent=31 // pred_region
          %s229 = sand.u32 %s33, 1
          %s230 = scalar_lea.sflag [#allocation4], %s229
          %s231 = sand.u32 %s33, 1
          %s232 = smul.addr %s231, 64
          %s233 = scalar_lea.vmem [#allocation3], %s232
          %s235 = ssub.s32 1024, 1024
          %236 = vsyncadd %s230, %s235
          %s237 = smul.addr %s23, 8
          %s238 = smul.addr %s237, 128
          %s239 = scalar_lea.hbm %s0, %s238
          %s240 = sshll.u32 %s233, 4
          %s241 = int_to_ptr.vmem [resolvable:$true] %s240
          %246 = dma.hbm_to_vmem [thread:$0]  %s239, 1024, %s241, %s230, 128, 128, 8
        $region36: #{tpu_custom_call.1} parent=31 // pred_fallthru
          _
      $region32: #{tpu_custom_call.1} parent=5 // pred_fallthru
        _
      %p247 = scmp.le.s32.totalorder 1, %s23
      %p248 = scmp.lt.s32.totalorder %s23, 3
      %p249 = pnand %p247, %p248
      %p250 = pneg %p249
      // Predicated region
      $region37: #{tpu_custom_call.1} parent=5 // pred_check
        _
      $region38: #{tpu_custom_call.1} parent=5 // pred_check_branch
        %252 = sbr.rel (%p249) target = $region40
      $region39: #{tpu_custom_call.1} parent=5 // pred_region
        %s253 = ssub.s32 %s23, 1
        %s254 = sand.u32 %s36, 1
        %s255 = scalar_lea.sflag [#allocation4], %s254
        %s256 = sand.u32 %s36, 1
        %s257 = smul.addr %s256, 64
        %s258 = scalar_lea.vmem [#allocation3], %s257
        // Predicated region
        $region41: #{tpu_custom_call.1} parent=39 // pred_check
          %p259 = pneg %p49
        $region42: #{tpu_custom_call.1} parent=39 // pred_check_branch
          %261 = sbr.rel (%p259) target = $region44
        $region43: #{tpu_custom_call.1} parent=39 // pred_region
          %262 = dma.done %s255, 1024
        $region44: #{tpu_custom_call.1} parent=39 // pred_fallthru
          _
        // Predicated region
        $region45: #{tpu_custom_call.1} parent=39 // pred_check
          %p263 = pneg %p112
        $region46: #{tpu_custom_call.1} parent=39 // pred_check_branch
          %265 = sbr.rel (%p263) target = $region48
        $region47: #{tpu_custom_call.1} parent=39 // pred_region
          %266 = dma.done [#allocation7], 8192
        $region48: #{tpu_custom_call.1} parent=39 // pred_fallthru
          _
        %s267 = sand.u32 %s36, 1
        %s268 = scalar_lea.sflag [#allocation4], %s267
        %s269 = sand.u32 %s36, 1
        %s270 = smul.addr %s269, 64
        %s271 = scalar_lea.vmem [#allocation3], %s270
        %p272 = pneg %p49
        %p273 = pneg %p46
        %p274 = pneg %p70
        %p275 = pneg %p67
        %p276 = pneg %p91
        %p277 = pneg %p88
        %p278 = pneg %p112
        %p279 = pneg %p109
        %p280 = pneg %p133
        %p281 = pneg %p130
        %p282 = pneg %p159
        %p283 = pneg %p156
        %s284 = sand.u32 %s146, 1
        %s285 = scalar_lea.sflag [#allocation5], %s284
        %s286 = sand.u32 %s146, 1
        %s287 = smul.addr %s286, 56
        %s288 = scalar_lea.vmem [#allocation8], %s287
        %p289 = pneg %p185
        %p290 = pneg %p182
        %s291 = sand.u32 %s172, 1
        %s292 = scalar_lea.sflag [#allocation10], %s291
        %s293 = sand.u32 %s172, 1
        %s294 = scalar_lea.vmem [#allocation9], %s293
        %v295 = vld [vmem:[%s258] sm:$0xff]
        %v296 = vld [vmem:[%s258 + $0x8] sm:$0xff]
        %v297 = vld [vmem:[%s258 + $0x10] sm:$0xff]
        %v298 = vld [vmem:[%s258 + $0x18] sm:$0xff]
        %v299 = vld [vmem:[%s258 + $0x20] sm:$0xff]
        %v300 = vld [vmem:[%s258 + $0x28] sm:$0xff]
        %v301 = vld [vmem:[%s258 + $0x30] sm:$0xff]
        %v302 = vld [vmem:[%s258 + $0x38] sm:$0xff]
        %v303 = vld [vmem:[%s1] sm:$0xff]
        %v304 = vld [vmem:[%s1 + $0x8] sm:$0xff]
        %v305 = vld [vmem:[%s1 + $0x10] sm:$0xff]
        %v306 = vld [vmem:[%s1 + $0x18] sm:$0xff]
        %v307 = vld [vmem:[%s1 + $0x20] sm:$0xff]
        %v308 = vld [vmem:[%s1 + $0x28] sm:$0xff]
        %v309 = vld [vmem:[%s1 + $0x30] sm:$0xff]
        %v310 = vld [vmem:[%s1 + $0x38] sm:$0xff]
        %v311 = vld [vmem:[%s2] sm:$0x1]
        %v313 = vlaneseq
        %v314 = vshrl.u32 %v313, 7
        %v315 = vsub.s32 0, %v314
        %v316 = vrot.slane %v311, %v315
        %vm318 = vcmask 523264
        %v320 = vsel %vm318, %v295, 0
        %v323 = vsel %vm318, %v296, 0
        %v326 = vsel %vm318, %v297, 0
        %v329 = vsel %vm318, %v298, 0
        %v332 = vsel %vm318, %v299, 0
        %v335 = vsel %vm318, %v300, 0
        %v338 = vsel %vm318, %v301, 0
        %v341 = vsel %vm318, %v302, 0
        %343 = vmatprep.subr.mxu0 0.0
        %344 = vmatpush1.msra.mxu0 %v303
        %345 = vmatprep.subr.mxu0 0.0
        %346 = vmatpush1.msra.mxu0 %v304
        %347 = vmatprep.subr.mxu0 0.0
        %348 = vmatpush1.msra.mxu0 %v305
        %349 = vmatprep.subr.mxu0 0.0
        %350 = vmatpush1.msra.mxu0 %v306
        %351 = vmatprep.subr.mxu0 0.0
        %352 = vmatpush1.msra.mxu0 %v307
        %353 = vmatprep.subr.mxu0 0.0
        %354 = vmatpush1.msra.mxu0 %v308
        %355 = vmatprep.subr.mxu0 0.0
        %356 = vmatpush1.msra.mxu0 %v309
        %357 = vmatprep.subr.mxu0 0.0
        %358 = vmatpush1.msra.mxu0 %v310
        %359 = vmatprep.subr.mxu0 0.0
        %360 = vmatpush1.msra.mxu0 0.0
        %361 = vmatprep.subr.mxu0 0.0
        %362 = vmatpush1.msra.mxu0 0.0
        %363 = vmatprep.subr.mxu0 0.0
        %364 = vmatpush1.msra.mxu0 0.0
        %365 = vmatprep.subr.mxu0 0.0
        %366 = vmatpush1.msra.mxu0 0.0
        %367 = vmatprep.subr.mxu0 0.0
        %368 = vmatpush1.msra.mxu0 0.0
        %369 = vmatprep.subr.mxu0 0.0
        %370 = vmatpush1.msra.mxu0 0.0
        %371 = vmatprep.subr.mxu0 0.0
        %372 = vmatpush1.msra.mxu0 0.0
        %373 = vmatprep.subr.mxu0 0.0
        %374 = vmatpush1.msra.mxu0 0.0
        %375 = vmatprep.subr.mxu0 0.0
        %376 = vmatpush1.msra.mxu0 0.0
        %377 = vmatprep.subr.mxu0 0.0
        %378 = vmatpush1.msra.mxu0 0.0
        %379 = vmatprep.subr.mxu0 0.0
        %380 = vmatpush1.msra.mxu0 0.0
        %381 = vmatprep.subr.mxu0 0.0
        %382 = vmatpush1.msra.mxu0 0.0
        %383 = vmatprep.subr.mxu0 0.0
        %384 = vmatpush1.msra.mxu0 0.0
        %385 = vmatprep.subr.mxu0 0.0
        %386 = vmatpush1.msra.mxu0 0.0
        %387 = vmatprep.subr.mxu0 0.0
        %388 = vmatpush1.msra.mxu0 0.0
        %389 = vmatprep.subr.mxu0 0.0
        %390 = vmatpush1.msra.mxu0 0.0
        %391 = vmatprep.subr.mxu0 0.0
        %392 = vmatpush1.msra.mxu0 0.0
        %393 = vmatprep.subr.mxu0 0.0
        %394 = vmatpush1.msra.mxu0 0.0
        %395 = vmatprep.subr.mxu0 0.0
        %396 = vmatpush1.msra.mxu0 0.0
        %397 = vmatprep.subr.mxu0 0.0
        %398 = vmatpush1.msra.mxu0 0.0
        %399 = vmatprep.subr.mxu0 0.0
        %400 = vmatpush1.msra.mxu0 0.0
        %401 = vmatprep.subr.mxu0 0.0
        %402 = vmatpush1.msra.mxu0 0.0
        %403 = vmatprep.subr.mxu0 0.0
        %404 = vmatpush1.msra.mxu0 0.0
        %405 = vmatprep.subr.mxu0 0.0
        %406 = vmatpush1.msra.mxu0 0.0
        %407 = vmatprep.mubr.f32.mxu0 0.0
        %408 = vmatmul.mubr.f32.gmra.mrb[0].mxu0 %v320
        %v409 = vpop.f32.mrb[0].mxu0
        %v410 = vadd.f32 %v316, %v409
        %v411 = vpop.f32.mrb[0].mxu0
        %412 = vmatprep.mubr.f32.mxu0 0.0
        %413 = vmatmul.mubr.f32.gmra.mrb[0].mxu0 %v323
        %v414 = vpop.f32.mrb[0].mxu0
        %v415 = vadd.f32 %v316, %v414
        %v416 = vpop.f32.mrb[0].mxu0
        %417 = vmatprep.mubr.f32.mxu0 0.0
        %418 = vmatmul.mubr.f32.gmra.mrb[0].mxu0 %v326
        %v419 = vpop.f32.mrb[0].mxu0
        %v420 = vadd.f32 %v316, %v419
        %v421 = vpop.f32.mrb[0].mxu0
        %422 = vmatprep.mubr.f32.mxu0 0.0
        %423 = vmatmul.mubr.f32.gmra.mrb[0].mxu0 %v329
        %v424 = vpop.f32.mrb[0].mxu0
        %v425 = vadd.f32 %v316, %v424
        %v426 = vpop.f32.mrb[0].mxu0
        %427 = vmatprep.mubr.f32.mxu0 0.0
        %428 = vmatmul.mubr.f32.gmra.mrb[0].mxu0 %v332
        %v429 = vpop.f32.mrb[0].mxu0
        %v430 = vadd.f32 %v316, %v429
        %v431 = vpop.f32.mrb[0].mxu0
        %432 = vmatprep.mubr.f32.mxu0 0.0
        %433 = vmatmul.mubr.f32.gmra.mrb[0].mxu0 %v335
        %v434 = vpop.f32.mrb[0].mxu0
        %v435 = vadd.f32 %v316, %v434
        %v436 = vpop.f32.mrb[0].mxu0
        %437 = vmatprep.mubr.f32.mxu0 0.0
        %438 = vmatmul.mubr.f32.gmra.mrb[0].mxu0 %v338
        %v439 = vpop.f32.mrb[0].mxu0
        %v440 = vadd.f32 %v316, %v439
        %v441 = vpop.f32.mrb[0].mxu0
        %442 = vmatprep.mubr.f32.mxu0 0.0
        %443 = vmatmul.mubr.f32.gmra.mrb[0].mxu0 %v341
        %v444 = vpop.f32.mrb[0].mxu0
        %v445 = vadd.f32 %v316, %v444
        %v446 = vpop.f32.mrb[0].mxu0
        %447 = vdwg.mxu0
        %vm448 = vcmp.ge.f32.partialorder %v410, 0.0
        %vm449 = vcmp.ge.f32.partialorder %v415, 0.0
        %vm450 = vcmp.ge.f32.partialorder %v420, 0.0
        %vm451 = vcmp.ge.f32.partialorder %v425, 0.0
        %vm452 = vcmp.ge.f32.partialorder %v430, 0.0
        %vm453 = vcmp.ge.f32.partialorder %v435, 0.0
        %vm454 = vcmp.ge.f32.partialorder %v440, 0.0
        %vm455 = vcmp.ge.f32.partialorder %v445, 0.0
        %v456 = vmul.f32 %v410, 0.2
        %v457 = vmul.f32 %v415, 0.2
        %v458 = vmul.f32 %v420, 0.2
        %v459 = vmul.f32 %v425, 0.2
        %v460 = vmul.f32 %v430, 0.2
        %v461 = vmul.f32 %v435, 0.2
        %v462 = vmul.f32 %v440, 0.2
        %v463 = vmul.f32 %v445, 0.2
        %v464 = vsel %vm448, %v410, %v456
        %v465 = vsel %vm449, %v415, %v457
        %v466 = vsel %vm450, %v420, %v458
        %v467 = vsel %vm451, %v425, %v459
        %v468 = vsel %vm452, %v430, %v460
        %v469 = vsel %vm453, %v435, %v461
        %v470 = vsel %vm454, %v440, %v462
        %v471 = vsel %vm455, %v445, %v463
        %vm472 = vcmask 261120
        %473 = vst.msk [vmem:[#allocation2] sm:$0xff] %vm472, 0.0
        %474 = vst.msk [vmem:[#allocation2 + $0x8] sm:$0xff] %vm472, 0.0
        %475 = vst.msk [vmem:[#allocation2 + $0x10] sm:$0xff] %vm472, 0.0
        %476 = vst.msk [vmem:[#allocation2 + $0x18] sm:$0xff] %vm472, 0.0
        %477 = vst.msk [vmem:[#allocation2 + $0x20] sm:$0xff] %vm472, 0.0
        %478 = vst.msk [vmem:[#allocation2 + $0x28] sm:$0xff] %vm472, 0.0
        %479 = vst.msk [vmem:[#allocation2 + $0x30] sm:$0xff] %vm472, 0.0
        %480 = vst.msk [vmem:[#allocation2 + $0x38] sm:$0xff] %vm472, 0.0
        %481 = vst.msk [vmem:[#allocation2 + $0x40] sm:$0xff] %vm472, 0.0
        %482 = vst.msk [vmem:[#allocation2 + $0x48] sm:$0xff] %vm472, 0.0
        %483 = vst.msk [vmem:[#allocation2 + $0x50] sm:$0xff] %vm472, 0.0
        %484 = vst.msk [vmem:[#allocation2 + $0x58] sm:$0xff] %vm472, 0.0
        %485 = vst.msk [vmem:[#allocation2 + $0x60] sm:$0xff] %vm472, 0.0
        %486 = vst.msk [vmem:[#allocation2 + $0x68] sm:$0xff] %vm472, 0.0
        %487 = vst.msk [vmem:[#allocation2 + $0x70] sm:$0xff] %vm472, 0.0
        %488 = vst.msk [vmem:[#allocation2 + $0x78] sm:$0xff] %vm472, 0.0
        %489 = vst.msk [vmem:[#allocation2 + $0x80] sm:$0xff] %vm472, 0.0
        %490 = vst.msk [vmem:[#allocation2 + $0x88] sm:$0xff] %vm472, 0.0
        %491 = vst.msk [vmem:[#allocation2 + $0x90] sm:$0xff] %vm472, 0.0
        %492 = vst.msk [vmem:[#allocation2 + $0x98] sm:$0xff] %vm472, 0.0
        %s493 = scalar_lea.vmem [#allocation2], 16
        %494 = vst.msk [vmem:[%s493 + $0x1] sm:$0xff] %vm472, %v464
        %495 = vst.msk [vmem:[%s493 + $0x11] sm:$0xff] %vm472, %v465
        %496 = vst.msk [vmem:[%s493 + $0x21] sm:$0xff] %vm472, %v466
        %497 = vst.msk [vmem:[%s493 + $0x31] sm:$0xff] %vm472, %v467
        %498 = vst.msk [vmem:[%s493 + $0x41] sm:$0xff] %vm472, %v468
        %499 = vst.msk [vmem:[%s493 + $0x51] sm:$0xff] %vm472, %v469
        %500 = vst.msk [vmem:[%s493 + $0x61] sm:$0xff] %vm472, %v470
        %501 = vst.msk [vmem:[%s493 + $0x71] sm:$0xff] %vm472, %v471
        %v502 = vld [vmem:[#allocation2] sm:$0xff]
        %v503 = vld [vmem:[#allocation2 + $0x10] sm:$0xff]
        %v504 = vld [vmem:[#allocation2 + $0x20] sm:$0xff]
        %v505 = vld [vmem:[#allocation2 + $0x30] sm:$0xff]
        %v506 = vld [vmem:[#allocation2 + $0x40] sm:$0xff]
        %v507 = vld [vmem:[#allocation2 + $0x50] sm:$0xff]
        %v508 = vld [vmem:[#allocation2 + $0x60] sm:$0xff]
        %v509 = vld [vmem:[#allocation6] sm:$0xff]
        %v510 = vld [vmem:[#allocation6 + $0x8] sm:$0xff]
        %v511 = vld [vmem:[#allocation6 + $0x10] sm:$0xff]
        %v512 = vld [vmem:[#allocation6 + $0x18] sm:$0xff]
        %v513 = vld [vmem:[#allocation2 + $0x1] sm:$0xff]
        %v514 = vld [vmem:[#allocation2 + $0x11] sm:$0xff]
        %v515 = vld [vmem:[#allocation2 + $0x21] sm:$0xff]
        %v516 = vld [vmem:[#allocation2 + $0x31] sm:$0xff]
        %v517 = vld [vmem:[#allocation2 + $0x41] sm:$0xff]
        %v518 = vld [vmem:[#allocation2 + $0x51] sm:$0xff]
        %v519 = vld [vmem:[#allocation2 + $0x61] sm:$0xff]
        %s520 = scalar_lea.vmem [#allocation6], 32
        %v521 = vld [vmem:[%s520] sm:$0xff]
        %v522 = vld [vmem:[%s520 + $0x8] sm:$0xff]
        %v523 = vld [vmem:[%s520 + $0x10] sm:$0xff]
        %v524 = vld [vmem:[%s520 + $0x18] sm:$0xff]
        %v526 = vsel %vm472, %v513, 0
        %v529 = vsel %vm472, %v514, 0
        %v532 = vsel %vm472, %v515, 0
        %v535 = vsel %vm472, %v516, 0
        %v538 = vsel %vm472, %v517, 0
        %v541 = vsel %vm472, %v518, 0
        %v544 = vsel %vm472, %v519, 0
        %546 = vmatprep.subr.mxu0 0.0
        %547 = vmatpush1.msra.mxu0 %v521
        %548 = vmatprep.subr.mxu0 0.0
        %549 = vmatpush1.msra.mxu0 %v522
        %550 = vmatprep.subr.mxu0 0.0
        %551 = vmatpush1.msra.mxu0 %v523
        %552 = vmatprep.subr.mxu0 0.0
        %553 = vmatpush1.msra.mxu0 %v524
        %554 = vmatprep.subr.mxu0 0.0
        %555 = vmatpush1.msra.mxu0 0.0
        %556 = vmatprep.subr.mxu0 0.0
        %557 = vmatpush1.msra.mxu0 0.0
        %558 = vmatprep.subr.mxu0 0.0
        %559 = vmatpush1.msra.mxu0 0.0
        %560 = vmatprep.subr.mxu0 0.0
        %561 = vmatpush1.msra.mxu0 0.0
        %562 = vmatprep.subr.mxu0 0.0
        %563 = vmatpush1.msra.mxu0 0.0
        %564 = vmatprep.subr.mxu0 0.0
        %565 = vmatpush1.msra.mxu0 0.0
        %566 = vmatprep.subr.mxu0 0.0
        %567 = vmatpush1.msra.mxu0 0.0
        %568 = vmatprep.subr.mxu0 0.0
        %569 = vmatpush1.msra.mxu0 0.0
        %570 = vmatprep.subr.mxu0 0.0
        %571 = vmatpush1.msra.mxu0 0.0
        %572 = vmatprep.subr.mxu0 0.0
        %573 = vmatpush1.msra.mxu0 0.0
        %574 = vmatprep.subr.mxu0 0.0
        %575 = vmatpush1.msra.mxu0 0.0
        %576 = vmatprep.subr.mxu0 0.0
        %577 = vmatpush1.msra.mxu0 0.0
        %578 = vmatprep.subr.mxu0 0.0
        %579 = vmatpush1.msra.mxu0 0.0
        %580 = vmatprep.subr.mxu0 0.0
        %581 = vmatpush1.msra.mxu0 0.0
        %582 = vmatprep.subr.mxu0 0.0
        %583 = vmatpush1.msra.mxu0 0.0
        %584 = vmatprep.subr.mxu0 0.0
        %585 = vmatpush1.msra.mxu0 0.0
        %586 = vmatprep.subr.mxu0 0.0
        %587 = vmatpush1.msra.mxu0 0.0
        %588 = vmatprep.subr.mxu0 0.0
        %589 = vmatpush1.msra.mxu0 0.0
        %590 = vmatprep.subr.mxu0 0.0
        %591 = vmatpush1.msra.mxu0 0.0
        %592 = vmatprep.subr.mxu0 0.0
        %593 = vmatpush1.msra.mxu0 0.0
        %594 = vmatprep.subr.mxu0 0.0
        %595 = vmatpush1.msra.mxu0 0.0
        %596 = vmatprep.subr.mxu0 0.0
        %597 = vmatpush1.msra.mxu0 0.0
        %598 = vmatprep.subr.mxu0 0.0
        %599 = vmatpush1.msra.mxu0 0.0
        %600 = vmatprep.subr.mxu0 0.0
        %601 = vmatpush1.msra.mxu0 0.0
        %602 = vmatprep.subr.mxu0 0.0
        %603 = vmatpush1.msra.mxu0 0.0
        %604 = vmatprep.subr.mxu0 0.0
        %605 = vmatpush1.msra.mxu0 0.0
        %606 = vmatprep.subr.mxu0 0.0
        %607 = vmatpush1.msra.mxu0 0.0
        %608 = vmatprep.subr.mxu0 0.0
        %609 = vmatpush1.msra.mxu0 0.0
        %610 = vmatprep.mubr.f32.mxu0 0.0
        %611 = vmatmul.mubr.f32.gmra.mrb[0].mxu0 %v526
        %v612 = vpop.f32.mrb[0].mxu0
        %v613 = vadd.f32 0.0, %v612
        %v614 = vpop.f32.mrb[0].mxu0
        %615 = vmatprep.mubr.f32.mxu0 0.0
        %616 = vmatmul.mubr.f32.gmra.mrb[0].mxu0 %v529
        %v617 = vpop.f32.mrb[0].mxu0
        %v618 = vadd.f32 0.0, %v617
        %v619 = vpop.f32.mrb[0].mxu0
        %620 = vmatprep.mubr.f32.mxu0 0.0
        %621 = vmatmul.mubr.f32.gmra.mrb[0].mxu0 %v532
        %v622 = vpop.f32.mrb[0].mxu0
        %v623 = vadd.f32 0.0, %v622
        %v624 = vpop.f32.mrb[0].mxu0
        %625 = vmatprep.mubr.f32.mxu0 0.0
        %626 = vmatmul.mubr.f32.gmra.mrb[0].mxu0 %v535
        %v627 = vpop.f32.mrb[0].mxu0
        %v628 = vadd.f32 0.0, %v627
        %v629 = vpop.f32.mrb[0].mxu0
        %630 = vmatprep.mubr.f32.mxu0 0.0
        %631 = vmatmul.mubr.f32.gmra.mrb[0].mxu0 %v538
        %v632 = vpop.f32.mrb[0].mxu0
        %v633 = vadd.f32 0.0, %v632
        %v634 = vpop.f32.mrb[0].mxu0
        %635 = vmatprep.mubr.f32.mxu0 0.0
        %636 = vmatmul.mubr.f32.gmra.mrb[0].mxu0 %v541
        %v637 = vpop.f32.mrb[0].mxu0
        %v638 = vadd.f32 0.0, %v637
        %v639 = vpop.f32.mrb[0].mxu0
        %640 = vmatprep.mubr.f32.mxu0 0.0
        %641 = vmatmul.mubr.f32.gmra.mrb[0].mxu0 %v544
        %v642 = vpop.f32.mrb[0].mxu0
        %v643 = vadd.f32 0.0, %v642
        %v644 = vpop.f32.mrb[0].mxu0
        %645 = vdwg.mxu0
        %v647 = vsel %vm472, %v502, 0
        %v650 = vsel %vm472, %v503, 0
        %v653 = vsel %vm472, %v504, 0
        %v656 = vsel %vm472, %v505, 0
        %v659 = vsel %vm472, %v506, 0
        %v662 = vsel %vm472, %v507, 0
        %v665 = vsel %vm472, %v508, 0
        %667 = vmatprep.subr.mxu0 0.0
        %668 = vmatpush1.msra.mxu0 %v509
        %669 = vmatprep.subr.mxu0 0.0
        %670 = vmatpush1.msra.mxu0 %v510
        %671 = vmatprep.subr.mxu0 0.0
        %672 = vmatpush1.msra.mxu0 %v511
        %673 = vmatprep.subr.mxu0 0.0
        %674 = vmatpush1.msra.mxu0 %v512
        %675 = vmatprep.subr.mxu0 0.0
        %676 = vmatpush1.msra.mxu0 0.0
        %677 = vmatprep.subr.mxu0 0.0
        %678 = vmatpush1.msra.mxu0 0.0
        %679 = vmatprep.subr.mxu0 0.0
        %680 = vmatpush1.msra.mxu0 0.0
        %681 = vmatprep.subr.mxu0 0.0
        %682 = vmatpush1.msra.mxu0 0.0
        %683 = vmatprep.subr.mxu0 0.0
        %684 = vmatpush1.msra.mxu0 0.0
        %685 = vmatprep.subr.mxu0 0.0
        %686 = vmatpush1.msra.mxu0 0.0
        %687 = vmatprep.subr.mxu0 0.0
        %688 = vmatpush1.msra.mxu0 0.0
        %689 = vmatprep.subr.mxu0 0.0
        %690 = vmatpush1.msra.mxu0 0.0
        %691 = vmatprep.subr.mxu0 0.0
        %692 = vmatpush1.msra.mxu0 0.0
        %693 = vmatprep.subr.mxu0 0.0
        %694 = vmatpush1.msra.mxu0 0.0
        %695 = vmatprep.subr.mxu0 0.0
        %696 = vmatpush1.msra.mxu0 0.0
        %697 = vmatprep.subr.mxu0 0.0
        %698 = vmatpush1.msra.mxu0 0.0
        %699 = vmatprep.subr.mxu0 0.0
        %700 = vmatpush1.msra.mxu0 0.0
        %701 = vmatprep.subr.mxu0 0.0
        %702 = vmatpush1.msra.mxu0 0.0
        %703 = vmatprep.subr.mxu0 0.0
        %704 = vmatpush1.msra.mxu0 0.0
        %705 = vmatprep.subr.mxu0 0.0
        %706 = vmatpush1.msra.mxu0 0.0
        %707 = vmatprep.subr.mxu0 0.0
        %708 = vmatpush1.msra.mxu0 0.0
        %709 = vmatprep.subr.mxu0 0.0
        %710 = vmatpush1.msra.mxu0 0.0
        %711 = vmatprep.subr.mxu0 0.0
        %712 = vmatpush1.msra.mxu0 0.0
        %713 = vmatprep.subr.mxu0 0.0
        %714 = vmatpush1.msra.mxu0 0.0
        %715 = vmatprep.subr.mxu0 0.0
        %716 = vmatpush1.msra.mxu0 0.0
        %717 = vmatprep.subr.mxu0 0.0
        %718 = vmatpush1.msra.mxu0 0.0
        %719 = vmatprep.subr.mxu0 0.0
        %720 = vmatpush1.msra.mxu0 0.0
        %721 = vmatprep.subr.mxu0 0.0
        %722 = vmatpush1.msra.mxu0 0.0
        %723 = vmatprep.subr.mxu0 0.0
        %724 = vmatpush1.msra.mxu0 0.0
        %725 = vmatprep.subr.mxu0 0.0
        %726 = vmatpush1.msra.mxu0 0.0
        %727 = vmatprep.subr.mxu0 0.0
        %728 = vmatpush1.msra.mxu0 0.0
        %729 = vmatprep.subr.mxu0 0.0
        %730 = vmatpush1.msra.mxu0 0.0
        %731 = vmatprep.mubr.f32.mxu0 0.0
        %732 = vmatmul.mubr.f32.gmra.mrb[0].mxu0 %v647
        %v733 = vpop.f32.mrb[0].mxu0
        %v734 = vadd.f32 %v613, %v733
        %v735 = vpop.f32.mrb[0].mxu0
        %736 = vmatprep.mubr.f32.mxu0 0.0
        %737 = vmatmul.mubr.f32.gmra.mrb[0].mxu0 %v650
        %v738 = vpop.f32.mrb[0].mxu0
        %v739 = vadd.f32 %v618, %v738
        %v740 = vpop.f32.mrb[0].mxu0
        %741 = vmatprep.mubr.f32.mxu0 0.0
        %742 = vmatmul.mubr.f32.gmra.mrb[0].mxu0 %v653
        %v743 = vpop.f32.mrb[0].mxu0
        %v744 = vadd.f32 %v623, %v743
        %v745 = vpop.f32.mrb[0].mxu0
        %746 = vmatprep.mubr.f32.mxu0 0.0
        %747 = vmatmul.mubr.f32.gmra.mrb[0].mxu0 %v656
        %v748 = vpop.f32.mrb[0].mxu0
        %v749 = vadd.f32 %v628, %v748
        %v750 = vpop.f32.mrb[0].mxu0
        %751 = vmatprep.mubr.f32.mxu0 0.0
        %752 = vmatmul.mubr.f32.gmra.mrb[0].mxu0 %v659
        %v753 = vpop.f32.mrb[0].mxu0
        %v754 = vadd.f32 %v633, %v753
        %v755 = vpop.f32.mrb[0].mxu0
        %756 = vmatprep.mubr.f32.mxu0 0.0
        %757 = vmatmul.mubr.f32.gmra.mrb[0].mxu0 %v662
        %v758 = vpop.f32.mrb[0].mxu0
        %v759 = vadd.f32 %v638, %v758
        %v760 = vpop.f32.mrb[0].mxu0
        %761 = vmatprep.mubr.f32.mxu0 0.0
        %762 = vmatmul.mubr.f32.gmra.mrb[0].mxu0 %v665
        %v763 = vpop.f32.mrb[0].mxu0
        %v764 = vadd.f32 %v643, %v763
        %v765 = vpop.f32.mrb[0].mxu0
        %766 = vdwg.mxu0
        %v767 = vld [vmem:[#allocation2 + $0x2] sm:$0xff]
        %v768 = vld [vmem:[#allocation2 + $0x12] sm:$0xff]
        %v769 = vld [vmem:[#allocation2 + $0x22] sm:$0xff]
        %v770 = vld [vmem:[#allocation2 + $0x32] sm:$0xff]
        %v771 = vld [vmem:[#allocation2 + $0x42] sm:$0xff]
        %v772 = vld [vmem:[#allocation2 + $0x52] sm:$0xff]
        %v773 = vld [vmem:[#allocation2 + $0x62] sm:$0xff]
        %s774 = scalar_lea.vmem [#allocation6], 64
        %v775 = vld [vmem:[%s774] sm:$0xff]
        %v776 = vld [vmem:[%s774 + $0x8] sm:$0xff]
        %v777 = vld [vmem:[%s774 + $0x10] sm:$0xff]
        %v778 = vld [vmem:[%s774 + $0x18] sm:$0xff]
        %v780 = vsel %vm472, %v767, 0
        %v783 = vsel %vm472, %v768, 0
        %v786 = vsel %vm472, %v769, 0
        %v789 = vsel %vm472, %v770, 0
        %v792 = vsel %vm472, %v771, 0
        %v795 = vsel %vm472, %v772, 0
        %v798 = vsel %vm472, %v773, 0
        %800 = vmatprep.subr.mxu0 0.0
        %801 = vmatpush1.msra.mxu0 %v775
        %802 = vmatprep.subr.mxu0 0.0
        %803 = vmatpush1.msra.mxu0 %v776
        %804 = vmatprep.subr.mxu0 0.0
        %805 = vmatpush1.msra.mxu0 %v777
        %806 = vmatprep.subr.mxu0 0.0
        %807 = vmatpush1.msra.mxu0 %v778
        %808 = vmatprep.subr.mxu0 0.0
        %809 = vmatpush1.msra.mxu0 0.0
        %810 = vmatprep.subr.mxu0 0.0
        %811 = vmatpush1.msra.mxu0 0.0
        %812 = vmatprep.subr.mxu0 0.0
        %813 = vmatpush1.msra.mxu0 0.0
        %814 = vmatprep.subr.mxu0 0.0
        %815 = vmatpush1.msra.mxu0 0.0
        %816 = vmatprep.subr.mxu0 0.0
        %817 = vmatpush1.msra.mxu0 0.0
        %818 = vmatprep.subr.mxu0 0.0
        %819 = vmatpush1.msra.mxu0 0.0
        %820 = vmatprep.subr.mxu0 0.0
        %821 = vmatpush1.msra.mxu0 0.0
        %822 = vmatprep.subr.mxu0 0.0
        %823 = vmatpush1.msra.mxu0 0.0
        %824 = vmatprep.subr.mxu0 0.0
        %825 = vmatpush1.msra.mxu0 0.0
        %826 = vmatprep.subr.mxu0 0.0
        %827 = vmatpush1.msra.mxu0 0.0
        %828 = vmatprep.subr.mxu0 0.0
        %829 = vmatpush1.msra.mxu0 0.0
        %830 = vmatprep.subr.mxu0 0.0
        %831 = vmatpush1.msra.mxu0 0.0
        %832 = vmatprep.subr.mxu0 0.0
        %833 = vmatpush1.msra.mxu0 0.0
        %834 = vmatprep.subr.mxu0 0.0
        %835 = vmatpush1.msra.mxu0 0.0
        %836 = vmatprep.subr.mxu0 0.0
        %837 = vmatpush1.msra.mxu0 0.0
        %838 = vmatprep.subr.mxu0 0.0
        %839 = vmatpush1.msra.mxu0 0.0
        %840 = vmatprep.subr.mxu0 0.0
        %841 = vmatpush1.msra.mxu0 0.0
        %842 = vmatprep.subr.mxu0 0.0
        %843 = vmatpush1.msra.mxu0 0.0
        %844 = vmatprep.subr.mxu0 0.0
        %845 = vmatpush1.msra.mxu0 0.0
        %846 = vmatprep.subr.mxu0 0.0
        %847 = vmatpush1.msra.mxu0 0.0
        %848 = vmatprep.subr.mxu0 0.0
        %849 = vmatpush1.msra.mxu0 0.0
        %850 = vmatprep.subr.mxu0 0.0
        %851 = vmatpush1.msra.mxu0 0.0
        %852 = vmatprep.subr.mxu0 0.0
        %853 = vmatpush1.msra.mxu0 0.0
        %854 = vmatprep.subr.mxu0 0.0
        %855 = vmatpush1.msra.mxu0 0.0
        %856 = vmatprep.subr.mxu0 0.0
        %857 = vmatpush1.msra.mxu0 0.0
        %858 = vmatprep.subr.mxu0 0.0
        %859 = vmatpush1.msra.mxu0 0.0
        %860 = vmatprep.subr.mxu0 0.0
        %861 = vmatpush1.msra.mxu0 0.0
        %862 = vmatprep.subr.mxu0 0.0
        %863 = vmatpush1.msra.mxu0 0.0
        %864 = vmatprep.mubr.f32.mxu0 0.0
        %865 = vmatmul.mubr.f32.gmra.mrb[0].mxu0 %v780
        %v866 = vpop.f32.mrb[0].mxu0
        %v867 = vadd.f32 0.0, %v866
        %v868 = vpop.f32.mrb[0].mxu0
        %869 = vmatprep.mubr.f32.mxu0 0.0
        %870 = vmatmul.mubr.f32.gmra.mrb[0].mxu0 %v783
        %v871 = vpop.f32.mrb[0].mxu0
        %v872 = vadd.f32 0.0, %v871
        %v873 = vpop.f32.mrb[0].mxu0
        %874 = vmatprep.mubr.f32.mxu0 0.0
        %875 = vmatmul.mubr.f32.gmra.mrb[0].mxu0 %v786
        %v876 = vpop.f32.mrb[0].mxu0
        %v877 = vadd.f32 0.0, %v876
        %v878 = vpop.f32.mrb[0].mxu0
        %879 = vmatprep.mubr.f32.mxu0 0.0
        %880 = vmatmul.mubr.f32.gmra.mrb[0].mxu0 %v789
        %v881 = vpop.f32.mrb[0].mxu0
        %v882 = vadd.f32 0.0, %v881
        %v883 = vpop.f32.mrb[0].mxu0
        %884 = vmatprep.mubr.f32.mxu0 0.0
        %885 = vmatmul.mubr.f32.gmra.mrb[0].mxu0 %v792
        %v886 = vpop.f32.mrb[0].mxu0
        %v887 = vadd.f32 0.0, %v886
        %v888 = vpop.f32.mrb[0].mxu0
        %889 = vmatprep.mubr.f32.mxu0 0.0
        %890 = vmatmul.mubr.f32.gmra.mrb[0].mxu0 %v795
        %v891 = vpop.f32.mrb[0].mxu0
        %v892 = vadd.f32 0.0, %v891
        %v893 = vpop.f32.mrb[0].mxu0
        %894 = vmatprep.mubr.f32.mxu0 0.0
        %895 = vmatmul.mubr.f32.gmra.mrb[0].mxu0 %v798
        %v896 = vpop.f32.mrb[0].mxu0
        %v897 = vadd.f32 0.0, %v896
        %v898 = vpop.f32.mrb[0].mxu0
        %899 = vdwg.mxu0
        %v900 = vadd.f32 %v734, %v867
        %v901 = vadd.f32 %v739, %v872
        %v902 = vadd.f32 %v744, %v877
        %v903 = vadd.f32 %v749, %v882
        %v904 = vadd.f32 %v754, %v887
        %v905 = vadd.f32 %v759, %v892
        %v906 = vadd.f32 %v764, %v897
        %v907 = vld [vmem:[#allocation2 + $0x3] sm:$0xff]
        %v908 = vld [vmem:[#allocation2 + $0x13] sm:$0xff]
        %v909 = vld [vmem:[#allocation2 + $0x23] sm:$0xff]
        %v910 = vld [vmem:[#allocation2 + $0x33] sm:$0xff]
        %v911 = vld [vmem:[#allocation2 + $0x43] sm:$0xff]
        %v912 = vld [vmem:[#allocation2 + $0x53] sm:$0xff]
        %v913 = vld [vmem:[#allocation2 + $0x63] sm:$0xff]
        %s914 = scalar_lea.vmem [#allocation6], 96
        %v915 = vld [vmem:[%s914] sm:$0xff]
        %v916 = vld [vmem:[%s914 + $0x8] sm:$0xff]
        %v917 = vld [vmem:[%s914 + $0x10] sm:$0xff]
        %v918 = vld [vmem:[%s914 + $0x18] sm:$0xff]
        %v920 = vsel %vm472, %v907, 0
        %v923 = vsel %vm472, %v908, 0
        %v926 = vsel %vm472, %v909, 0
        %v929 = vsel %vm472, %v910, 0
        %v932 = vsel %vm472, %v911, 0
        %v935 = vsel %vm472, %v912, 0
        %v938 = vsel %vm472, %v913, 0
        %940 = vmatprep.subr.mxu0 0.0
        %941 = vmatpush1.msra.mxu0 %v915
        %942 = vmatprep.subr.mxu0 0.0
        %943 = vmatpush1.msra.mxu0 %v916
        %944 = vmatprep.subr.mxu0 0.0
        %945 = vmatpush1.msra.mxu0 %v917
        %946 = vmatprep.subr.mxu0 0.0
        %947 = vmatpush1.msra.mxu0 %v918
        %948 = vmatprep.subr.mxu0 0.0
        %949 = vmatpush1.msra.mxu0 0.0
        %950 = vmatprep.subr.mxu0 0.0
        %951 = vmatpush1.msra.mxu0 0.0
        %952 = vmatprep.subr.mxu0 0.0
        %953 = vmatpush1.msra.mxu0 0.0
        %954 = vmatprep.subr.mxu0 0.0
        %955 = vmatpush1.msra.mxu0 0.0
        %956 = vmatprep.subr.mxu0 0.0
        %957 = vmatpush1.msra.mxu0 0.0
        %958 = vmatprep.subr.mxu0 0.0
        %959 = vmatpush1.msra.mxu0 0.0
        %960 = vmatprep.subr.mxu0 0.0
        %961 = vmatpush1.msra.mxu0 0.0
        %962 = vmatprep.subr.mxu0 0.0
        %963 = vmatpush1.msra.mxu0 0.0
        %964 = vmatprep.subr.mxu0 0.0
        %965 = vmatpush1.msra.mxu0 0.0
        %966 = vmatprep.subr.mxu0 0.0
        %967 = vmatpush1.msra.mxu0 0.0
        %968 = vmatprep.subr.mxu0 0.0
        %969 = vmatpush1.msra.mxu0 0.0
        %970 = vmatprep.subr.mxu0 0.0
        %971 = vmatpush1.msra.mxu0 0.0
        %972 = vmatprep.subr.mxu0 0.0
        %973 = vmatpush1.msra.mxu0 0.0
        %974 = vmatprep.subr.mxu0 0.0
        %975 = vmatpush1.msra.mxu0 0.0
        %976 = vmatprep.subr.mxu0 0.0
        %977 = vmatpush1.msra.mxu0 0.0
        %978 = vmatprep.subr.mxu0 0.0
        %979 = vmatpush1.msra.mxu0 0.0
        %980 = vmatprep.subr.mxu0 0.0
        %981 = vmatpush1.msra.mxu0 0.0
        %982 = vmatprep.subr.mxu0 0.0
        %983 = vmatpush1.msra.mxu0 0.0
        %984 = vmatprep.subr.mxu0 0.0
        %985 = vmatpush1.msra.mxu0 0.0
        %986 = vmatprep.subr.mxu0 0.0
        %987 = vmatpush1.msra.mxu0 0.0
        %988 = vmatprep.subr.mxu0 0.0
        %989 = vmatpush1.msra.mxu0 0.0
        %990 = vmatprep.subr.mxu0 0.0
        %991 = vmatpush1.msra.mxu0 0.0
        %992 = vmatprep.subr.mxu0 0.0
        %993 = vmatpush1.msra.mxu0 0.0
        %994 = vmatprep.subr.mxu0 0.0
        %995 = vmatpush1.msra.mxu0 0.0
        %996 = vmatprep.subr.mxu0 0.0
        %997 = vmatpush1.msra.mxu0 0.0
        %998 = vmatprep.subr.mxu0 0.0
        %999 = vmatpush1.msra.mxu0 0.0
        %1000 = vmatprep.subr.mxu0 0.0
        %1001 = vmatpush1.msra.mxu0 0.0
        %1002 = vmatprep.subr.mxu0 0.0
        %1003 = vmatpush1.msra.mxu0 0.0
        %1004 = vmatprep.mubr.f32.mxu0 0.0
        %1005 = vmatmul.mubr.f32.gmra.mrb[0].mxu0 %v920
        %v1006 = vpop.f32.mrb[0].mxu0
        %v1007 = vadd.f32 0.0, %v1006
        %v1008 = vpop.f32.mrb[0].mxu0
        %1009 = vmatprep.mubr.f32.mxu0 0.0
        %1010 = vmatmul.mubr.f32.gmra.mrb[0].mxu0 %v923
        %v1011 = vpop.f32.mrb[0].mxu0
        %v1012 = vadd.f32 0.0, %v1011
        %v1013 = vpop.f32.mrb[0].mxu0
        %1014 = vmatprep.mubr.f32.mxu0 0.0
        %1015 = vmatmul.mubr.f32.gmra.mrb[0].mxu0 %v926
        %v1016 = vpop.f32.mrb[0].mxu0
        %v1017 = vadd.f32 0.0, %v1016
        %v1018 = vpop.f32.mrb[0].mxu0
        %1019 = vmatprep.mubr.f32.mxu0 0.0
        %1020 = vmatmul.mubr.f32.gmra.mrb[0].mxu0 %v929
        %v1021 = vpop.f32.mrb[0].mxu0
        %v1022 = vadd.f32 0.0, %v1021
        %v1023 = vpop.f32.mrb[0].mxu0
        %1024 = vmatprep.mubr.f32.mxu0 0.0
        %1025 = vmatmul.mubr.f32.gmra.mrb[0].mxu0 %v932
        %v1026 = vpop.f32.mrb[0].mxu0
        %v1027 = vadd.f32 0.0, %v1026
        %v1028 = vpop.f32.mrb[0].mxu0
        %1029 = vmatprep.mubr.f32.mxu0 0.0
        %1030 = vmatmul.mubr.f32.gmra.mrb[0].mxu0 %v935
        %v1031 = vpop.f32.mrb[0].mxu0
        %v1032 = vadd.f32 0.0, %v1031
        %v1033 = vpop.f32.mrb[0].mxu0
        %1034 = vmatprep.mubr.f32.mxu0 0.0
        %1035 = vmatmul.mubr.f32.gmra.mrb[0].mxu0 %v938
        %v1036 = vpop.f32.mrb[0].mxu0
        %v1037 = vadd.f32 0.0, %v1036
        %v1038 = vpop.f32.mrb[0].mxu0
        %1039 = vdwg.mxu0
        %v1040 = vadd.f32 %v900, %v1007
        %v1041 = vadd.f32 %v901, %v1012
        %v1042 = vadd.f32 %v902, %v1017
        %v1043 = vadd.f32 %v903, %v1022
        %v1044 = vadd.f32 %v904, %v1027
        %v1045 = vadd.f32 %v905, %v1032
        %v1046 = vadd.f32 %v906, %v1037
        %v1047 = vld [vmem:[%s493] sm:$0xff]
        %v1048 = vld [vmem:[%s493 + $0x10] sm:$0xff]
        %v1049 = vld [vmem:[%s493 + $0x20] sm:$0xff]
        %v1050 = vld [vmem:[%s493 + $0x30] sm:$0xff]
        %v1051 = vld [vmem:[%s493 + $0x40] sm:$0xff]
        %v1052 = vld [vmem:[%s493 + $0x50] sm:$0xff]
        %v1053 = vld [vmem:[%s493 + $0x60] sm:$0xff]
        %s1054 = scalar_lea.vmem [#allocation6], 128
        %v1055 = vld [vmem:[%s1054] sm:$0xff]
        %v1056 = vld [vmem:[%s1054 + $0x8] sm:$0xff]
        %v1057 = vld [vmem:[%s1054 + $0x10] sm:$0xff]
        %v1058 = vld [vmem:[%s1054 + $0x18] sm:$0xff]
        %v1060 = vsel %vm472, %v1047, 0
        %v1063 = vsel %vm472, %v1048, 0
        %v1066 = vsel %vm472, %v1049, 0
        %v1069 = vsel %vm472, %v1050, 0
        %v1072 = vsel %vm472, %v1051, 0
        %v1075 = vsel %vm472, %v1052, 0
        %v1078 = vsel %vm472, %v1053, 0
        %1080 = vmatprep.subr.mxu0 0.0
        %1081 = vmatpush1.msra.mxu0 %v1055
        %1082 = vmatprep.subr.mxu0 0.0
        %1083 = vmatpush1.msra.mxu0 %v1056
        %1084 = vmatprep.subr.mxu0 0.0
        %1085 = vmatpush1.msra.mxu0 %v1057
        %1086 = vmatprep.subr.mxu0 0.0
        %1087 = vmatpush1.msra.mxu0 %v1058
        %1088 = vmatprep.subr.mxu0 0.0
        %1089 = vmatpush1.msra.mxu0 0.0
        %1090 = vmatprep.subr.mxu0 0.0
        %1091 = vmatpush1.msra.mxu0 0.0
        %1092 = vmatprep.subr.mxu0 0.0
        %1093 = vmatpush1.msra.mxu0 0.0
        %1094 = vmatprep.subr.mxu0 0.0
        %1095 = vmatpush1.msra.mxu0 0.0
        %1096 = vmatprep.subr.mxu0 0.0
        %1097 = vmatpush1.msra.mxu0 0.0
        %1098 = vmatprep.subr.mxu0 0.0
        %1099 = vmatpush1.msra.mxu0 0.0
        %1100 = vmatprep.subr.mxu0 0.0
        %1101 = vmatpush1.msra.mxu0 0.0
        %1102 = vmatprep.subr.mxu0 0.0
        %1103 = vmatpush1.msra.mxu0 0.0
        %1104 = vmatprep.subr.mxu0 0.0
        %1105 = vmatpush1.msra.mxu0 0.0
        %1106 = vmatprep.subr.mxu0 0.0
        %1107 = vmatpush1.msra.mxu0 0.0
        %1108 = vmatprep.subr.mxu0 0.0
        %1109 = vmatpush1.msra.mxu0 0.0
        %1110 = vmatprep.subr.mxu0 0.0
        %1111 = vmatpush1.msra.mxu0 0.0
        %1112 = vmatprep.subr.mxu0 0.0
        %1113 = vmatpush1.msra.mxu0 0.0
        %1114 = vmatprep.subr.mxu0 0.0
        %1115 = vmatpush1.msra.mxu0 0.0
        %1116 = vmatprep.subr.mxu0 0.0
        %1117 = vmatpush1.msra.mxu0 0.0
        %1118 = vmatprep.subr.mxu0 0.0
        %1119 = vmatpush1.msra.mxu0 0.0
        %1120 = vmatprep.subr.mxu0 0.0
        %1121 = vmatpush1.msra.mxu0 0.0
        %1122 = vmatprep.subr.mxu0 0.0
        %1123 = vmatpush1.msra.mxu0 0.0
        %1124 = vmatprep.subr.mxu0 0.0
        %1125 = vmatpush1.msra.mxu0 0.0
        %1126 = vmatprep.subr.mxu0 0.0
        %1127 = vmatpush1.msra.mxu0 0.0
        %1128 = vmatprep.subr.mxu0 0.0
        %1129 = vmatpush1.msra.mxu0 0.0
        %1130 = vmatprep.subr.mxu0 0.0
        %1131 = vmatpush1.msra.mxu0 0.0
        %1132 = vmatprep.subr.mxu0 0.0
        %1133 = vmatpush1.msra.mxu0 0.0
        %1134 = vmatprep.subr.mxu0 0.0
        %1135 = vmatpush1.msra.mxu0 0.0
        %1136 = vmatprep.subr.mxu0 0.0
        %1137 = vmatpush1.msra.mxu0 0.0
        %1138 = vmatprep.subr.mxu0 0.0
        %1139 = vmatpush1.msra.mxu0 0.0
        %1140 = vmatprep.subr.mxu0 0.0
        %1141 = vmatpush1.msra.mxu0 0.0
        %1142 = vmatprep.subr.mxu0 0.0
        %1143 = vmatpush1.msra.mxu0 0.0
        %1144 = vmatprep.mubr.f32.mxu0 0.0
        %1145 = vmatmul.mubr.f32.gmra.mrb[0].mxu0 %v1060
        %v1146 = vpop.f32.mrb[0].mxu0
        %v1147 = vadd.f32 0.0, %v1146
        %v1148 = vpop.f32.mrb[0].mxu0
        %1149 = vmatprep.mubr.f32.mxu0 0.0
        %1150 = vmatmul.mubr.f32.gmra.mrb[0].mxu0 %v1063
        %v1151 = vpop.f32.mrb[0].mxu0
        %v1152 = vadd.f32 0.0, %v1151
        %v1153 = vpop.f32.mrb[0].mxu0
        %1154 = vmatprep.mubr.f32.mxu0 0.0
        %1155 = vmatmul.mubr.f32.gmra.mrb[0].mxu0 %v1066
        %v1156 = vpop.f32.mrb[0].mxu0
        %v1157 = vadd.f32 0.0, %v1156
        %v1158 = vpop.f32.mrb[0].mxu0
        %1159 = vmatprep.mubr.f32.mxu0 0.0
        %1160 = vmatmul.mubr.f32.gmra.mrb[0].mxu0 %v1069
        %v1161 = vpop.f32.mrb[0].mxu0
        %v1162 = vadd.f32 0.0, %v1161
        %v1163 = vpop.f32.mrb[0].mxu0
        %1164 = vmatprep.mubr.f32.mxu0 0.0
        %1165 = vmatmul.mubr.f32.gmra.mrb[0].mxu0 %v1072
        %v1166 = vpop.f32.mrb[0].mxu0
        %v1167 = vadd.f32 0.0, %v1166
        %v1168 = vpop.f32.mrb[0].mxu0
        %1169 = vmatprep.mubr.f32.mxu0 0.0
        %1170 = vmatmul.mubr.f32.gmra.mrb[0].mxu0 %v1075
        %v1171 = vpop.f32.mrb[0].mxu0
        %v1172 = vadd.f32 0.0, %v1171
        %v1173 = vpop.f32.mrb[0].mxu0
        %1174 = vmatprep.mubr.f32.mxu0 0.0
        %1175 = vmatmul.mubr.f32.gmra.mrb[0].mxu0 %v1078
        %v1176 = vpop.f32.mrb[0].mxu0
        %v1177 = vadd.f32 0.0, %v1176
        %v1178 = vpop.f32.mrb[0].mxu0
        %1179 = vdwg.mxu0
        %v1180 = vadd.f32 %v1040, %v1147
        %v1181 = vadd.f32 %v1041, %v1152
        %v1182 = vadd.f32 %v1042, %v1157
        %v1183 = vadd.f32 %v1043, %v1162
        %v1184 = vadd.f32 %v1044, %v1167
        %v1185 = vadd.f32 %v1045, %v1172
        %v1186 = vadd.f32 %v1046, %v1177
        %v1187 = vld [vmem:[%s493 + $0x1] sm:$0xff]
        %v1188 = vld [vmem:[%s493 + $0x11] sm:$0xff]
        %v1189 = vld [vmem:[%s493 + $0x21] sm:$0xff]
        %v1190 = vld [vmem:[%s493 + $0x31] sm:$0xff]
        %v1191 = vld [vmem:[%s493 + $0x41] sm:$0xff]
        %v1192 = vld [vmem:[%s493 + $0x51] sm:$0xff]
        %v1193 = vld [vmem:[%s493 + $0x61] sm:$0xff]
        %s1194 = scalar_lea.vmem [#allocation6], 160
        %v1195 = vld [vmem:[%s1194] sm:$0xff]
        %v1196 = vld [vmem:[%s1194 + $0x8] sm:$0xff]
        %v1197 = vld [vmem:[%s1194 + $0x10] sm:$0xff]
        %v1198 = vld [vmem:[%s1194 + $0x18] sm:$0xff]
        %v1200 = vsel %vm472, %v1187, 0
        %v1203 = vsel %vm472, %v1188, 0
        %v1206 = vsel %vm472, %v1189, 0
        %v1209 = vsel %vm472, %v1190, 0
        %v1212 = vsel %vm472, %v1191, 0
        %v1215 = vsel %vm472, %v1192, 0
        %v1218 = vsel %vm472, %v1193, 0
        %1220 = vmatprep.subr.mxu0 0.0
        %1221 = vmatpush1.msra.mxu0 %v1195
        %1222 = vmatprep.subr.mxu0 0.0
        %1223 = vmatpush1.msra.mxu0 %v1196
        %1224 = vmatprep.subr.mxu0 0.0
        %1225 = vmatpush1.msra.mxu0 %v1197
        %1226 = vmatprep.subr.mxu0 0.0
        %1227 = vmatpush1.msra.mxu0 %v1198
        %1228 = vmatprep.subr.mxu0 0.0
        %1229 = vmatpush1.msra.mxu0 0.0
        %1230 = vmatprep.subr.mxu0 0.0
        %1231 = vmatpush1.msra.mxu0 0.0
        %1232 = vmatprep.subr.mxu0 0.0
        %1233 = vmatpush1.msra.mxu0 0.0
        %1234 = vmatprep.subr.mxu0 0.0
        %1235 = vmatpush1.msra.mxu0 0.0
        %1236 = vmatprep.subr.mxu0 0.0
        %1237 = vmatpush1.msra.mxu0 0.0
        %1238 = vmatprep.subr.mxu0 0.0
        %1239 = vmatpush1.msra.mxu0 0.0
        %1240 = vmatprep.subr.mxu0 0.0
        %1241 = vmatpush1.msra.mxu0 0.0
        %1242 = vmatprep.subr.mxu0 0.0
        %1243 = vmatpush1.msra.mxu0 0.0
        %1244 = vmatprep.subr.mxu0 0.0
        %1245 = vmatpush1.msra.mxu0 0.0
        %1246 = vmatprep.subr.mxu0 0.0
        %1247 = vmatpush1.msra.mxu0 0.0
        %1248 = vmatprep.subr.mxu0 0.0
        %1249 = vmatpush1.msra.mxu0 0.0
        %1250 = vmatprep.subr.mxu0 0.0
        %1251 = vmatpush1.msra.mxu0 0.0
        %1252 = vmatprep.subr.mxu0 0.0
        %1253 = vmatpush1.msra.mxu0 0.0
        %1254 = vmatprep.subr.mxu0 0.0
        %1255 = vmatpush1.msra.mxu0 0.0
        %1256 = vmatprep.subr.mxu0 0.0
        %1257 = vmatpush1.msra.mxu0 0.0
        %1258 = vmatprep.subr.mxu0 0.0
        %1259 = vmatpush1.msra.mxu0 0.0
        %1260 = vmatprep.subr.mxu0 0.0
        %1261 = vmatpush1.msra.mxu0 0.0
        %1262 = vmatprep.subr.mxu0 0.0
        %1263 = vmatpush1.msra.mxu0 0.0
        %1264 = vmatprep.subr.mxu0 0.0
        %1265 = vmatpush1.msra.mxu0 0.0
        %1266 = vmatprep.subr.mxu0 0.0
        %1267 = vmatpush1.msra.mxu0 0.0
        %1268 = vmatprep.subr.mxu0 0.0
        %1269 = vmatpush1.msra.mxu0 0.0
        %1270 = vmatprep.subr.mxu0 0.0
        %1271 = vmatpush1.msra.mxu0 0.0
        %1272 = vmatprep.subr.mxu0 0.0
        %1273 = vmatpush1.msra.mxu0 0.0
        %1274 = vmatprep.subr.mxu0 0.0
        %1275 = vmatpush1.msra.mxu0 0.0
        %1276 = vmatprep.subr.mxu0 0.0
        %1277 = vmatpush1.msra.mxu0 0.0
        %1278 = vmatprep.subr.mxu0 0.0
        %1279 = vmatpush1.msra.mxu0 0.0
        %1280 = vmatprep.subr.mxu0 0.0
        %1281 = vmatpush1.msra.mxu0 0.0
        %1282 = vmatprep.subr.mxu0 0.0
        %1283 = vmatpush1.msra.mxu0 0.0
        %1284 = vmatprep.mubr.f32.mxu0 0.0
        %1285 = vmatmul.mubr.f32.gmra.mrb[0].mxu0 %v1200
        %v1286 = vpop.f32.mrb[0].mxu0
        %v1287 = vadd.f32 0.0, %v1286
        %v1288 = vpop.f32.mrb[0].mxu0
        %1289 = vmatprep.mubr.f32.mxu0 0.0
        %1290 = vmatmul.mubr.f32.gmra.mrb[0].mxu0 %v1203
        %v1291 = vpop.f32.mrb[0].mxu0
        %v1292 = vadd.f32 0.0, %v1291
        %v1293 = vpop.f32.mrb[0].mxu0
        %1294 = vmatprep.mubr.f32.mxu0 0.0
        %1295 = vmatmul.mubr.f32.gmra.mrb[0].mxu0 %v1206
        %v1296 = vpop.f32.mrb[0].mxu0
        %v1297 = vadd.f32 0.0, %v1296
        %v1298 = vpop.f32.mrb[0].mxu0
        %1299 = vmatprep.mubr.f32.mxu0 0.0
        %1300 = vmatmul.mubr.f32.gmra.mrb[0].mxu0 %v1209
        %v1301 = vpop.f32.mrb[0].mxu0
        %v1302 = vadd.f32 0.0, %v1301
        %v1303 = vpop.f32.mrb[0].mxu0
        %1304 = vmatprep.mubr.f32.mxu0 0.0
        %1305 = vmatmul.mubr.f32.gmra.mrb[0].mxu0 %v1212
        %v1306 = vpop.f32.mrb[0].mxu0
        %v1307 = vadd.f32 0.0, %v1306
        %v1308 = vpop.f32.mrb[0].mxu0
        %1309 = vmatprep.mubr.f32.mxu0 0.0
        %1310 = vmatmul.mubr.f32.gmra.mrb[0].mxu0 %v1215
        %v1311 = vpop.f32.mrb[0].mxu0
        %v1312 = vadd.f32 0.0, %v1311
        %v1313 = vpop.f32.mrb[0].mxu0
        %1314 = vmatprep.mubr.f32.mxu0 0.0
        %1315 = vmatmul.mubr.f32.gmra.mrb[0].mxu0 %v1218
        %v1316 = vpop.f32.mrb[0].mxu0
        %v1317 = vadd.f32 0.0, %v1316
        %v1318 = vpop.f32.mrb[0].mxu0
        %1319 = vdwg.mxu0
        %v1320 = vadd.f32 %v1180, %v1287
        %v1321 = vadd.f32 %v1181, %v1292
        %v1322 = vadd.f32 %v1182, %v1297
        %v1323 = vadd.f32 %v1183, %v1302
        %v1324 = vadd.f32 %v1184, %v1307
        %v1325 = vadd.f32 %v1185, %v1312
        %v1326 = vadd.f32 %v1186, %v1317
        %v1327 = vld [vmem:[%s493 + $0x2] sm:$0xff]
        %v1328 = vld [vmem:[%s493 + $0x12] sm:$0xff]
        %v1329 = vld [vmem:[%s493 + $0x22] sm:$0xff]
        %v1330 = vld [vmem:[%s493 + $0x32] sm:$0xff]
        %v1331 = vld [vmem:[%s493 + $0x42] sm:$0xff]
        %v1332 = vld [vmem:[%s493 + $0x52] sm:$0xff]
        %v1333 = vld [vmem:[%s493 + $0x62] sm:$0xff]
        %s1334 = scalar_lea.vmem [#allocation6], 192
        %v1335 = vld [vmem:[%s1334] sm:$0xff]
        %v1336 = vld [vmem:[%s1334 + $0x8] sm:$0xff]
        %v1337 = vld [vmem:[%s1334 + $0x10] sm:$0xff]
        %v1338 = vld [vmem:[%s1334 + $0x18] sm:$0xff]
        %v1340 = vsel %vm472, %v1327, 0
        %v1343 = vsel %vm472, %v1328, 0
        %v1346 = vsel %vm472, %v1329, 0
        %v1349 = vsel %vm472, %v1330, 0
        %v1352 = vsel %vm472, %v1331, 0
        %v1355 = vsel %vm472, %v1332, 0
        %v1358 = vsel %vm472, %v1333, 0
        %1360 = vmatprep.subr.mxu0 0.0
        %1361 = vmatpush1.msra.mxu0 %v1335
        %1362 = vmatprep.subr.mxu0 0.0
        %1363 = vmatpush1.msra.mxu0 %v1336
        %1364 = vmatprep.subr.mxu0 0.0
        %1365 = vmatpush1.msra.mxu0 %v1337
        %1366 = vmatprep.subr.mxu0 0.0
        %1367 = vmatpush1.msra.mxu0 %v1338
        %1368 = vmatprep.subr.mxu0 0.0
        %1369 = vmatpush1.msra.mxu0 0.0
        %1370 = vmatprep.subr.mxu0 0.0
        %1371 = vmatpush1.msra.mxu0 0.0
        %1372 = vmatprep.subr.mxu0 0.0
        %1373 = vmatpush1.msra.mxu0 0.0
        %1374 = vmatprep.subr.mxu0 0.0
        %1375 = vmatpush1.msra.mxu0 0.0
        %1376 = vmatprep.subr.mxu0 0.0
        %1377 = vmatpush1.msra.mxu0 0.0
        %1378 = vmatprep.subr.mxu0 0.0
        %1379 = vmatpush1.msra.mxu0 0.0
        %1380 = vmatprep.subr.mxu0 0.0
        %1381 = vmatpush1.msra.mxu0 0.0
        %1382 = vmatprep.subr.mxu0 0.0
        %1383 = vmatpush1.msra.mxu0 0.0
        %1384 = vmatprep.subr.mxu0 0.0
        %1385 = vmatpush1.msra.mxu0 0.0
        %1386 = vmatprep.subr.mxu0 0.0
        %1387 = vmatpush1.msra.mxu0 0.0
        %1388 = vmatprep.subr.mxu0 0.0
        %1389 = vmatpush1.msra.mxu0 0.0
        %1390 = vmatprep.subr.mxu0 0.0
        %1391 = vmatpush1.msra.mxu0 0.0
        %1392 = vmatprep.subr.mxu0 0.0
        %1393 = vmatpush1.msra.mxu0 0.0
        %1394 = vmatprep.subr.mxu0 0.0
        %1395 = vmatpush1.msra.mxu0 0.0
        %1396 = vmatprep.subr.mxu0 0.0
        %1397 = vmatpush1.msra.mxu0 0.0
        %1398 = vmatprep.subr.mxu0 0.0
        %1399 = vmatpush1.msra.mxu0 0.0
        %1400 = vmatprep.subr.mxu0 0.0
        %1401 = vmatpush1.msra.mxu0 0.0
        %1402 = vmatprep.subr.mxu0 0.0
        %1403 = vmatpush1.msra.mxu0 0.0
        %1404 = vmatprep.subr.mxu0 0.0
        %1405 = vmatpush1.msra.mxu0 0.0
        %1406 = vmatprep.subr.mxu0 0.0
        %1407 = vmatpush1.msra.mxu0 0.0
        %1408 = vmatprep.subr.mxu0 0.0
        %1409 = vmatpush1.msra.mxu0 0.0
        %1410 = vmatprep.subr.mxu0 0.0
        %1411 = vmatpush1.msra.mxu0 0.0
        %1412 = vmatprep.subr.mxu0 0.0
        %1413 = vmatpush1.msra.mxu0 0.0
        %1414 = vmatprep.subr.mxu0 0.0
        %1415 = vmatpush1.msra.mxu0 0.0
        %1416 = vmatprep.subr.mxu0 0.0
        %1417 = vmatpush1.msra.mxu0 0.0
        %1418 = vmatprep.subr.mxu0 0.0
        %1419 = vmatpush1.msra.mxu0 0.0
        %1420 = vmatprep.subr.mxu0 0.0
        %1421 = vmatpush1.msra.mxu0 0.0
        %1422 = vmatprep.subr.mxu0 0.0
        %1423 = vmatpush1.msra.mxu0 0.0
        %1424 = vmatprep.mubr.f32.mxu0 0.0
        %1425 = vmatmul.mubr.f32.gmra.mrb[0].mxu0 %v1340
        %v1426 = vpop.f32.mrb[0].mxu0
        %v1427 = vadd.f32 0.0, %v1426
        %v1428 = vpop.f32.mrb[0].mxu0
        %1429 = vmatprep.mubr.f32.mxu0 0.0
        %1430 = vmatmul.mubr.f32.gmra.mrb[0].mxu0 %v1343
        %v1431 = vpop.f32.mrb[0].mxu0
        %v1432 = vadd.f32 0.0, %v1431
        %v1433 = vpop.f32.mrb[0].mxu0
        %1434 = vmatprep.mubr.f32.mxu0 0.0
        %1435 = vmatmul.mubr.f32.gmra.mrb[0].mxu0 %v1346
        %v1436 = vpop.f32.mrb[0].mxu0
        %v1437 = vadd.f32 0.0, %v1436
        %v1438 = vpop.f32.mrb[0].mxu0
        %1439 = vmatprep.mubr.f32.mxu0 0.0
        %1440 = vmatmul.mubr.f32.gmra.mrb[0].mxu0 %v1349
        %v1441 = vpop.f32.mrb[0].mxu0
        %v1442 = vadd.f32 0.0, %v1441
        %v1443 = vpop.f32.mrb[0].mxu0
        %1444 = vmatprep.mubr.f32.mxu0 0.0
        %1445 = vmatmul.mubr.f32.gmra.mrb[0].mxu0 %v1352
        %v1446 = vpop.f32.mrb[0].mxu0
        %v1447 = vadd.f32 0.0, %v1446
        %v1448 = vpop.f32.mrb[0].mxu0
        %1449 = vmatprep.mubr.f32.mxu0 0.0
        %1450 = vmatmul.mubr.f32.gmra.mrb[0].mxu0 %v1355
        %v1451 = vpop.f32.mrb[0].mxu0
        %v1452 = vadd.f32 0.0, %v1451
        %v1453 = vpop.f32.mrb[0].mxu0
        %1454 = vmatprep.mubr.f32.mxu0 0.0
        %1455 = vmatmul.mubr.f32.gmra.mrb[0].mxu0 %v1358
        %v1456 = vpop.f32.mrb[0].mxu0
        %v1457 = vadd.f32 0.0, %v1456
        %v1458 = vpop.f32.mrb[0].mxu0
        %1459 = vdwg.mxu0
        %v1460 = vadd.f32 %v1320, %v1427
        %v1461 = vadd.f32 %v1321, %v1432
        %v1462 = vadd.f32 %v1322, %v1437
        %v1463 = vadd.f32 %v1323, %v1442
        %v1464 = vadd.f32 %v1324, %v1447
        %v1465 = vadd.f32 %v1325, %v1452
        %v1466 = vadd.f32 %v1326, %v1457
        %v1467 = vld [vmem:[%s493 + $0x3] sm:$0xff]
        %v1468 = vld [vmem:[%s493 + $0x13] sm:$0xff]
        %v1469 = vld [vmem:[%s493 + $0x23] sm:$0xff]
        %v1470 = vld [vmem:[%s493 + $0x33] sm:$0xff]
        %v1471 = vld [vmem:[%s493 + $0x43] sm:$0xff]
        %v1472 = vld [vmem:[%s493 + $0x53] sm:$0xff]
        %v1473 = vld [vmem:[%s493 + $0x63] sm:$0xff]
        %s1474 = scalar_lea.vmem [#allocation6], 224
        %v1475 = vld [vmem:[%s1474] sm:$0xff]
        %v1476 = vld [vmem:[%s1474 + $0x8] sm:$0xff]
        %v1477 = vld [vmem:[%s1474 + $0x10] sm:$0xff]
        %v1478 = vld [vmem:[%s1474 + $0x18] sm:$0xff]
        %v1480 = vsel %vm472, %v1467, 0
        %v1483 = vsel %vm472, %v1468, 0
        %v1486 = vsel %vm472, %v1469, 0
        %v1489 = vsel %vm472, %v1470, 0
        %v1492 = vsel %vm472, %v1471, 0
        %v1495 = vsel %vm472, %v1472, 0
        %v1498 = vsel %vm472, %v1473, 0
        %1500 = vmatprep.subr.mxu0 0.0
        %1501 = vmatpush1.msra.mxu0 %v1475
        %1502 = vmatprep.subr.mxu0 0.0
        %1503 = vmatpush1.msra.mxu0 %v1476
        %1504 = vmatprep.subr.mxu0 0.0
        %1505 = vmatpush1.msra.mxu0 %v1477
        %1506 = vmatprep.subr.mxu0 0.0
        %1507 = vmatpush1.msra.mxu0 %v1478
        %1508 = vmatprep.subr.mxu0 0.0
        %1509 = vmatpush1.msra.mxu0 0.0
        %1510 = vmatprep.subr.mxu0 0.0
        %1511 = vmatpush1.msra.mxu0 0.0
        %1512 = vmatprep.subr.mxu0 0.0
        %1513 = vmatpush1.msra.mxu0 0.0
        %1514 = vmatprep.subr.mxu0 0.0
        %1515 = vmatpush1.msra.mxu0 0.0
        %1516 = vmatprep.subr.mxu0 0.0
        %1517 = vmatpush1.msra.mxu0 0.0
        %1518 = vmatprep.subr.mxu0 0.0
        %1519 = vmatpush1.msra.mxu0 0.0
        %1520 = vmatprep.subr.mxu0 0.0
        %1521 = vmatpush1.msra.mxu0 0.0
        %1522 = vmatprep.subr.mxu0 0.0
        %1523 = vmatpush1.msra.mxu0 0.0
        %1524 = vmatprep.subr.mxu0 0.0
        %1525 = vmatpush1.msra.mxu0 0.0
        %1526 = vmatprep.subr.mxu0 0.0
        %1527 = vmatpush1.msra.mxu0 0.0
        %1528 = vmatprep.subr.mxu0 0.0
        %1529 = vmatpush1.msra.mxu0 0.0
        %1530 = vmatprep.subr.mxu0 0.0
        %1531 = vmatpush1.msra.mxu0 0.0
        %1532 = vmatprep.subr.mxu0 0.0
        %1533 = vmatpush1.msra.mxu0 0.0
        %1534 = vmatprep.subr.mxu0 0.0
        %1535 = vmatpush1.msra.mxu0 0.0
        %1536 = vmatprep.subr.mxu0 0.0
        %1537 = vmatpush1.msra.mxu0 0.0
        %1538 = vmatprep.subr.mxu0 0.0
        %1539 = vmatpush1.msra.mxu0 0.0
        %1540 = vmatprep.subr.mxu0 0.0
        %1541 = vmatpush1.msra.mxu0 0.0
        %1542 = vmatprep.subr.mxu0 0.0
        %1543 = vmatpush1.msra.mxu0 0.0
        %1544 = vmatprep.subr.mxu0 0.0
        %1545 = vmatpush1.msra.mxu0 0.0
        %1546 = vmatprep.subr.mxu0 0.0
        %1547 = vmatpush1.msra.mxu0 0.0
        %1548 = vmatprep.subr.mxu0 0.0
        %1549 = vmatpush1.msra.mxu0 0.0
        %1550 = vmatprep.subr.mxu0 0.0
        %1551 = vmatpush1.msra.mxu0 0.0
        %1552 = vmatprep.subr.mxu0 0.0
        %1553 = vmatpush1.msra.mxu0 0.0
        %1554 = vmatprep.subr.mxu0 0.0
        %1555 = vmatpush1.msra.mxu0 0.0
        %1556 = vmatprep.subr.mxu0 0.0
        %1557 = vmatpush1.msra.mxu0 0.0
        %1558 = vmatprep.subr.mxu0 0.0
        %1559 = vmatpush1.msra.mxu0 0.0
        %1560 = vmatprep.subr.mxu0 0.0
        %1561 = vmatpush1.msra.mxu0 0.0
        %1562 = vmatprep.subr.mxu0 0.0
        %1563 = vmatpush1.msra.mxu0 0.0
        %1564 = vmatprep.mubr.f32.mxu0 0.0
        %1565 = vmatmul.mubr.f32.gmra.mrb[0].mxu0 %v1480
        %v1566 = vpop.f32.mrb[0].mxu0
        %v1567 = vadd.f32 0.0, %v1566
        %v1568 = vpop.f32.mrb[0].mxu0
        %1569 = vmatprep.mubr.f32.mxu0 0.0
        %1570 = vmatmul.mubr.f32.gmra.mrb[0].mxu0 %v1483
        %v1571 = vpop.f32.mrb[0].mxu0
        %v1572 = vadd.f32 0.0, %v1571
        %v1573 = vpop.f32.mrb[0].mxu0
        %1574 = vmatprep.mubr.f32.mxu0 0.0
        %1575 = vmatmul.mubr.f32.gmra.mrb[0].mxu0 %v1486
        %v1576 = vpop.f32.mrb[0].mxu0
        %v1577 = vadd.f32 0.0, %v1576
        %v1578 = vpop.f32.mrb[0].mxu0
        %1579 = vmatprep.mubr.f32.mxu0 0.0
        %1580 = vmatmul.mubr.f32.gmra.mrb[0].mxu0 %v1489
        %v1581 = vpop.f32.mrb[0].mxu0
        %v1582 = vadd.f32 0.0, %v1581
        %v1583 = vpop.f32.mrb[0].mxu0
        %1584 = vmatprep.mubr.f32.mxu0 0.0
        %1585 = vmatmul.mubr.f32.gmra.mrb[0].mxu0 %v1492
        %v1586 = vpop.f32.mrb[0].mxu0
        %v1587 = vadd.f32 0.0, %v1586
        %v1588 = vpop.f32.mrb[0].mxu0
        %1589 = vmatprep.mubr.f32.mxu0 0.0
        %1590 = vmatmul.mubr.f32.gmra.mrb[0].mxu0 %v1495
        %v1591 = vpop.f32.mrb[0].mxu0
        %v1592 = vadd.f32 0.0, %v1591
        %v1593 = vpop.f32.mrb[0].mxu0
        %1594 = vmatprep.mubr.f32.mxu0 0.0
        %1595 = vmatmul.mubr.f32.gmra.mrb[0].mxu0 %v1498
        %v1596 = vpop.f32.mrb[0].mxu0
        %v1597 = vadd.f32 0.0, %v1596
        %v1598 = vpop.f32.mrb[0].mxu0
        %1599 = vdwg.mxu0
        %v1600 = vadd.f32 %v1460, %v1567
        %v1601 = vadd.f32 %v1461, %v1572
        %v1602 = vadd.f32 %v1462, %v1577
        %v1603 = vadd.f32 %v1463, %v1582
        %v1604 = vadd.f32 %v1464, %v1587
        %v1605 = vadd.f32 %v1465, %v1592
        %v1606 = vadd.f32 %v1466, %v1597
        %s1607 = scalar_lea.vmem [#allocation2], 32
        %v1608 = vld [vmem:[%s1607] sm:$0xff]
        %v1609 = vld [vmem:[%s1607 + $0x10] sm:$0xff]
        %v1610 = vld [vmem:[%s1607 + $0x20] sm:$0xff]
        %v1611 = vld [vmem:[%s1607 + $0x30] sm:$0xff]
        %v1612 = vld [vmem:[%s1607 + $0x40] sm:$0xff]
        %v1613 = vld [vmem:[%s1607 + $0x50] sm:$0xff]
        %v1614 = vld [vmem:[%s1607 + $0x60] sm:$0xff]
        %s1615 = scalar_lea.vmem [#allocation6], 256
        %v1616 = vld [vmem:[%s1615] sm:$0xff]
        %v1617 = vld [vmem:[%s1615 + $0x8] sm:$0xff]
        %v1618 = vld [vmem:[%s1615 + $0x10] sm:$0xff]
        %v1619 = vld [vmem:[%s1615 + $0x18] sm:$0xff]
        %v1621 = vsel %vm472, %v1608, 0
        %v1624 = vsel %vm472, %v1609, 0
        %v1627 = vsel %vm472, %v1610, 0
        %v1630 = vsel %vm472, %v1611, 0
        %v1633 = vsel %vm472, %v1612, 0
        %v1636 = vsel %vm472, %v1613, 0
        %v1639 = vsel %vm472, %v1614, 0
        %1641 = vmatprep.subr.mxu0 0.0
        %1642 = vmatpush1.msra.mxu0 %v1616
        %1643 = vmatprep.subr.mxu0 0.0
        %1644 = vmatpush1.msra.mxu0 %v1617
        %1645 = vmatprep.subr.mxu0 0.0
        %1646 = vmatpush1.msra.mxu0 %v1618
        %1647 = vmatprep.subr.mxu0 0.0
        %1648 = vmatpush1.msra.mxu0 %v1619
        %1649 = vmatprep.subr.mxu0 0.0
        %1650 = vmatpush1.msra.mxu0 0.0
        %1651 = vmatprep.subr.mxu0 0.0
        %1652 = vmatpush1.msra.mxu0 0.0
        %1653 = vmatprep.subr.mxu0 0.0
        %1654 = vmatpush1.msra.mxu0 0.0
        %1655 = vmatprep.subr.mxu0 0.0
        %1656 = vmatpush1.msra.mxu0 0.0
        %1657 = vmatprep.subr.mxu0 0.0
        %1658 = vmatpush1.msra.mxu0 0.0
        %1659 = vmatprep.subr.mxu0 0.0
        %1660 = vmatpush1.msra.mxu0 0.0
        %1661 = vmatprep.subr.mxu0 0.0
        %1662 = vmatpush1.msra.mxu0 0.0
        %1663 = vmatprep.subr.mxu0 0.0
        %1664 = vmatpush1.msra.mxu0 0.0
        %1665 = vmatprep.subr.mxu0 0.0
        %1666 = vmatpush1.msra.mxu0 0.0
        %1667 = vmatprep.subr.mxu0 0.0
        %1668 = vmatpush1.msra.mxu0 0.0
        %1669 = vmatprep.subr.mxu0 0.0
        %1670 = vmatpush1.msra.mxu0 0.0
        %1671 = vmatprep.subr.mxu0 0.0
        %1672 = vmatpush1.msra.mxu0 0.0
        %1673 = vmatprep.subr.mxu0 0.0
        %1674 = vmatpush1.msra.mxu0 0.0
        %1675 = vmatprep.subr.mxu0 0.0
        %1676 = vmatpush1.msra.mxu0 0.0
        %1677 = vmatprep.subr.mxu0 0.0
        %1678 = vmatpush1.msra.mxu0 0.0
        %1679 = vmatprep.subr.mxu0 0.0
        %1680 = vmatpush1.msra.mxu0 0.0
        %1681 = vmatprep.subr.mxu0 0.0
        %1682 = vmatpush1.msra.mxu0 0.0
        %1683 = vmatprep.subr.mxu0 0.0
        %1684 = vmatpush1.msra.mxu0 0.0
        %1685 = vmatprep.subr.mxu0 0.0
        %1686 = vmatpush1.msra.mxu0 0.0
        %1687 = vmatprep.subr.mxu0 0.0
        %1688 = vmatpush1.msra.mxu0 0.0
        %1689 = vmatprep.subr.mxu0 0.0
        %1690 = vmatpush1.msra.mxu0 0.0
        %1691 = vmatprep.subr.mxu0 0.0
        %1692 = vmatpush1.msra.mxu0 0.0
        %1693 = vmatprep.subr.mxu0 0.0
        %1694 = vmatpush1.msra.mxu0 0.0
        %1695 = vmatprep.subr.mxu0 0.0
        %1696 = vmatpush1.msra.mxu0 0.0
        %1697 = vmatprep.subr.mxu0 0.0
        %1698 = vmatpush1.msra.mxu0 0.0
        %1699 = vmatprep.subr.mxu0 0.0
        %1700 = vmatpush1.msra.mxu0 0.0
        %1701 = vmatprep.subr.mxu0 0.0
        %1702 = vmatpush1.msra.mxu0 0.0
        %1703 = vmatprep.subr.mxu0 0.0
        %1704 = vmatpush1.msra.mxu0 0.0
        %1705 = vmatprep.mubr.f32.mxu0 0.0
        %1706 = vmatmul.mubr.f32.gmra.mrb[0].mxu0 %v1621
        %v1707 = vpop.f32.mrb[0].mxu0
        %v1708 = vadd.f32 0.0, %v1707
        %v1709 = vpop.f32.mrb[0].mxu0
        %1710 = vmatprep.mubr.f32.mxu0 0.0
        %1711 = vmatmul.mubr.f32.gmra.mrb[0].mxu0 %v1624
        %v1712 = vpop.f32.mrb[0].mxu0
        %v1713 = vadd.f32 0.0, %v1712
        %v1714 = vpop.f32.mrb[0].mxu0
        %1715 = vmatprep.mubr.f32.mxu0 0.0
        %1716 = vmatmul.mubr.f32.gmra.mrb[0].mxu0 %v1627
        %v1717 = vpop.f32.mrb[0].mxu0
        %v1718 = vadd.f32 0.0, %v1717
        %v1719 = vpop.f32.mrb[0].mxu0
        %1720 = vmatprep.mubr.f32.mxu0 0.0
        %1721 = vmatmul.mubr.f32.gmra.mrb[0].mxu0 %v1630
        %v1722 = vpop.f32.mrb[0].mxu0
        %v1723 = vadd.f32 0.0, %v1722
        %v1724 = vpop.f32.mrb[0].mxu0
        %1725 = vmatprep.mubr.f32.mxu0 0.0
        %1726 = vmatmul.mubr.f32.gmra.mrb[0].mxu0 %v1633
        %v1727 = vpop.f32.mrb[0].mxu0
        %v1728 = vadd.f32 0.0, %v1727
        %v1729 = vpop.f32.mrb[0].mxu0
        %1730 = vmatprep.mubr.f32.mxu0 0.0
        %1731 = vmatmul.mubr.f32.gmra.mrb[0].mxu0 %v1636
        %v1732 = vpop.f32.mrb[0].mxu0
        %v1733 = vadd.f32 0.0, %v1732
        %v1734 = vpop.f32.mrb[0].mxu0
        %1735 = vmatprep.mubr.f32.mxu0 0.0
        %1736 = vmatmul.mubr.f32.gmra.mrb[0].mxu0 %v1639
        %v1737 = vpop.f32.mrb[0].mxu0
        %v1738 = vadd.f32 0.0, %v1737
        %v1739 = vpop.f32.mrb[0].mxu0
        %1740 = vdwg.mxu0
        %v1741 = vadd.f32 %v1600, %v1708
        %v1742 = vadd.f32 %v1601, %v1713
        %v1743 = vadd.f32 %v1602, %v1718
        %v1744 = vadd.f32 %v1603, %v1723
        %v1745 = vadd.f32 %v1604, %v1728
        %v1746 = vadd.f32 %v1605, %v1733
        %v1747 = vadd.f32 %v1606, %v1738
        %v1748 = vld [vmem:[%s1607 + $0x1] sm:$0xff]
        %v1749 = vld [vmem:[%s1607 + $0x11] sm:$0xff]
        %v1750 = vld [vmem:[%s1607 + $0x21] sm:$0xff]
        %v1751 = vld [vmem:[%s1607 + $0x31] sm:$0xff]
        %v1752 = vld [vmem:[%s1607 + $0x41] sm:$0xff]
        %v1753 = vld [vmem:[%s1607 + $0x51] sm:$0xff]
        %v1754 = vld [vmem:[%s1607 + $0x61] sm:$0xff]
        %s1755 = scalar_lea.vmem [#allocation6], 288
        %v1756 = vld [vmem:[%s1755] sm:$0xff]
        %v1757 = vld [vmem:[%s1755 + $0x8] sm:$0xff]
        %v1758 = vld [vmem:[%s1755 + $0x10] sm:$0xff]
        %v1759 = vld [vmem:[%s1755 + $0x18] sm:$0xff]
        %v1761 = vsel %vm472, %v1748, 0
        %v1764 = vsel %vm472, %v1749, 0
        %v1767 = vsel %vm472, %v1750, 0
        %v1770 = vsel %vm472, %v1751, 0
        %v1773 = vsel %vm472, %v1752, 0
        %v1776 = vsel %vm472, %v1753, 0
        %v1779 = vsel %vm472, %v1754, 0
        %1781 = vmatprep.subr.mxu0 0.0
        %1782 = vmatpush1.msra.mxu0 %v1756
        %1783 = vmatprep.subr.mxu0 0.0
        %1784 = vmatpush1.msra.mxu0 %v1757
        %1785 = vmatprep.subr.mxu0 0.0
        %1786 = vmatpush1.msra.mxu0 %v1758
        %1787 = vmatprep.subr.mxu0 0.0
        %1788 = vmatpush1.msra.mxu0 %v1759
        %1789 = vmatprep.subr.mxu0 0.0
        %1790 = vmatpush1.msra.mxu0 0.0
        %1791 = vmatprep.subr.mxu0 0.0
        %1792 = vmatpush1.msra.mxu0 0.0
        %1793 = vmatprep.subr.mxu0 0.0
        %1794 = vmatpush1.msra.mxu0 0.0
        %1795 = vmatprep.subr.mxu0 0.0
        %1796 = vmatpush1.msra.mxu0 0.0
        %1797 = vmatprep.subr.mxu0 0.0
        %1798 = vmatpush1.msra.mxu0 0.0
        %1799 = vmatprep.subr.mxu0 0.0
        %1800 = vmatpush1.msra.mxu0 0.0
        %1801 = vmatprep.subr.mxu0 0.0
        %1802 = vmatpush1.msra.mxu0 0.0
        %1803 = vmatprep.subr.mxu0 0.0
        %1804 = vmatpush1.msra.mxu0 0.0
        %1805 = vmatprep.subr.mxu0 0.0
        %1806 = vmatpush1.msra.mxu0 0.0
        %1807 = vmatprep.subr.mxu0 0.0
        %1808 = vmatpush1.msra.mxu0 0.0
        %1809 = vmatprep.subr.mxu0 0.0
        %1810 = vmatpush1.msra.mxu0 0.0
        %1811 = vmatprep.subr.mxu0 0.0
        %1812 = vmatpush1.msra.mxu0 0.0
        %1813 = vmatprep.subr.mxu0 0.0
        %1814 = vmatpush1.msra.mxu0 0.0
        %1815 = vmatprep.subr.mxu0 0.0
        %1816 = vmatpush1.msra.mxu0 0.0
        %1817 = vmatprep.subr.mxu0 0.0
        %1818 = vmatpush1.msra.mxu0 0.0
        %1819 = vmatprep.subr.mxu0 0.0
        %1820 = vmatpush1.msra.mxu0 0.0
        %1821 = vmatprep.subr.mxu0 0.0
        %1822 = vmatpush1.msra.mxu0 0.0
        %1823 = vmatprep.subr.mxu0 0.0
        %1824 = vmatpush1.msra.mxu0 0.0
        %1825 = vmatprep.subr.mxu0 0.0
        %1826 = vmatpush1.msra.mxu0 0.0
        %1827 = vmatprep.subr.mxu0 0.0
        %1828 = vmatpush1.msra.mxu0 0.0
        %1829 = vmatprep.subr.mxu0 0.0
        %1830 = vmatpush1.msra.mxu0 0.0
        %1831 = vmatprep.subr.mxu0 0.0
        %1832 = vmatpush1.msra.mxu0 0.0
        %1833 = vmatprep.subr.mxu0 0.0
        %1834 = vmatpush1.msra.mxu0 0.0
        %1835 = vmatprep.subr.mxu0 0.0
        %1836 = vmatpush1.msra.mxu0 0.0
        %1837 = vmatprep.subr.mxu0 0.0
        %1838 = vmatpush1.msra.mxu0 0.0
        %1839 = vmatprep.subr.mxu0 0.0
        %1840 = vmatpush1.msra.mxu0 0.0
        %1841 = vmatprep.subr.mxu0 0.0
        %1842 = vmatpush1.msra.mxu0 0.0
        %1843 = vmatprep.subr.mxu0 0.0
        %1844 = vmatpush1.msra.mxu0 0.0
        %1845 = vmatprep.mubr.f32.mxu0 0.0
        %1846 = vmatmul.mubr.f32.gmra.mrb[0].mxu0 %v1761
        %v1847 = vpop.f32.mrb[0].mxu0
        %v1848 = vadd.f32 0.0, %v1847
        %v1849 = vpop.f32.mrb[0].mxu0
        %1850 = vmatprep.mubr.f32.mxu0 0.0
        %1851 = vmatmul.mubr.f32.gmra.mrb[0].mxu0 %v1764
        %v1852 = vpop.f32.mrb[0].mxu0
        %v1853 = vadd.f32 0.0, %v1852
        %v1854 = vpop.f32.mrb[0].mxu0
        %1855 = vmatprep.mubr.f32.mxu0 0.0
        %1856 = vmatmul.mubr.f32.gmra.mrb[0].mxu0 %v1767
        %v1857 = vpop.f32.mrb[0].mxu0
        %v1858 = vadd.f32 0.0, %v1857
        %v1859 = vpop.f32.mrb[0].mxu0
        %1860 = vmatprep.mubr.f32.mxu0 0.0
        %1861 = vmatmul.mubr.f32.gmra.mrb[0].mxu0 %v1770
        %v1862 = vpop.f32.mrb[0].mxu0
        %v1863 = vadd.f32 0.0, %v1862
        %v1864 = vpop.f32.mrb[0].mxu0
        %1865 = vmatprep.mubr.f32.mxu0 0.0
        %1866 = vmatmul.mubr.f32.gmra.mrb[0].mxu0 %v1773
        %v1867 = vpop.f32.mrb[0].mxu0
        %v1868 = vadd.f32 0.0, %v1867
        %v1869 = vpop.f32.mrb[0].mxu0
        %1870 = vmatprep.mubr.f32.mxu0 0.0
        %1871 = vmatmul.mubr.f32.gmra.mrb[0].mxu0 %v1776
        %v1872 = vpop.f32.mrb[0].mxu0
        %v1873 = vadd.f32 0.0, %v1872
        %v1874 = vpop.f32.mrb[0].mxu0
        %1875 = vmatprep.mubr.f32.mxu0 0.0
        %1876 = vmatmul.mubr.f32.gmra.mrb[0].mxu0 %v1779
        %v1877 = vpop.f32.mrb[0].mxu0
        %v1878 = vadd.f32 0.0, %v1877
        %v1879 = vpop.f32.mrb[0].mxu0
        %1880 = vdwg.mxu0
        %v1881 = vadd.f32 %v1741, %v1848
        %v1882 = vadd.f32 %v1742, %v1853
        %v1883 = vadd.f32 %v1743, %v1858
        %v1884 = vadd.f32 %v1744, %v1863
        %v1885 = vadd.f32 %v1745, %v1868
        %v1886 = vadd.f32 %v1746, %v1873
        %v1887 = vadd.f32 %v1747, %v1878
        %v1888 = vld [vmem:[%s1607 + $0x2] sm:$0xff]
        %v1889 = vld [vmem:[%s1607 + $0x12] sm:$0xff]
        %v1890 = vld [vmem:[%s1607 + $0x22] sm:$0xff]
        %v1891 = vld [vmem:[%s1607 + $0x32] sm:$0xff]
        %v1892 = vld [vmem:[%s1607 + $0x42] sm:$0xff]
        %v1893 = vld [vmem:[%s1607 + $0x52] sm:$0xff]
        %v1894 = vld [vmem:[%s1607 + $0x62] sm:$0xff]
        %s1895 = scalar_lea.vmem [#allocation6], 320
        %v1896 = vld [vmem:[%s1895] sm:$0xff]
        %v1897 = vld [vmem:[%s1895 + $0x8] sm:$0xff]
        %v1898 = vld [vmem:[%s1895 + $0x10] sm:$0xff]
        %v1899 = vld [vmem:[%s1895 + $0x18] sm:$0xff]
        %v1901 = vsel %vm472, %v1888, 0
        %v1904 = vsel %vm472, %v1889, 0
        %v1907 = vsel %vm472, %v1890, 0
        %v1910 = vsel %vm472, %v1891, 0
        %v1913 = vsel %vm472, %v1892, 0
        %v1916 = vsel %vm472, %v1893, 0
        %v1919 = vsel %vm472, %v1894, 0
        %1921 = vmatprep.subr.mxu0 0.0
        %1922 = vmatpush1.msra.mxu0 %v1896
        %1923 = vmatprep.subr.mxu0 0.0
        %1924 = vmatpush1.msra.mxu0 %v1897
        %1925 = vmatprep.subr.mxu0 0.0
        %1926 = vmatpush1.msra.mxu0 %v1898
        %1927 = vmatprep.subr.mxu0 0.0
        %1928 = vmatpush1.msra.mxu0 %v1899
        %1929 = vmatprep.subr.mxu0 0.0
        %1930 = vmatpush1.msra.mxu0 0.0
        %1931 = vmatprep.subr.mxu0 0.0
        %1932 = vmatpush1.msra.mxu0 0.0
        %1933 = vmatprep.subr.mxu0 0.0
        %1934 = vmatpush1.msra.mxu0 0.0
        %1935 = vmatprep.subr.mxu0 0.0
        %1936 = vmatpush1.msra.mxu0 0.0
        %1937 = vmatprep.subr.mxu0 0.0
        %1938 = vmatpush1.msra.mxu0 0.0
        %1939 = vmatprep.subr.mxu0 0.0
        %1940 = vmatpush1.msra.mxu0 0.0
        %1941 = vmatprep.subr.mxu0 0.0
        %1942 = vmatpush1.msra.mxu0 0.0
        %1943 = vmatprep.subr.mxu0 0.0
        %1944 = vmatpush1.msra.mxu0 0.0
        %1945 = vmatprep.subr.mxu0 0.0
        %1946 = vmatpush1.msra.mxu0 0.0
        %1947 = vmatprep.subr.mxu0 0.0
        %1948 = vmatpush1.msra.mxu0 0.0
        %1949 = vmatprep.subr.mxu0 0.0
        %1950 = vmatpush1.msra.mxu0 0.0
        %1951 = vmatprep.subr.mxu0 0.0
        %1952 = vmatpush1.msra.mxu0 0.0
        %1953 = vmatprep.subr.mxu0 0.0
        %1954 = vmatpush1.msra.mxu0 0.0
        %1955 = vmatprep.subr.mxu0 0.0
        %1956 = vmatpush1.msra.mxu0 0.0
        %1957 = vmatprep.subr.mxu0 0.0
        %1958 = vmatpush1.msra.mxu0 0.0
        %1959 = vmatprep.subr.mxu0 0.0
        %1960 = vmatpush1.msra.mxu0 0.0
        %1961 = vmatprep.subr.mxu0 0.0
        %1962 = vmatpush1.msra.mxu0 0.0
        %1963 = vmatprep.subr.mxu0 0.0
        %1964 = vmatpush1.msra.mxu0 0.0
        %1965 = vmatprep.subr.mxu0 0.0
        %1966 = vmatpush1.msra.mxu0 0.0
        %1967 = vmatprep.subr.mxu0 0.0
        %1968 = vmatpush1.msra.mxu0 0.0
        %1969 = vmatprep.subr.mxu0 0.0
        %1970 = vmatpush1.msra.mxu0 0.0
        %1971 = vmatprep.subr.mxu0 0.0
        %1972 = vmatpush1.msra.mxu0 0.0
        %1973 = vmatprep.subr.mxu0 0.0
        %1974 = vmatpush1.msra.mxu0 0.0
        %1975 = vmatprep.subr.mxu0 0.0
        %1976 = vmatpush1.msra.mxu0 0.0
        %1977 = vmatprep.subr.mxu0 0.0
        %1978 = vmatpush1.msra.mxu0 0.0
        %1979 = vmatprep.subr.mxu0 0.0
        %1980 = vmatpush1.msra.mxu0 0.0
        %1981 = vmatprep.subr.mxu0 0.0
        %1982 = vmatpush1.msra.mxu0 0.0
        %1983 = vmatprep.subr.mxu0 0.0
        %1984 = vmatpush1.msra.mxu0 0.0
        %1985 = vmatprep.mubr.f32.mxu0 0.0
        %1986 = vmatmul.mubr.f32.gmra.mrb[0].mxu0 %v1901
        %v1987 = vpop.f32.mrb[0].mxu0
        %v1988 = vadd.f32 0.0, %v1987
        %v1989 = vpop.f32.mrb[0].mxu0
        %1990 = vmatprep.mubr.f32.mxu0 0.0
        %1991 = vmatmul.mubr.f32.gmra.mrb[0].mxu0 %v1904
        %v1992 = vpop.f32.mrb[0].mxu0
        %v1993 = vadd.f32 0.0, %v1992
        %v1994 = vpop.f32.mrb[0].mxu0
        %1995 = vmatprep.mubr.f32.mxu0 0.0
        %1996 = vmatmul.mubr.f32.gmra.mrb[0].mxu0 %v1907
        %v1997 = vpop.f32.mrb[0].mxu0
        %v1998 = vadd.f32 0.0, %v1997
        %v1999 = vpop.f32.mrb[0].mxu0
        %2000 = vmatprep.mubr.f32.mxu0 0.0
        %2001 = vmatmul.mubr.f32.gmra.mrb[0].mxu0 %v1910
        %v2002 = vpop.f32.mrb[0].mxu0
        %v2003 = vadd.f32 0.0, %v2002
        %v2004 = vpop.f32.mrb[0].mxu0
        %2005 = vmatprep.mubr.f32.mxu0 0.0
        %2006 = vmatmul.mubr.f32.gmra.mrb[0].mxu0 %v1913
        %v2007 = vpop.f32.mrb[0].mxu0
        %v2008 = vadd.f32 0.0, %v2007
        %v2009 = vpop.f32.mrb[0].mxu0
        %2010 = vmatprep.mubr.f32.mxu0 0.0
        %2011 = vmatmul.mubr.f32.gmra.mrb[0].mxu0 %v1916
        %v2012 = vpop.f32.mrb[0].mxu0
        %v2013 = vadd.f32 0.0, %v2012
        %v2014 = vpop.f32.mrb[0].mxu0
        %2015 = vmatprep.mubr.f32.mxu0 0.0
        %2016 = vmatmul.mubr.f32.gmra.mrb[0].mxu0 %v1919
        %v2017 = vpop.f32.mrb[0].mxu0
        %v2018 = vadd.f32 0.0, %v2017
        %v2019 = vpop.f32.mrb[0].mxu0
        %2020 = vdwg.mxu0
        %v2021 = vadd.f32 %v1881, %v1988
        %v2022 = vadd.f32 %v1882, %v1993
        %v2023 = vadd.f32 %v1883, %v1998
        %v2024 = vadd.f32 %v1884, %v2003
        %v2025 = vadd.f32 %v1885, %v2008
        %v2026 = vadd.f32 %v1886, %v2013
        %v2027 = vadd.f32 %v1887, %v2018
        %v2028 = vld [vmem:[%s1607 + $0x3] sm:$0xff]
        %v2029 = vld [vmem:[%s1607 + $0x13] sm:$0xff]
        %v2030 = vld [vmem:[%s1607 + $0x23] sm:$0xff]
        %v2031 = vld [vmem:[%s1607 + $0x33] sm:$0xff]
        %v2032 = vld [vmem:[%s1607 + $0x43] sm:$0xff]
        %v2033 = vld [vmem:[%s1607 + $0x53] sm:$0xff]
        %v2034 = vld [vmem:[%s1607 + $0x63] sm:$0xff]
        %s2035 = scalar_lea.vmem [#allocation6], 352
        %v2036 = vld [vmem:[%s2035] sm:$0xff]
        %v2037 = vld [vmem:[%s2035 + $0x8] sm:$0xff]
        %v2038 = vld [vmem:[%s2035 + $0x10] sm:$0xff]
        %v2039 = vld [vmem:[%s2035 + $0x18] sm:$0xff]
        %v2041 = vsel %vm472, %v2028, 0
        %v2044 = vsel %vm472, %v2029, 0
        %v2047 = vsel %vm472, %v2030, 0
        %v2050 = vsel %vm472, %v2031, 0
        %v2053 = vsel %vm472, %v2032, 0
        %v2056 = vsel %vm472, %v2033, 0
        %v2059 = vsel %vm472, %v2034, 0
        %2061 = vmatprep.subr.mxu0 0.0
        %2062 = vmatpush1.msra.mxu0 %v2036
        %2063 = vmatprep.subr.mxu0 0.0
        %2064 = vmatpush1.msra.mxu0 %v2037
        %2065 = vmatprep.subr.mxu0 0.0
        %2066 = vmatpush1.msra.mxu0 %v2038
        %2067 = vmatprep.subr.mxu0 0.0
        %2068 = vmatpush1.msra.mxu0 %v2039
        %2069 = vmatprep.subr.mxu0 0.0
        %2070 = vmatpush1.msra.mxu0 0.0
        %2071 = vmatprep.subr.mxu0 0.0
        %2072 = vmatpush1.msra.mxu0 0.0
        %2073 = vmatprep.subr.mxu0 0.0
        %2074 = vmatpush1.msra.mxu0 0.0
        %2075 = vmatprep.subr.mxu0 0.0
        %2076 = vmatpush1.msra.mxu0 0.0
        %2077 = vmatprep.subr.mxu0 0.0
        %2078 = vmatpush1.msra.mxu0 0.0
        %2079 = vmatprep.subr.mxu0 0.0
        %2080 = vmatpush1.msra.mxu0 0.0
        %2081 = vmatprep.subr.mxu0 0.0
        %2082 = vmatpush1.msra.mxu0 0.0
        %2083 = vmatprep.subr.mxu0 0.0
        %2084 = vmatpush1.msra.mxu0 0.0
        %2085 = vmatprep.subr.mxu0 0.0
        %2086 = vmatpush1.msra.mxu0 0.0
        %2087 = vmatprep.subr.mxu0 0.0
        %2088 = vmatpush1.msra.mxu0 0.0
        %2089 = vmatprep.subr.mxu0 0.0
        %2090 = vmatpush1.msra.mxu0 0.0
        %2091 = vmatprep.subr.mxu0 0.0
        %2092 = vmatpush1.msra.mxu0 0.0
        %2093 = vmatprep.subr.mxu0 0.0
        %2094 = vmatpush1.msra.mxu0 0.0
        %2095 = vmatprep.subr.mxu0 0.0
        %2096 = vmatpush1.msra.mxu0 0.0
        %2097 = vmatprep.subr.mxu0 0.0
        %2098 = vmatpush1.msra.mxu0 0.0
        %2099 = vmatprep.subr.mxu0 0.0
        %2100 = vmatpush1.msra.mxu0 0.0
        %2101 = vmatprep.subr.mxu0 0.0
        %2102 = vmatpush1.msra.mxu0 0.0
        %2103 = vmatprep.subr.mxu0 0.0
        %2104 = vmatpush1.msra.mxu0 0.0
        %2105 = vmatprep.subr.mxu0 0.0
        %2106 = vmatpush1.msra.mxu0 0.0
        %2107 = vmatprep.subr.mxu0 0.0
        %2108 = vmatpush1.msra.mxu0 0.0
        %2109 = vmatprep.subr.mxu0 0.0
        %2110 = vmatpush1.msra.mxu0 0.0
        %2111 = vmatprep.subr.mxu0 0.0
        %2112 = vmatpush1.msra.mxu0 0.0
        %2113 = vmatprep.subr.mxu0 0.0
        %2114 = vmatpush1.msra.mxu0 0.0
        %2115 = vmatprep.subr.mxu0 0.0
        %2116 = vmatpush1.msra.mxu0 0.0
        %2117 = vmatprep.subr.mxu0 0.0
        %2118 = vmatpush1.msra.mxu0 0.0
        %2119 = vmatprep.subr.mxu0 0.0
        %2120 = vmatpush1.msra.mxu0 0.0
        %2121 = vmatprep.subr.mxu0 0.0
        %2122 = vmatpush1.msra.mxu0 0.0
        %2123 = vmatprep.subr.mxu0 0.0
        %2124 = vmatpush1.msra.mxu0 0.0
        %2125 = vmatprep.mubr.f32.mxu0 0.0
        %2126 = vmatmul.mubr.f32.gmra.mrb[0].mxu0 %v2041
        %v2127 = vpop.f32.mrb[0].mxu0
        %v2128 = vadd.f32 0.0, %v2127
        %v2129 = vpop.f32.mrb[0].mxu0
        %2130 = vmatprep.mubr.f32.mxu0 0.0
        %2131 = vmatmul.mubr.f32.gmra.mrb[0].mxu0 %v2044
        %v2132 = vpop.f32.mrb[0].mxu0
        %v2133 = vadd.f32 0.0, %v2132
        %v2134 = vpop.f32.mrb[0].mxu0
        %2135 = vmatprep.mubr.f32.mxu0 0.0
        %2136 = vmatmul.mubr.f32.gmra.mrb[0].mxu0 %v2047
        %v2137 = vpop.f32.mrb[0].mxu0
        %v2138 = vadd.f32 0.0, %v2137
        %v2139 = vpop.f32.mrb[0].mxu0
        %2140 = vmatprep.mubr.f32.mxu0 0.0
        %2141 = vmatmul.mubr.f32.gmra.mrb[0].mxu0 %v2050
        %v2142 = vpop.f32.mrb[0].mxu0
        %v2143 = vadd.f32 0.0, %v2142
        %v2144 = vpop.f32.mrb[0].mxu0
        %2145 = vmatprep.mubr.f32.mxu0 0.0
        %2146 = vmatmul.mubr.f32.gmra.mrb[0].mxu0 %v2053
        %v2147 = vpop.f32.mrb[0].mxu0
        %v2148 = vadd.f32 0.0, %v2147
        %v2149 = vpop.f32.mrb[0].mxu0
        %2150 = vmatprep.mubr.f32.mxu0 0.0
        %2151 = vmatmul.mubr.f32.gmra.mrb[0].mxu0 %v2056
        %v2152 = vpop.f32.mrb[0].mxu0
        %v2153 = vadd.f32 0.0, %v2152
        %v2154 = vpop.f32.mrb[0].mxu0
        %2155 = vmatprep.mubr.f32.mxu0 0.0
        %2156 = vmatmul.mubr.f32.gmra.mrb[0].mxu0 %v2059
        %v2157 = vpop.f32.mrb[0].mxu0
        %v2158 = vadd.f32 0.0, %v2157
        %v2159 = vpop.f32.mrb[0].mxu0
        %2160 = vdwg.mxu0
        %v2161 = vadd.f32 %v2021, %v2128
        %v2162 = vadd.f32 %v2022, %v2133
        %v2163 = vadd.f32 %v2023, %v2138
        %v2164 = vadd.f32 %v2024, %v2143
        %v2165 = vadd.f32 %v2025, %v2148
        %v2166 = vadd.f32 %v2026, %v2153
        %v2167 = vadd.f32 %v2027, %v2158
        %s2168 = scalar_lea.vmem [#allocation2], 48
        %v2169 = vld [vmem:[%s2168] sm:$0xff]
        %v2170 = vld [vmem:[%s2168 + $0x10] sm:$0xff]
        %v2171 = vld [vmem:[%s2168 + $0x20] sm:$0xff]
        %v2172 = vld [vmem:[%s2168 + $0x30] sm:$0xff]
        %v2173 = vld [vmem:[%s2168 + $0x40] sm:$0xff]
        %v2174 = vld [vmem:[%s2168 + $0x50] sm:$0xff]
        %v2175 = vld [vmem:[%s2168 + $0x60] sm:$0xff]
        %s2176 = scalar_lea.vmem [#allocation6], 384
        %v2177 = vld [vmem:[%s2176] sm:$0xff]
        %v2178 = vld [vmem:[%s2176 + $0x8] sm:$0xff]
        %v2179 = vld [vmem:[%s2176 + $0x10] sm:$0xff]
        %v2180 = vld [vmem:[%s2176 + $0x18] sm:$0xff]
        %v2182 = vsel %vm472, %v2169, 0
        %v2185 = vsel %vm472, %v2170, 0
        %v2188 = vsel %vm472, %v2171, 0
        %v2191 = vsel %vm472, %v2172, 0
        %v2194 = vsel %vm472, %v2173, 0
        %v2197 = vsel %vm472, %v2174, 0
        %v2200 = vsel %vm472, %v2175, 0
        %2202 = vmatprep.subr.mxu0 0.0
        %2203 = vmatpush1.msra.mxu0 %v2177
        %2204 = vmatprep.subr.mxu0 0.0
        %2205 = vmatpush1.msra.mxu0 %v2178
        %2206 = vmatprep.subr.mxu0 0.0
        %2207 = vmatpush1.msra.mxu0 %v2179
        %2208 = vmatprep.subr.mxu0 0.0
        %2209 = vmatpush1.msra.mxu0 %v2180
        %2210 = vmatprep.subr.mxu0 0.0
        %2211 = vmatpush1.msra.mxu0 0.0
        %2212 = vmatprep.subr.mxu0 0.0
        %2213 = vmatpush1.msra.mxu0 0.0
        %2214 = vmatprep.subr.mxu0 0.0
        %2215 = vmatpush1.msra.mxu0 0.0
        %2216 = vmatprep.subr.mxu0 0.0
        %2217 = vmatpush1.msra.mxu0 0.0
        %2218 = vmatprep.subr.mxu0 0.0
        %2219 = vmatpush1.msra.mxu0 0.0
        %2220 = vmatprep.subr.mxu0 0.0
        %2221 = vmatpush1.msra.mxu0 0.0
        %2222 = vmatprep.subr.mxu0 0.0
        %2223 = vmatpush1.msra.mxu0 0.0
        %2224 = vmatprep.subr.mxu0 0.0
        %2225 = vmatpush1.msra.mxu0 0.0
        %2226 = vmatprep.subr.mxu0 0.0
        %2227 = vmatpush1.msra.mxu0 0.0
        %2228 = vmatprep.subr.mxu0 0.0
        %2229 = vmatpush1.msra.mxu0 0.0
        %2230 = vmatprep.subr.mxu0 0.0
        %2231 = vmatpush1.msra.mxu0 0.0
        %2232 = vmatprep.subr.mxu0 0.0
        %2233 = vmatpush1.msra.mxu0 0.0
        %2234 = vmatprep.subr.mxu0 0.0
        %2235 = vmatpush1.msra.mxu0 0.0
        %2236 = vmatprep.subr.mxu0 0.0
        %2237 = vmatpush1.msra.mxu0 0.0
        %2238 = vmatprep.subr.mxu0 0.0
        %2239 = vmatpush1.msra.mxu0 0.0
        %2240 = vmatprep.subr.mxu0 0.0
        %2241 = vmatpush1.msra.mxu0 0.0
        %2242 = vmatprep.subr.mxu0 0.0
        %2243 = vmatpush1.msra.mxu0 0.0
        %2244 = vmatprep.subr.mxu0 0.0
        %2245 = vmatpush1.msra.mxu0 0.0
        %2246 = vmatprep.subr.mxu0 0.0
        %2247 = vmatpush1.msra.mxu0 0.0
        %2248 = vmatprep.subr.mxu0 0.0
        %2249 = vmatpush1.msra.mxu0 0.0
        %2250 = vmatprep.subr.mxu0 0.0
        %2251 = vmatpush1.msra.mxu0 0.0
        %2252 = vmatprep.subr.mxu0 0.0
        %2253 = vmatpush1.msra.mxu0 0.0
        %2254 = vmatprep.subr.mxu0 0.0
        %2255 = vmatpush1.msra.mxu0 0.0
        %2256 = vmatprep.subr.mxu0 0.0
        %2257 = vmatpush1.msra.mxu0 0.0
        %2258 = vmatprep.subr.mxu0 0.0
        %2259 = vmatpush1.msra.mxu0 0.0
        %2260 = vmatprep.subr.mxu0 0.0
        %2261 = vmatpush1.msra.mxu0 0.0
        %2262 = vmatprep.subr.mxu0 0.0
        %2263 = vmatpush1.msra.mxu0 0.0
        %2264 = vmatprep.subr.mxu0 0.0
        %2265 = vmatpush1.msra.mxu0 0.0
        %2266 = vmatprep.mubr.f32.mxu0 0.0
        %2267 = vmatmul.mubr.f32.gmra.mrb[0].mxu0 %v2182
        %v2268 = vpop.f32.mrb[0].mxu0
        %v2269 = vadd.f32 0.0, %v2268
        %v2270 = vpop.f32.mrb[0].mxu0
        %2271 = vmatprep.mubr.f32.mxu0 0.0
        %2272 = vmatmul.mubr.f32.gmra.mrb[0].mxu0 %v2185
        %v2273 = vpop.f32.mrb[0].mxu0
        %v2274 = vadd.f32 0.0, %v2273
        %v2275 = vpop.f32.mrb[0].mxu0
        %2276 = vmatprep.mubr.f32.mxu0 0.0
        %2277 = vmatmul.mubr.f32.gmra.mrb[0].mxu0 %v2188
        %v2278 = vpop.f32.mrb[0].mxu0
        %v2279 = vadd.f32 0.0, %v2278
        %v2280 = vpop.f32.mrb[0].mxu0
        %2281 = vmatprep.mubr.f32.mxu0 0.0
        %2282 = vmatmul.mubr.f32.gmra.mrb[0].mxu0 %v2191
        %v2283 = vpop.f32.mrb[0].mxu0
        %v2284 = vadd.f32 0.0, %v2283
        %v2285 = vpop.f32.mrb[0].mxu0
        %2286 = vmatprep.mubr.f32.mxu0 0.0
        %2287 = vmatmul.mubr.f32.gmra.mrb[0].mxu0 %v2194
        %v2288 = vpop.f32.mrb[0].mxu0
        %v2289 = vadd.f32 0.0, %v2288
        %v2290 = vpop.f32.mrb[0].mxu0
        %2291 = vmatprep.mubr.f32.mxu0 0.0
        %2292 = vmatmul.mubr.f32.gmra.mrb[0].mxu0 %v2197
        %v2293 = vpop.f32.mrb[0].mxu0
        %v2294 = vadd.f32 0.0, %v2293
        %v2295 = vpop.f32.mrb[0].mxu0
        %2296 = vmatprep.mubr.f32.mxu0 0.0
        %2297 = vmatmul.mubr.f32.gmra.mrb[0].mxu0 %v2200
        %v2298 = vpop.f32.mrb[0].mxu0
        %v2299 = vadd.f32 0.0, %v2298
        %v2300 = vpop.f32.mrb[0].mxu0
        %2301 = vdwg.mxu0
        %v2302 = vadd.f32 %v2161, %v2269
        %v2303 = vadd.f32 %v2162, %v2274
        %v2304 = vadd.f32 %v2163, %v2279
        %v2305 = vadd.f32 %v2164, %v2284
        %v2306 = vadd.f32 %v2165, %v2289
        %v2307 = vadd.f32 %v2166, %v2294
        %v2308 = vadd.f32 %v2167, %v2299
        %v2309 = vld [vmem:[%s2168 + $0x1] sm:$0xff]
        %v2310 = vld [vmem:[%s2168 + $0x11] sm:$0xff]
        %v2311 = vld [vmem:[%s2168 + $0x21] sm:$0xff]
        %v2312 = vld [vmem:[%s2168 + $0x31] sm:$0xff]
        %v2313 = vld [vmem:[%s2168 + $0x41] sm:$0xff]
        %v2314 = vld [vmem:[%s2168 + $0x51] sm:$0xff]
        %v2315 = vld [vmem:[%s2168 + $0x61] sm:$0xff]
        %s2316 = scalar_lea.vmem [#allocation6], 416
        %v2317 = vld [vmem:[%s2316] sm:$0xff]
        %v2318 = vld [vmem:[%s2316 + $0x8] sm:$0xff]
        %v2319 = vld [vmem:[%s2316 + $0x10] sm:$0xff]
        %v2320 = vld [vmem:[%s2316 + $0x18] sm:$0xff]
        %v2322 = vsel %vm472, %v2309, 0
        %v2325 = vsel %vm472, %v2310, 0
        %v2328 = vsel %vm472, %v2311, 0
        %v2331 = vsel %vm472, %v2312, 0
        %v2334 = vsel %vm472, %v2313, 0
        %v2337 = vsel %vm472, %v2314, 0
        %v2340 = vsel %vm472, %v2315, 0
        %2342 = vmatprep.subr.mxu0 0.0
        %2343 = vmatpush1.msra.mxu0 %v2317
        %2344 = vmatprep.subr.mxu0 0.0
        %2345 = vmatpush1.msra.mxu0 %v2318
        %2346 = vmatprep.subr.mxu0 0.0
        %2347 = vmatpush1.msra.mxu0 %v2319
        %2348 = vmatprep.subr.mxu0 0.0
        %2349 = vmatpush1.msra.mxu0 %v2320
        %2350 = vmatprep.subr.mxu0 0.0
        %2351 = vmatpush1.msra.mxu0 0.0
        %2352 = vmatprep.subr.mxu0 0.0
        %2353 = vmatpush1.msra.mxu0 0.0
        %2354 = vmatprep.subr.mxu0 0.0
        %2355 = vmatpush1.msra.mxu0 0.0
        %2356 = vmatprep.subr.mxu0 0.0
        %2357 = vmatpush1.msra.mxu0 0.0
        %2358 = vmatprep.subr.mxu0 0.0
        %2359 = vmatpush1.msra.mxu0 0.0
        %2360 = vmatprep.subr.mxu0 0.0
        %2361 = vmatpush1.msra.mxu0 0.0
        %2362 = vmatprep.subr.mxu0 0.0
        %2363 = vmatpush1.msra.mxu0 0.0
        %2364 = vmatprep.subr.mxu0 0.0
        %2365 = vmatpush1.msra.mxu0 0.0
        %2366 = vmatprep.subr.mxu0 0.0
        %2367 = vmatpush1.msra.mxu0 0.0
        %2368 = vmatprep.subr.mxu0 0.0
        %2369 = vmatpush1.msra.mxu0 0.0
        %2370 = vmatprep.subr.mxu0 0.0
        %2371 = vmatpush1.msra.mxu0 0.0
        %2372 = vmatprep.subr.mxu0 0.0
        %2373 = vmatpush1.msra.mxu0 0.0
        %2374 = vmatprep.subr.mxu0 0.0
        %2375 = vmatpush1.msra.mxu0 0.0
        %2376 = vmatprep.subr.mxu0 0.0
        %2377 = vmatpush1.msra.mxu0 0.0
        %2378 = vmatprep.subr.mxu0 0.0
        %2379 = vmatpush1.msra.mxu0 0.0
        %2380 = vmatprep.subr.mxu0 0.0
        %2381 = vmatpush1.msra.mxu0 0.0
        %2382 = vmatprep.subr.mxu0 0.0
        %2383 = vmatpush1.msra.mxu0 0.0
        %2384 = vmatprep.subr.mxu0 0.0
        %2385 = vmatpush1.msra.mxu0 0.0
        %2386 = vmatprep.subr.mxu0 0.0
        %2387 = vmatpush1.msra.mxu0 0.0
        %2388 = vmatprep.subr.mxu0 0.0
        %2389 = vmatpush1.msra.mxu0 0.0
        %2390 = vmatprep.subr.mxu0 0.0
        %2391 = vmatpush1.msra.mxu0 0.0
        %2392 = vmatprep.subr.mxu0 0.0
        %2393 = vmatpush1.msra.mxu0 0.0
        %2394 = vmatprep.subr.mxu0 0.0
        %2395 = vmatpush1.msra.mxu0 0.0
        %2396 = vmatprep.subr.mxu0 0.0
        %2397 = vmatpush1.msra.mxu0 0.0
        %2398 = vmatprep.subr.mxu0 0.0
        %2399 = vmatpush1.msra.mxu0 0.0
        %2400 = vmatprep.subr.mxu0 0.0
        %2401 = vmatpush1.msra.mxu0 0.0
        %2402 = vmatprep.subr.mxu0 0.0
        %2403 = vmatpush1.msra.mxu0 0.0
        %2404 = vmatprep.subr.mxu0 0.0
        %2405 = vmatpush1.msra.mxu0 0.0
        %2406 = vmatprep.mubr.f32.mxu0 0.0
        %2407 = vmatmul.mubr.f32.gmra.mrb[0].mxu0 %v2322
        %v2408 = vpop.f32.mrb[0].mxu0
        %v2409 = vadd.f32 0.0, %v2408
        %v2410 = vpop.f32.mrb[0].mxu0
        %2411 = vmatprep.mubr.f32.mxu0 0.0
        %2412 = vmatmul.mubr.f32.gmra.mrb[0].mxu0 %v2325
        %v2413 = vpop.f32.mrb[0].mxu0
        %v2414 = vadd.f32 0.0, %v2413
        %v2415 = vpop.f32.mrb[0].mxu0
        %2416 = vmatprep.mubr.f32.mxu0 0.0
        %2417 = vmatmul.mubr.f32.gmra.mrb[0].mxu0 %v2328
        %v2418 = vpop.f32.mrb[0].mxu0
        %v2419 = vadd.f32 0.0, %v2418
        %v2420 = vpop.f32.mrb[0].mxu0
        %2421 = vmatprep.mubr.f32.mxu0 0.0
        %2422 = vmatmul.mubr.f32.gmra.mrb[0].mxu0 %v2331
        %v2423 = vpop.f32.mrb[0].mxu0
        %v2424 = vadd.f32 0.0, %v2423
        %v2425 = vpop.f32.mrb[0].mxu0
        %2426 = vmatprep.mubr.f32.mxu0 0.0
        %2427 = vmatmul.mubr.f32.gmra.mrb[0].mxu0 %v2334
        %v2428 = vpop.f32.mrb[0].mxu0
        %v2429 = vadd.f32 0.0, %v2428
        %v2430 = vpop.f32.mrb[0].mxu0
        %2431 = vmatprep.mubr.f32.mxu0 0.0
        %2432 = vmatmul.mubr.f32.gmra.mrb[0].mxu0 %v2337
        %v2433 = vpop.f32.mrb[0].mxu0
        %v2434 = vadd.f32 0.0, %v2433
        %v2435 = vpop.f32.mrb[0].mxu0
        %2436 = vmatprep.mubr.f32.mxu0 0.0
        %2437 = vmatmul.mubr.f32.gmra.mrb[0].mxu0 %v2340
        %v2438 = vpop.f32.mrb[0].mxu0
        %v2439 = vadd.f32 0.0, %v2438
        %v2440 = vpop.f32.mrb[0].mxu0
        %2441 = vdwg.mxu0
        %v2442 = vadd.f32 %v2302, %v2409
        %v2443 = vadd.f32 %v2303, %v2414
        %v2444 = vadd.f32 %v2304, %v2419
        %v2445 = vadd.f32 %v2305, %v2424
        %v2446 = vadd.f32 %v2306, %v2429
        %v2447 = vadd.f32 %v2307, %v2434
        %v2448 = vadd.f32 %v2308, %v2439
        %v2449 = vld [vmem:[%s2168 + $0x2] sm:$0xff]
        %v2450 = vld [vmem:[%s2168 + $0x12] sm:$0xff]
        %v2451 = vld [vmem:[%s2168 + $0x22] sm:$0xff]
        %v2452 = vld [vmem:[%s2168 + $0x32] sm:$0xff]
        %v2453 = vld [vmem:[%s2168 + $0x42] sm:$0xff]
        %v2454 = vld [vmem:[%s2168 + $0x52] sm:$0xff]
        %v2455 = vld [vmem:[%s2168 + $0x62] sm:$0xff]
        %s2456 = scalar_lea.vmem [#allocation6], 448
        %v2457 = vld [vmem:[%s2456] sm:$0xff]
        %v2458 = vld [vmem:[%s2456 + $0x8] sm:$0xff]
        %v2459 = vld [vmem:[%s2456 + $0x10] sm:$0xff]
        %v2460 = vld [vmem:[%s2456 + $0x18] sm:$0xff]
        %v2462 = vsel %vm472, %v2449, 0
        %v2465 = vsel %vm472, %v2450, 0
        %v2468 = vsel %vm472, %v2451, 0
        %v2471 = vsel %vm472, %v2452, 0
        %v2474 = vsel %vm472, %v2453, 0
        %v2477 = vsel %vm472, %v2454, 0
        %v2480 = vsel %vm472, %v2455, 0
        %2482 = vmatprep.subr.mxu0 0.0
        %2483 = vmatpush1.msra.mxu0 %v2457
        %2484 = vmatprep.subr.mxu0 0.0
        %2485 = vmatpush1.msra.mxu0 %v2458
        %2486 = vmatprep.subr.mxu0 0.0
        %2487 = vmatpush1.msra.mxu0 %v2459
        %2488 = vmatprep.subr.mxu0 0.0
        %2489 = vmatpush1.msra.mxu0 %v2460
        %2490 = vmatprep.subr.mxu0 0.0
        %2491 = vmatpush1.msra.mxu0 0.0
        %2492 = vmatprep.subr.mxu0 0.0
        %2493 = vmatpush1.msra.mxu0 0.0
        %2494 = vmatprep.subr.mxu0 0.0
        %2495 = vmatpush1.msra.mxu0 0.0
        %2496 = vmatprep.subr.mxu0 0.0
        %2497 = vmatpush1.msra.mxu0 0.0
        %2498 = vmatprep.subr.mxu0 0.0
        %2499 = vmatpush1.msra.mxu0 0.0
        %2500 = vmatprep.subr.mxu0 0.0
        %2501 = vmatpush1.msra.mxu0 0.0
        %2502 = vmatprep.subr.mxu0 0.0
        %2503 = vmatpush1.msra.mxu0 0.0
        %2504 = vmatprep.subr.mxu0 0.0
        %2505 = vmatpush1.msra.mxu0 0.0
        %2506 = vmatprep.subr.mxu0 0.0
        %2507 = vmatpush1.msra.mxu0 0.0
        %2508 = vmatprep.subr.mxu0 0.0
        %2509 = vmatpush1.msra.mxu0 0.0
        %2510 = vmatprep.subr.mxu0 0.0
        %2511 = vmatpush1.msra.mxu0 0.0
        %2512 = vmatprep.subr.mxu0 0.0
        %2513 = vmatpush1.msra.mxu0 0.0
        %2514 = vmatprep.subr.mxu0 0.0
        %2515 = vmatpush1.msra.mxu0 0.0
        %2516 = vmatprep.subr.mxu0 0.0
        %2517 = vmatpush1.msra.mxu0 0.0
        %2518 = vmatprep.subr.mxu0 0.0
        %2519 = vmatpush1.msra.mxu0 0.0
        %2520 = vmatprep.subr.mxu0 0.0
        %2521 = vmatpush1.msra.mxu0 0.0
        %2522 = vmatprep.subr.mxu0 0.0
        %2523 = vmatpush1.msra.mxu0 0.0
        %2524 = vmatprep.subr.mxu0 0.0
        %2525 = vmatpush1.msra.mxu0 0.0
        %2526 = vmatprep.subr.mxu0 0.0
        %2527 = vmatpush1.msra.mxu0 0.0
        %2528 = vmatprep.subr.mxu0 0.0
        %2529 = vmatpush1.msra.mxu0 0.0
        %2530 = vmatprep.subr.mxu0 0.0
        %2531 = vmatpush1.msra.mxu0 0.0
        %2532 = vmatprep.subr.mxu0 0.0
        %2533 = vmatpush1.msra.mxu0 0.0
        %2534 = vmatprep.subr.mxu0 0.0
        %2535 = vmatpush1.msra.mxu0 0.0
        %2536 = vmatprep.subr.mxu0 0.0
        %2537 = vmatpush1.msra.mxu0 0.0
        %2538 = vmatprep.subr.mxu0 0.0
        %2539 = vmatpush1.msra.mxu0 0.0
        %2540 = vmatprep.subr.mxu0 0.0
        %2541 = vmatpush1.msra.mxu0 0.0
        %2542 = vmatprep.subr.mxu0 0.0
        %2543 = vmatpush1.msra.mxu0 0.0
        %2544 = vmatprep.subr.mxu0 0.0
        %2545 = vmatpush1.msra.mxu0 0.0
        %2546 = vmatprep.mubr.f32.mxu0 0.0
        %2547 = vmatmul.mubr.f32.gmra.mrb[0].mxu0 %v2462
        %v2548 = vpop.f32.mrb[0].mxu0
        %v2549 = vadd.f32 0.0, %v2548
        %v2550 = vpop.f32.mrb[0].mxu0
        %2551 = vmatprep.mubr.f32.mxu0 0.0
        %2552 = vmatmul.mubr.f32.gmra.mrb[0].mxu0 %v2465
        %v2553 = vpop.f32.mrb[0].mxu0
        %v2554 = vadd.f32 0.0, %v2553
        %v2555 = vpop.f32.mrb[0].mxu0
        %2556 = vmatprep.mubr.f32.mxu0 0.0
        %2557 = vmatmul.mubr.f32.gmra.mrb[0].mxu0 %v2468
        %v2558 = vpop.f32.mrb[0].mxu0
        %v2559 = vadd.f32 0.0, %v2558
        %v2560 = vpop.f32.mrb[0].mxu0
        %2561 = vmatprep.mubr.f32.mxu0 0.0
        %2562 = vmatmul.mubr.f32.gmra.mrb[0].mxu0 %v2471
        %v2563 = vpop.f32.mrb[0].mxu0
        %v2564 = vadd.f32 0.0, %v2563
        %v2565 = vpop.f32.mrb[0].mxu0
        %2566 = vmatprep.mubr.f32.mxu0 0.0
        %2567 = vmatmul.mubr.f32.gmra.mrb[0].mxu0 %v2474
        %v2568 = vpop.f32.mrb[0].mxu0
        %v2569 = vadd.f32 0.0, %v2568
        %v2570 = vpop.f32.mrb[0].mxu0
        %2571 = vmatprep.mubr.f32.mxu0 0.0
        %2572 = vmatmul.mubr.f32.gmra.mrb[0].mxu0 %v2477
        %v2573 = vpop.f32.mrb[0].mxu0
        %v2574 = vadd.f32 0.0, %v2573
        %v2575 = vpop.f32.mrb[0].mxu0
        %2576 = vmatprep.mubr.f32.mxu0 0.0
        %2577 = vmatmul.mubr.f32.gmra.mrb[0].mxu0 %v2480
        %v2578 = vpop.f32.mrb[0].mxu0
        %v2579 = vadd.f32 0.0, %v2578
        %v2580 = vpop.f32.mrb[0].mxu0
        %2581 = vdwg.mxu0
        %v2582 = vadd.f32 %v2442, %v2549
        %v2583 = vadd.f32 %v2443, %v2554
        %v2584 = vadd.f32 %v2444, %v2559
        %v2585 = vadd.f32 %v2445, %v2564
        %v2586 = vadd.f32 %v2446, %v2569
        %v2587 = vadd.f32 %v2447, %v2574
        %v2588 = vadd.f32 %v2448, %v2579
        %v2589 = vld [vmem:[%s2168 + $0x3] sm:$0xff]
        %v2590 = vld [vmem:[%s2168 + $0x13] sm:$0xff]
        %v2591 = vld [vmem:[%s2168 + $0x23] sm:$0xff]
        %v2592 = vld [vmem:[%s2168 + $0x33] sm:$0xff]
        %v2593 = vld [vmem:[%s2168 + $0x43] sm:$0xff]
        %v2594 = vld [vmem:[%s2168 + $0x53] sm:$0xff]
        %v2595 = vld [vmem:[%s2168 + $0x63] sm:$0xff]
        %s2596 = scalar_lea.vmem [#allocation6], 480
        %v2597 = vld [vmem:[%s2596] sm:$0xff]
        %v2598 = vld [vmem:[%s2596 + $0x8] sm:$0xff]
        %v2599 = vld [vmem:[%s2596 + $0x10] sm:$0xff]
        %v2600 = vld [vmem:[%s2596 + $0x18] sm:$0xff]
        %v2602 = vsel %vm472, %v2589, 0
        %v2605 = vsel %vm472, %v2590, 0
        %v2608 = vsel %vm472, %v2591, 0
        %v2611 = vsel %vm472, %v2592, 0
        %v2614 = vsel %vm472, %v2593, 0
        %v2617 = vsel %vm472, %v2594, 0
        %v2620 = vsel %vm472, %v2595, 0
        %2622 = vmatprep.subr.mxu0 0.0
        %2623 = vmatpush1.msra.mxu0 %v2597
        %2624 = vmatprep.subr.mxu0 0.0
        %2625 = vmatpush1.msra.mxu0 %v2598
        %2626 = vmatprep.subr.mxu0 0.0
        %2627 = vmatpush1.msra.mxu0 %v2599
        %2628 = vmatprep.subr.mxu0 0.0
        %2629 = vmatpush1.msra.mxu0 %v2600
        %2630 = vmatprep.subr.mxu0 0.0
        %2631 = vmatpush1.msra.mxu0 0.0
        %2632 = vmatprep.subr.mxu0 0.0
        %2633 = vmatpush1.msra.mxu0 0.0
        %2634 = vmatprep.subr.mxu0 0.0
        %2635 = vmatpush1.msra.mxu0 0.0
        %2636 = vmatprep.subr.mxu0 0.0
        %2637 = vmatpush1.msra.mxu0 0.0
        %2638 = vmatprep.subr.mxu0 0.0
        %2639 = vmatpush1.msra.mxu0 0.0
        %2640 = vmatprep.subr.mxu0 0.0
        %2641 = vmatpush1.msra.mxu0 0.0
        %2642 = vmatprep.subr.mxu0 0.0
        %2643 = vmatpush1.msra.mxu0 0.0
        %2644 = vmatprep.subr.mxu0 0.0
        %2645 = vmatpush1.msra.mxu0 0.0
        %2646 = vmatprep.subr.mxu0 0.0
        %2647 = vmatpush1.msra.mxu0 0.0
        %2648 = vmatprep.subr.mxu0 0.0
        %2649 = vmatpush1.msra.mxu0 0.0
        %2650 = vmatprep.subr.mxu0 0.0
        %2651 = vmatpush1.msra.mxu0 0.0
        %2652 = vmatprep.subr.mxu0 0.0
        %2653 = vmatpush1.msra.mxu0 0.0
        %2654 = vmatprep.subr.mxu0 0.0
        %2655 = vmatpush1.msra.mxu0 0.0
        %2656 = vmatprep.subr.mxu0 0.0
        %2657 = vmatpush1.msra.mxu0 0.0
        %2658 = vmatprep.subr.mxu0 0.0
        %2659 = vmatpush1.msra.mxu0 0.0
        %2660 = vmatprep.subr.mxu0 0.0
        %2661 = vmatpush1.msra.mxu0 0.0
        %2662 = vmatprep.subr.mxu0 0.0
        %2663 = vmatpush1.msra.mxu0 0.0
        %2664 = vmatprep.subr.mxu0 0.0
        %2665 = vmatpush1.msra.mxu0 0.0
        %2666 = vmatprep.subr.mxu0 0.0
        %2667 = vmatpush1.msra.mxu0 0.0
        %2668 = vmatprep.subr.mxu0 0.0
        %2669 = vmatpush1.msra.mxu0 0.0
        %2670 = vmatprep.subr.mxu0 0.0
        %2671 = vmatpush1.msra.mxu0 0.0
        %2672 = vmatprep.subr.mxu0 0.0
        %2673 = vmatpush1.msra.mxu0 0.0
        %2674 = vmatprep.subr.mxu0 0.0
        %2675 = vmatpush1.msra.mxu0 0.0
        %2676 = vmatprep.subr.mxu0 0.0
        %2677 = vmatpush1.msra.mxu0 0.0
        %2678 = vmatprep.subr.mxu0 0.0
        %2679 = vmatpush1.msra.mxu0 0.0
        %2680 = vmatprep.subr.mxu0 0.0
        %2681 = vmatpush1.msra.mxu0 0.0
        %2682 = vmatprep.subr.mxu0 0.0
        %2683 = vmatpush1.msra.mxu0 0.0
        %2684 = vmatprep.subr.mxu0 0.0
        %2685 = vmatpush1.msra.mxu0 0.0
        %2686 = vmatprep.mubr.f32.mxu0 0.0
        %2687 = vmatmul.mubr.f32.gmra.mrb[0].mxu0 %v2602
        %v2688 = vpop.f32.mrb[0].mxu0
        %v2689 = vadd.f32 0.0, %v2688
        %v2690 = vpop.f32.mrb[0].mxu0
        %2691 = vmatprep.mubr.f32.mxu0 0.0
        %2692 = vmatmul.mubr.f32.gmra.mrb[0].mxu0 %v2605
        %v2693 = vpop.f32.mrb[0].mxu0
        %v2694 = vadd.f32 0.0, %v2693
        %v2695 = vpop.f32.mrb[0].mxu0
        %2696 = vmatprep.mubr.f32.mxu0 0.0
        %2697 = vmatmul.mubr.f32.gmra.mrb[0].mxu0 %v2608
        %v2698 = vpop.f32.mrb[0].mxu0
        %v2699 = vadd.f32 0.0, %v2698
        %v2700 = vpop.f32.mrb[0].mxu0
        %2701 = vmatprep.mubr.f32.mxu0 0.0
        %2702 = vmatmul.mubr.f32.gmra.mrb[0].mxu0 %v2611
        %v2703 = vpop.f32.mrb[0].mxu0
        %v2704 = vadd.f32 0.0, %v2703
        %v2705 = vpop.f32.mrb[0].mxu0
        %2706 = vmatprep.mubr.f32.mxu0 0.0
        %2707 = vmatmul.mubr.f32.gmra.mrb[0].mxu0 %v2614
        %v2708 = vpop.f32.mrb[0].mxu0
        %v2709 = vadd.f32 0.0, %v2708
        %v2710 = vpop.f32.mrb[0].mxu0
        %2711 = vmatprep.mubr.f32.mxu0 0.0
        %2712 = vmatmul.mubr.f32.gmra.mrb[0].mxu0 %v2617
        %v2713 = vpop.f32.mrb[0].mxu0
        %v2714 = vadd.f32 0.0, %v2713
        %v2715 = vpop.f32.mrb[0].mxu0
        %2716 = vmatprep.mubr.f32.mxu0 0.0
        %2717 = vmatmul.mubr.f32.gmra.mrb[0].mxu0 %v2620
        %v2718 = vpop.f32.mrb[0].mxu0
        %v2719 = vadd.f32 0.0, %v2718
        %v2720 = vpop.f32.mrb[0].mxu0
        %2721 = vdwg.mxu0
        %v2722 = vadd.f32 %v2582, %v2689
        %v2723 = vadd.f32 %v2583, %v2694
        %v2724 = vadd.f32 %v2584, %v2699
        %v2725 = vadd.f32 %v2585, %v2704
        %v2726 = vadd.f32 %v2586, %v2709
        %v2727 = vadd.f32 %v2587, %v2714
        %v2728 = vadd.f32 %v2588, %v2719
        %v2729 = vld [vmem:[%s4] sm:$0x1]
        %v2731 = vlaneseq
        %v2732 = vshrl.u32 %v2731, 7
        %v2733 = vsub.s32 0, %v2732
        %v2734 = vrot.slane %v2729, %v2733
        %v2736 = vadd.f32 %v2722, %v2734
        %v2737 = vadd.f32 %v2723, %v2734
        %v2738 = vadd.f32 %v2724, %v2734
        %v2739 = vadd.f32 %v2725, %v2734
        %v2740 = vadd.f32 %v2726, %v2734
        %v2741 = vadd.f32 %v2727, %v2734
        %v2742 = vadd.f32 %v2728, %v2734
        %2743 = vst [vmem:[%s288] sm:$0xff] %v2736
        %2744 = vst [vmem:[%s288 + $0x8] sm:$0xff] %v2737
        %2745 = vst [vmem:[%s288 + $0x10] sm:$0xff] %v2738
        %2746 = vst [vmem:[%s288 + $0x18] sm:$0xff] %v2739
        %2747 = vst [vmem:[%s288 + $0x20] sm:$0xff] %v2740
        %2748 = vst [vmem:[%s288 + $0x28] sm:$0xff] %v2741
        %2749 = vst [vmem:[%s288 + $0x30] sm:$0xff] %v2742
        %vm2750 = vcmask 1046528
        %v2751 = vsel %vm2750, %v2736, 0.0
        %v2752 = vsel %vm2750, %v2737, 0.0
        %v2753 = vadd.f32 %v2751, %v2752
        %v2754 = vsel %vm2750, %v2738, 0.0
        %v2755 = vadd.f32 %v2753, %v2754
        %v2756 = vsel %vm2750, %v2739, 0.0
        %v2757 = vadd.f32 %v2755, %v2756
        %v2758 = vsel %vm2750, %v2740, 0.0
        %v2759 = vadd.f32 %v2757, %v2758
        %v2760 = vsel %vm2750, %v2741, 0.0
        %v2761 = vadd.f32 %v2759, %v2760
        %v2762 = vsel %vm2750, %v2742, 0.0
        %v2763 = vadd.f32 %v2761, %v2762
        %v2764 = vrot.slane %v2763, 4
        %v2765 = vadd.f32 %v2763, %v2764
        %v2766 = vrot.slane %v2765, 2
        %v2767 = vadd.f32 %v2765, %v2766
        %v2768 = vrot.slane %v2767, 1
        %v2769 = vadd.f32 %v2767, %v2768
        %v2770 = vmul.f32 %v2769, 0.020408163
        %2771 = vst [vmem:[%s294] sm:$0x1] %v2770
        %s2772 = sand.u32 %s146, 1
        %s2773 = scalar_lea.sflag [#allocation5], %s2772
        %s2774 = sand.u32 %s146, 1
        %s2775 = smul.addr %s2774, 56
        %s2776 = scalar_lea.vmem [#allocation8], %s2775
        %s2777 = sand.u32 %s172, 1
        %s2778 = scalar_lea.sflag [#allocation10], %s2777
        %s2779 = sand.u32 %s172, 1
        %s2780 = scalar_lea.vmem [#allocation9], %s2779
        // Predicated region
        $region49: #{tpu_custom_call.1} parent=39 // pred_check
          %p2781 = pneg %p156
        $region50: #{tpu_custom_call.1} parent=39 // pred_check_branch
          %2783 = sbr.rel (%p2781) target = $region52
        $region51: #{tpu_custom_call.1} parent=39 // pred_region
          %s2785 = ssub.s32 896, 896
          %2786 = vsyncadd %s2773, %s2785
          %s2787 = smul.addr %s28, 7
          %s2788 = smul.addr %s2787, 128
          %s2789 = scalar_lea.hbm %s5, %s2788
          %s2790 = sshll.u32 %s2776, 4
          %s2791 = int_to_ptr.vmem [resolvable:$true] %s2790
          %2796 = dma.vmem_to_hbm [thread:$0]  %s2791, 896, %s2789, %s2773, 128, 128, 8
        $region52: #{tpu_custom_call.1} parent=39 // pred_fallthru
          _
        // Predicated region
        $region53: #{tpu_custom_call.1} parent=39 // pred_check
          %p2797 = pneg %p182
        $region54: #{tpu_custom_call.1} parent=39 // pred_check_branch
          %2799 = sbr.rel (%p2797) target = $region56
        $region55: #{tpu_custom_call.1} parent=39 // pred_region
          %s2801 = ssub.s32 16, 16
          %2802 = vsyncadd %s2778, %s2801
          %s2803 = smul.addr %s28, 16
          %s2804 = scalar_lea.hbm %s6, %s2803
          %s2806 = sshll.u32 %s2780, 4
          %s2807 = int_to_ptr.vmem [resolvable:$true] %s2806
          %2809 = dma.vmem_to_hbm [thread:$0]  %s2807, 16, %s2804, %s2778
        $region56: #{tpu_custom_call.1} parent=39 // pred_fallthru
          _
      $region40: #{tpu_custom_call.1} parent=5 // pred_fallthru
        _
      %p2810 = scmp.le.s32.totalorder 2, %s23
      // Predicated region
      $region57: #{tpu_custom_call.1} parent=5 // pred_check
        %p2811 = pneg %p2810
      $region58: #{tpu_custom_call.1} parent=5 // pred_check_branch
        %2813 = sbr.rel (%p2811) target = $region60
      $region59: #{tpu_custom_call.1} parent=5 // pred_region
        %s2814 = ssub.s32 %s23, 2
        // Predicated region
        $region61: #{tpu_custom_call.1} parent=59 // pred_check
          %p2815 = pneg %p162
        $region62: #{tpu_custom_call.1} parent=59 // pred_check_branch
          %2817 = sbr.rel (%p2815) target = $region64
        $region63: #{tpu_custom_call.1} parent=59 // pred_region
          %s2818 = sand.u32 %s147, 1
          %s2819 = scalar_lea.sflag [#allocation5], %s2818
          %s2820 = sand.u32 %s147, 1
          %s2821 = smul.addr %s2820, 56
          %s2822 = scalar_lea.vmem [#allocation8], %s2821
          %2823 = dma.done %s2819, 896
        $region64: #{tpu_custom_call.1} parent=59 // pred_fallthru
          _
        // Predicated region
        $region65: #{tpu_custom_call.1} parent=59 // pred_check
          %p2824 = pneg %p188
        $region66: #{tpu_custom_call.1} parent=59 // pred_check_branch
          %2826 = sbr.rel (%p2824) target = $region68
        $region67: #{tpu_custom_call.1} parent=59 // pred_region
          %s2827 = sand.u32 %s173, 1
          %s2828 = scalar_lea.sflag [#allocation10], %s2827
          %s2829 = sand.u32 %s173, 1
          %s2830 = scalar_lea.vmem [#allocation9], %s2829
          %2831 = dma.done %s2828, 16
        $region68: #{tpu_custom_call.1} parent=59 // pred_fallthru
          _
      $region60: #{tpu_custom_call.1} parent=5 // pred_fallthru
        _
    $region6: #{tpu_custom_call.1} parent=1 // loop_footer
      %s27 = sadd.s32 1, %s23
    $region7: #{tpu_custom_call.1} parent=1 // loop_footer_branch
      %22 = sbr.rel target = $region3
    $region8: #{tpu_custom_call.1} parent=1 // loop_exit
      _
    %2832 = vsyncpa [#allocation4], 1
    %s2833 = scalar_lea.sflag [#allocation4], 1
    %2834 = vsyncpa %s2833, 1
    %2835 = vsyncpa [#allocation7], 1
    %2836 = vsyncpa [#allocation5], 1
    %s2837 = scalar_lea.sflag [#allocation5], 1
    %2838 = vsyncpa %s2837, 1
    %2839 = vsyncpa [#allocation10], 1
    %s2840 = scalar_lea.sflag [#allocation10], 1
    %2841 = vsyncpa %s2840, 1

</llo_original>
